<compile_context>
chip_gen: v6e
topology: v6e:2x2x1
jax: 0.10.0
libtpu: 0.0.40
codegen_flags: <defaults>
</compile_context>

<pallas_src>
import jax
import jax.numpy as jnp
import numpy as np
from jax import lax
from jax.experimental import pallas as pl
from jax.experimental.pallas import tpu as pltpu


def _round_up(x, m):
    return (x + m - 1) // m * m


def make_fused_kernel(*, n_layers, seq_len, batch_pad, hidden_k, gate_pitch, vocab,
                      in2_pad, out_dim):
    S, Bp, HK, GP, V, IN2P = seq_len, batch_pad, hidden_k, gate_pitch, vocab, in2_pad

    def kernel(ids_ref, bf_ref, emb_proj_ref, rnn_w_ref, rnn_b_ref, head_w_ref,
               out_ref, gi_buf):
        # ---- layer-0 gi for the whole sequence: one matmul (gather + proj + bias
        # are all pre-folded into emb_proj at pack time) --------------------------
        ids = ids_ref[...]                                          # [S*Bp, 1] int32
        iota = lax.broadcasted_iota(jnp.int32, (S * Bp, V), 1)
        onehot = (ids == iota).astype(jnp.float32)                  # [S*Bp, V]
        gi_buf[...] = jnp.dot(onehot, emb_proj_ref[...],
                              preferred_element_type=jnp.float32)   # [S*Bp, 3*GP]

        h_last = None
        for l in range(n_layers):
            # static, 8-aligned ref slices (zero-cost views)
            w_hh = rnn_w_ref[pl.ds(l * HK, HK), :]                          # [HK, 3GP]
            b_hn = rnn_b_ref[pl.ds((n_layers - 1 + l) * 8, 1), :][:, :GP]   # [1, GP]
            last_layer = (l == n_layers - 1)
            if not last_layer:
                w_ih_next = rnn_w_ref[pl.ds((n_layers + l) * HK, HK), :]    # [HK, 3GP]
                gi_bias_next = rnn_b_ref[pl.ds(l * 8, 1), :]                # [1, 3GP]

            # ---- serial recurrence: only h[:, :HK] @ W_hh + gate math per step ----
            h = jnp.zeros((Bp, GP), jnp.float32)
            for t in range(S):                     # fully unrolled (static seq_len)
                row = t * Bp                       # static, multiple of 8
                gi_t = gi_buf[pl.ds(row, Bp), :]   # [Bp, 3*GP]
                gh = jnp.dot(h[:, :HK], w_hh, preferred_element_type=jnp.float32)
                pre = gi_t + gh
                # sigmoid(x) == 0.5*tanh(0.5*x) + 0.5 : single EUP op per gate
                r = 0.5 * jnp.tanh(0.5 * pre[:, :GP]) + 0.5
                z = 0.5 * jnp.tanh(0.5 * pre[:, GP:2 * GP]) + 0.5
                n = jnp.tanh(gi_t[:, 2 * GP:] + r * (gh[:, 2 * GP:] + b_hn))
                h = (1.0 - z) * n + z * h
                if not last_layer:
                    # next layer's input projection, fused into this step (off the
                    # serial h-chain); slot t of gi_buf is dead after the read above.
                    gi_buf[pl.ds(row, Bp), :] = (
                        jnp.dot(h[:, :HK], w_ih_next,
                                preferred_element_type=jnp.float32) + gi_bias_next)
            h_last = h

        # ---- fully folded linear head: logits = bf @ W1 + h_last @ W2 + b --------
        w1 = head_w_ref[pl.ds(0, IN2P), :]               # [IN2P, out]
        w2 = head_w_ref[pl.ds(IN2P, HK), :]              # [HK, out]
        b_head = head_w_ref[pl.ds(IN2P + HK, 1), :]      # [1, out]
        logits = (jnp.dot(bf_ref[...], w1, preferred_element_type=jnp.float32)
                  + jnp.dot(h_last[:, :HK], w2, preferred_element_type=jnp.float32)
                  + b_head)
        out_ref[...] = jax.nn.sigmoid(logits)

    return kernel


def pack_params(params, *, n_layers, embedding_dim, hidden_dim, input2_dim, bf_dim,
                output_dim):
    """One-time host-side repack: fold embedding/head algebra, gate-pad to 128 lanes,
    shrink all contraction (row) dims to HK = round_up(H, 8), pack into 4 arrays."""
    H = hidden_dim
    GP = max(128, _round_up(H, 128))     # per-gate lane pitch (gate outputs)
    HK = _round_up(H, 8)                 # contraction (row) dim for recurrent matmuls
    IN2P = _round_up(input2_dim, 8)
    f = lambda a: np.asarray(a, np.float32)

    def gate_pad_cols(w):                # [rows, 3H] -> [rows, 3GP], zero-padded
        out = np.zeros((w.shape[0], 3 * GP), np.float32)
        for g in range(3):
            out[:, g * GP:g * GP + H] = w[:, g * H:(g + 1) * H]
        return out

    def fold_gi_bias(b_ih, b_hh):        # b_ih (all gates) + b_hh (r, z only) -> [1, 3GP]
        out = gate_pad_cols(b_ih)
        rz = gate_pad_cols(b_hh)
        rz[:, 2 * GP:] = 0.0
        return out + rz

    # layer 0: embedding gather + input projection + bias fused into one table
    emb_proj = f(params["embedding"]) @ f(params["w_ih_0"])          # [V, 3H]
    emb_proj = gate_pad_cols(emb_proj) + fold_gi_bias(f(params["b_ih_0"]),
                                                      f(params["b_hh_0"]))

    # recurrent weights: rows [W_hh_0 .. W_hh_{L-1}, W_ih_1 .. W_ih_{L-1}], HK rows each
    rnn_w = np.zeros(((2 * n_layers - 1) * HK, 3 * GP), np.float32)
    for l in range(n_layers):
        rnn_w[l * HK:l * HK + H, :] = gate_pad_cols(f(params[f"w_hh_{l}"]))
    for l in range(1, n_layers):
        r0 = (n_layers + l - 1) * HK
        rnn_w[r0:r0 + H, :] = gate_pad_cols(f(params[f"w_ih_{l}"]))

    # biases at an 8-row pitch (aligned single-row loads):
    #   rows (l-1)*8           : gi_bias_l  (l >= 1)  = b_ih_l + b_hh_l[r,z]
    #   rows (L-1+l)*8, cols<H : b_hh_l n-gate
    rnn_b = np.zeros(((2 * n_layers - 1) * 8, 3 * GP), np.float32)
    for l in range(1, n_layers):
        rnn_b[(l - 1) * 8:(l - 1) * 8 + 1, :] = fold_gi_bias(f(params[f"b_ih_{l}"]),
                                                             f(params[f"b_hh_{l}"]))
    for l in range(n_layers):
        rnn_b[(n_layers - 1 + l) * 8, :H] = f(params[f"b_hh_{l}"])[0, 2 * H:3 * H]

    # fully folded linear head (exact: no nonlinearity between fc_bf/fc and fc_output)
    w_out = f(params["w_out"])                                       # [2*bf_dim, out]
    w_out_bf, w_out_rnn = w_out[:bf_dim], w_out[bf_dim:]
    head_w = np.zeros((IN2P + HK + 1, output_dim), np.float32)
    head_w[:input2_dim, :] = f(params["w_bf"]) @ w_out_bf
    head_w[IN2P:IN2P + H, :] = f(params["w_fc"]) @ w_out_rnn
    head_w[IN2P + HK, :] = (f(params["b_bf"]) @ w_out_bf
                            + f(params["b_fc"]) @ w_out_rnn + f(params["b_out"]))[0]

    return {
        "emb_proj": jnp.asarray(emb_proj),
        "rnn_w": jnp.asarray(rnn_w),
        "rnn_b": jnp.asarray(rnn_b),
        "head_w": jnp.asarray(head_w),
        "dims": dict(GP=GP, HK=HK, IN2P=IN2P, vocab=params["embedding"].shape[0]),
    }


def lstm_forward(content, bf, packed, *, n_layers, output_dim):
    dims = packed["dims"]
    GP, HK, IN2P, vocab = dims["GP"], dims["HK"], dims["IN2P"], dims["vocab"]
    seq_len, batch = content.shape
    Bp = max(8, _round_up(batch, 8))          # pad batch to a full sublane group

    content = jnp.asarray(content, jnp.int32)
    content_p = jnp.zeros((seq_len, Bp), jnp.int32).at[:, :batch].set(content)
    ids_flat = content_p.reshape(seq_len * Bp, 1)
    bf_p = jnp.zeros((Bp, IN2P), jnp.float32).at[:batch, :bf.shape[1]].set(
        bf.astype(jnp.float32))

    kernel = make_fused_kernel(n_layers=n_layers, seq_len=seq_len, batch_pad=Bp,
                               hidden_k=HK, gate_pitch=GP, vocab=vocab,
                               in2_pad=IN2P, out_dim=output_dim)
    vmem = lambda: pl.BlockSpec(memory_space=pltpu.MemorySpace.VMEM)

    # VMEM footprint is tiny here (< 0.5 MiB); at larger S/Bp, gi_buf is S*Bp*3*GP*4 B
    # and must be budgeted against the 32 MiB default scoped limit (64 MiB phys on v7x).
    # TODO(synk): for a v7x deployment with padded batch >= 16, add a leading grid axis
    # over 8-row batch tiles with dimension_semantics=("parallel",) to use both TCs.
    out = pl.pallas_call(
        kernel,
        out_shape=jax.ShapeDtypeStruct((Bp, output_dim), jnp.float32),
        in_specs=[vmem()] * 6,
        out_specs=vmem(),
        scratch_shapes=[pltpu.VMEM((seq_len * Bp, 3 * GP), jnp.float32)],  # gi buffer
    )(ids_flat, bf_p, packed["emb_proj"], packed["rnn_w"], packed["rnn_b"],
      packed["head_w"])
    return out[:batch]


def reference_forward(content, bf, params, *, n_layers, hidden_dim):
    """Pure-JAX reference reproducing the PyTorch forward (inference mode)."""
    x = params["embedding"][content]
    H = hidden_dim
    for l in range(n_layers):
        w_ih, w_hh = params[f"w_ih_{l}"], params[f"w_hh_{l}"]
        b_ih, b_hh = params[f"b_ih_{l}"], params[f"b_hh_{l}"]
        h = jnp.zeros((x.shape[1], H), jnp.float32)
        outs = []
        for t in range(x.shape[0]):
            gi = x[t] @ w_ih + b_ih
            gh = h @ w_hh + b_hh
            r = jax.nn.sigmoid(gi[:, :H] + gh[:, :H])
            z = jax.nn.sigmoid(gi[:, H:2 * H] + gh[:, H:2 * H])
            n = jnp.tanh(gi[:, 2 * H:] + r * gh[:, 2 * H:])
            h = (1.0 - z) * n + z * h
            outs.append(h)
        x = jnp.stack(outs)
    bf_out = bf @ params["w_bf"] + params["b_bf"]
    rnn_out = x[-1] @ params["w_fc"] + params["b_fc"]
    concat = jnp.concatenate([bf_out, rnn_out], axis=1)
    return jax.nn.sigmoid(concat @ params["w_out"] + params["b_out"])


if __name__ == "__main__":
    # Module hyper-parameters (small, consistent with the forward pass).
    input_dim = 50        # vocab size
    input2_dim = 6        # behavioural-feature dim
    n_layers = 2
    embedding_dim = 16
    bf_dim = 8
    hidden_dim = 32
    output_dim = 1
    seq_len = 8
    batch = 4

    key = jax.random.PRNGKey(0)
    ks = iter(jax.random.split(key, 32))

    def rnd(shape, scale=0.1):
        return (scale * jax.random.normal(next(ks), shape)).astype(jnp.float32)

    params = {
        "embedding": rnd((input_dim, embedding_dim)),
        "w_bf": rnd((input2_dim, bf_dim)),
        "b_bf": rnd((1, bf_dim)),
        "w_fc": rnd((hidden_dim, bf_dim)),
        "b_fc": rnd((1, bf_dim)),
        "w_out": rnd((2 * bf_dim, output_dim)),
        "b_out": rnd((1, output_dim)),
    }
    for l in range(n_layers):
        in_size = embedding_dim if l == 0 else hidden_dim
        params[f"w_ih_{l}"] = rnd((in_size, 3 * hidden_dim))
        params[f"w_hh_{l}"] = rnd((hidden_dim, 3 * hidden_dim))
        params[f"b_ih_{l}"] = rnd((1, 3 * hidden_dim))
        params[f"b_hh_{l}"] = rnd((1, 3 * hidden_dim))

    content = jax.random.randint(next(ks), (seq_len, batch), 0, input_dim, dtype=jnp.int32)
    bf = jax.random.normal(next(ks), (batch, input2_dim), dtype=jnp.float32)

    packed = pack_params(params, n_layers=n_layers, embedding_dim=embedding_dim,
                         hidden_dim=hidden_dim, input2_dim=input2_dim,
                         bf_dim=bf_dim, output_dim=output_dim)

    out = lstm_forward(content, bf, packed, n_layers=n_layers, output_dim=output_dim)
    out = jax.block_until_ready(out)

    ref = reference_forward(content, bf, params, n_layers=n_layers, hidden_dim=hidden_dim)
    assert out.shape == (batch, output_dim)
    assert np.allclose(np.asarray(out), np.asarray(ref), atol=2e-3), "mismatch vs reference"

    print("KERNEL_OK")
</pallas_src>

<mosaic_0001>
module attributes {stable_mosaic.version = 11 : i64} {
  func.func @kernel(%arg0: memref<64x1xi32, #tpu.memory_space<vmem>>, %arg1: memref<8x8xf32, #tpu.memory_space<vmem>>, %arg2: memref<50x384xf32, #tpu.memory_space<vmem>>, %arg3: memref<96x384xf32, #tpu.memory_space<vmem>>, %arg4: memref<24x384xf32, #tpu.memory_space<vmem>>, %arg5: memref<41x1xf32, #tpu.memory_space<vmem>>, %arg6: memref<8x1xf32, #tpu.memory_space<vmem>>, %arg7: memref<64x384xf32, #tpu.memory_space<vmem>>) attributes {dimension_semantics = [], scalar_prefetch = 0 : i64, scratch_operands = 1 : i64, tpu.core_type = #tpu.core_type<tc>} {
    %c0 = arith.constant 0 : index
    %c0_0 = arith.constant 0 : index
    %0 = vector.load %arg0[%c0, %c0_0] : memref<64x1xi32, #tpu.memory_space<vmem>>, vector<64x1xi32>
    %1 = tpu.iota {dimensions = array<i32: 1>} : vector<64x50xi32>
    %2 = vector.broadcast %0 : vector<64x1xi32> to vector<64x50xi32>
    %3 = arith.cmpi eq, %2, %1 : vector<64x50xi32>
    %4 = arith.extui %3 : vector<64x50xi1> to vector<64x50xi32>
    %5 = arith.sitofp %4 : vector<64x50xi32> to vector<64x50xf32>
    %c0_1 = arith.constant 0 : index
    %c0_2 = arith.constant 0 : index
    %6 = vector.load %arg2[%c0_1, %c0_2] : memref<50x384xf32, #tpu.memory_space<vmem>>, vector<50x384xf32>
    %cst = arith.constant dense<0.000000e+00> : vector<64x384xf32>
    %7 = tpu.matmul %5, %6, %cst {dimension_numbers = #tpu.dot_dimension_numbers<[1], [0], [0], [1], [0, 0, 1, 1], [], []>} : vector<64x50xf32>, vector<50x384xf32>, vector<64x384xf32> -> vector<64x384xf32>
    %c0_3 = arith.constant 0 : index
    %c0_4 = arith.constant 0 : index
    %8 = vector.load %arg7[%c0_3, %c0_4] : memref<64x384xf32, #tpu.memory_space<vmem>>, vector<64x384xf32>
    tpu.vector_store %arg7[%c0_3, %c0_4], %7 {strides = array<i32>} : memref<64x384xf32, #tpu.memory_space<vmem>>, vector<64x384xf32>,
    %c0_5 = arith.constant 0 : index
    %c0_6 = arith.constant 0 : index
    %9 = vector.load %arg3[%c0_5, %c0_6] : memref<96x384xf32, #tpu.memory_space<vmem>>, vector<32x384xf32>
    %c8 = arith.constant 8 : index
    %c0_7 = arith.constant 0 : index
    %10 = vector.load %arg4[%c8, %c0_7] : memref<24x384xf32, #tpu.memory_space<vmem>>, vector<1x384xf32>
    %11 = vector.extract_strided_slice %10 {offsets = [0, 0], sizes = [1, 128], strides = [1, 1]} : vector<1x384xf32> to vector<1x128xf32>
    %c64 = arith.constant 64 : index
    %c0_8 = arith.constant 0 : index
    %12 = vector.load %arg3[%c64, %c0_8] : memref<96x384xf32, #tpu.memory_space<vmem>>, vector<32x384xf32>
    %c0_9 = arith.constant 0 : index
    %c0_10 = arith.constant 0 : index
    %13 = vector.load %arg4[%c0_9, %c0_10] : memref<24x384xf32, #tpu.memory_space<vmem>>, vector<1x384xf32>
    %cst_11 = arith.constant 0.000000e+00 : f32
    %14 = vector.broadcast %cst_11 : f32 to vector<8x128xf32>
    %c0_12 = arith.constant 0 : index
    %c0_13 = arith.constant 0 : index
    %15 = vector.load %arg7[%c0_12, %c0_13] : memref<64x384xf32, #tpu.memory_space<vmem>>, vector<8x384xf32>
    %16 = vector.extract_strided_slice %14 {offsets = [0, 0], sizes = [8, 32], strides = [1, 1]} : vector<8x128xf32> to vector<8x32xf32>
    %cst_14 = arith.constant dense<0.000000e+00> : vector<8x384xf32>
    %17 = tpu.matmul %16, %9, %cst_14 {dimension_numbers = #tpu.dot_dimension_numbers<[1], [0], [0], [1], [0, 0, 1, 1], [], []>} : vector<8x32xf32>, vector<32x384xf32>, vector<8x384xf32> -> vector<8x384xf32>
    %18 = arith.addf %15, %17 : vector<8x384xf32>
    %19 = vector.extract_strided_slice %18 {offsets = [0, 0], sizes = [8, 128], strides = [1, 1]} : vector<8x384xf32> to vector<8x128xf32>
    %cst_15 = arith.constant 5.000000e-01 : f32
    %20 = vector.broadcast %cst_15 : f32 to vector<8x128xf32>
    %21 = arith.mulf %20, %19 : vector<8x128xf32>
    %22 = math.tanh %21 : vector<8x128xf32>
    %cst_16 = arith.constant 5.000000e-01 : f32
    %23 = vector.broadcast %cst_16 : f32 to vector<8x128xf32>
    %24 = arith.mulf %23, %22 : vector<8x128xf32>
    %cst_17 = arith.constant 5.000000e-01 : f32
    %25 = vector.broadcast %cst_17 : f32 to vector<8x128xf32>
    %26 = arith.addf %24, %25 : vector<8x128xf32>
    %27 = vector.extract_strided_slice %18 {offsets = [0, 128], sizes = [8, 128], strides = [1, 1]} : vector<8x384xf32> to vector<8x128xf32>
    %cst_18 = arith.constant 5.000000e-01 : f32
    %28 = vector.broadcast %cst_18 : f32 to vector<8x128xf32>
    %29 = arith.mulf %28, %27 : vector<8x128xf32>
    %30 = math.tanh %29 : vector<8x128xf32>
    %cst_19 = arith.constant 5.000000e-01 : f32
    %31 = vector.broadcast %cst_19 : f32 to vector<8x128xf32>
    %32 = arith.mulf %31, %30 : vector<8x128xf32>
    %cst_20 = arith.constant 5.000000e-01 : f32
    %33 = vector.broadcast %cst_20 : f32 to vector<8x128xf32>
    %34 = arith.addf %32, %33 : vector<8x128xf32>
    %35 = vector.extract_strided_slice %15 {offsets = [0, 256], sizes = [8, 128], strides = [1, 1]} : vector<8x384xf32> to vector<8x128xf32>
    %36 = vector.extract_strided_slice %17 {offsets = [0, 256], sizes = [8, 128], strides = [1, 1]} : vector<8x384xf32> to vector<8x128xf32>
    %37 = vector.broadcast %11 : vector<1x128xf32> to vector<8x128xf32>
    %38 = arith.addf %36, %37 : vector<8x128xf32>
    %39 = arith.mulf %26, %38 : vector<8x128xf32>
    %40 = arith.addf %35, %39 : vector<8x128xf32>
    %41 = math.tanh %40 : vector<8x128xf32>
    %cst_21 = arith.constant 1.000000e+00 : f32
    %42 = vector.broadcast %cst_21 : f32 to vector<8x128xf32>
    %43 = arith.subf %42, %34 : vector<8x128xf32>
    %44 = arith.mulf %43, %41 : vector<8x128xf32>
    %45 = arith.mulf %34, %14 : vector<8x128xf32>
    %46 = arith.addf %44, %45 : vector<8x128xf32>
    %47 = vector.extract_strided_slice %46 {offsets = [0, 0], sizes = [8, 32], strides = [1, 1]} : vector<8x128xf32> to vector<8x32xf32>
    %cst_22 = arith.constant dense<0.000000e+00> : vector<8x384xf32>
    %48 = tpu.matmul %47, %12, %cst_22 {dimension_numbers = #tpu.dot_dimension_numbers<[1], [0], [0], [1], [0, 0, 1, 1], [], []>} : vector<8x32xf32>, vector<32x384xf32>, vector<8x384xf32> -> vector<8x384xf32>
    %49 = vector.broadcast %13 : vector<1x384xf32> to vector<8x384xf32>
    %50 = arith.addf %48, %49 : vector<8x384xf32>
    %c0_23 = arith.constant 0 : index
    %c0_24 = arith.constant 0 : index
    %51 = vector.load %arg7[%c0_23, %c0_24] : memref<64x384xf32, #tpu.memory_space<vmem>>, vector<8x384xf32>
    tpu.vector_store %arg7[%c0_23, %c0_24], %50 {strides = array<i32>} : memref<64x384xf32, #tpu.memory_space<vmem>>, vector<8x384xf32>,
    %c8_25 = arith.constant 8 : index
    %c0_26 = arith.constant 0 : index
    %52 = vector.load %arg7[%c8_25, %c0_26] : memref<64x384xf32, #tpu.memory_space<vmem>>, vector<8x384xf32>
    %53 = vector.extract_strided_slice %46 {offsets = [0, 0], sizes = [8, 32], strides = [1, 1]} : vector<8x128xf32> to vector<8x32xf32>
    %cst_27 = arith.constant dense<0.000000e+00> : vector<8x384xf32>
    %54 = tpu.matmul %53, %9, %cst_27 {dimension_numbers = #tpu.dot_dimension_numbers<[1], [0], [0], [1], [0, 0, 1, 1], [], []>} : vector<8x32xf32>, vector<32x384xf32>, vector<8x384xf32> -> vector<8x384xf32>
    %55 = arith.addf %52, %54 : vector<8x384xf32>
    %56 = vector.extract_strided_slice %55 {offsets = [0, 0], sizes = [8, 128], strides = [1, 1]} : vector<8x384xf32> to vector<8x128xf32>
    %cst_28 = arith.constant 5.000000e-01 : f32
    %57 = vector.broadcast %cst_28 : f32 to vector<8x128xf32>
    %58 = arith.mulf %57, %56 : vector<8x128xf32>
    %59 = math.tanh %58 : vector<8x128xf32>
    %cst_29 = arith.constant 5.000000e-01 : f32
    %60 = vector.broadcast %cst_29 : f32 to vector<8x128xf32>
    %61 = arith.mulf %60, %59 : vector<8x128xf32>
    %cst_30 = arith.constant 5.000000e-01 : f32
    %62 = vector.broadcast %cst_30 : f32 to vector<8x128xf32>
    %63 = arith.addf %61, %62 : vector<8x128xf32>
    %64 = vector.extract_strided_slice %55 {offsets = [0, 128], sizes = [8, 128], strides = [1, 1]} : vector<8x384xf32> to vector<8x128xf32>
    %cst_31 = arith.constant 5.000000e-01 : f32
    %65 = vector.broadcast %cst_31 : f32 to vector<8x128xf32>
    %66 = arith.mulf %65, %64 : vector<8x128xf32>
    %67 = math.tanh %66 : vector<8x128xf32>
    %cst_32 = arith.constant 5.000000e-01 : f32
    %68 = vector.broadcast %cst_32 : f32 to vector<8x128xf32>
    %69 = arith.mulf %68, %67 : vector<8x128xf32>
    %cst_33 = arith.constant 5.000000e-01 : f32
    %70 = vector.broadcast %cst_33 : f32 to vector<8x128xf32>
    %71 = arith.addf %69, %70 : vector<8x128xf32>
    %72 = vector.extract_strided_slice %52 {offsets = [0, 256], sizes = [8, 128], strides = [1, 1]} : vector<8x384xf32> to vector<8x128xf32>
    %73 = vector.extract_strided_slice %54 {offsets = [0, 256], sizes = [8, 128], strides = [1, 1]} : vector<8x384xf32> to vector<8x128xf32>
    %74 = vector.broadcast %11 : vector<1x128xf32> to vector<8x128xf32>
    %75 = arith.addf %73, %74 : vector<8x128xf32>
    %76 = arith.mulf %63, %75 : vector<8x128xf32>
    %77 = arith.addf %72, %76 : vector<8x128xf32>
    %78 = math.tanh %77 : vector<8x128xf32>
    %cst_34 = arith.constant 1.000000e+00 : f32
    %79 = vector.broadcast %cst_34 : f32 to vector<8x128xf32>
    %80 = arith.subf %79, %71 : vector<8x128xf32>
    %81 = arith.mulf %80, %78 : vector<8x128xf32>
    %82 = arith.mulf %71, %46 : vector<8x128xf32>
    %83 = arith.addf %81, %82 : vector<8x128xf32>
    %84 = vector.extract_strided_slice %83 {offsets = [0, 0], sizes = [8, 32], strides = [1, 1]} : vector<8x128xf32> to vector<8x32xf32>
    %cst_35 = arith.constant dense<0.000000e+00> : vector<8x384xf32>
    %85 = tpu.matmul %84, %12, %cst_35 {dimension_numbers = #tpu.dot_dimension_numbers<[1], [0], [0], [1], [0, 0, 1, 1], [], []>} : vector<8x32xf32>, vector<32x384xf32>, vector<8x384xf32> -> vector<8x384xf32>
    %86 = vector.broadcast %13 : vector<1x384xf32> to vector<8x384xf32>
    %87 = arith.addf %85, %86 : vector<8x384xf32>
    %c8_36 = arith.constant 8 : index
    %c0_37 = arith.constant 0 : index
    %88 = vector.load %arg7[%c8_36, %c0_37] : memref<64x384xf32, #tpu.memory_space<vmem>>, vector<8x384xf32>
    tpu.vector_store %arg7[%c8_36, %c0_37], %87 {strides = array<i32>} : memref<64x384xf32, #tpu.memory_space<vmem>>, vector<8x384xf32>,
    %c16 = arith.constant 16 : index
    %c0_38 = arith.constant 0 : index
    %89 = vector.load %arg7[%c16, %c0_38] : memref<64x384xf32, #tpu.memory_space<vmem>>, vector<8x384xf32>
    %90 = vector.extract_strided_slice %83 {offsets = [0, 0], sizes = [8, 32], strides = [1, 1]} : vector<8x128xf32> to vector<8x32xf32>
    %cst_39 = arith.constant dense<0.000000e+00> : vector<8x384xf32>
    %91 = tpu.matmul %90, %9, %cst_39 {dimension_numbers = #tpu.dot_dimension_numbers<[1], [0], [0], [1], [0, 0, 1, 1], [], []>} : vector<8x32xf32>, vector<32x384xf32>, vector<8x384xf32> -> vector<8x384xf32>
    %92 = arith.addf %89, %91 : vector<8x384xf32>
    %93 = vector.extract_strided_slice %92 {offsets = [0, 0], sizes = [8, 128], strides = [1, 1]} : vector<8x384xf32> to vector<8x128xf32>
    %cst_40 = arith.constant 5.000000e-01 : f32
    %94 = vector.broadcast %cst_40 : f32 to vector<8x128xf32>
    %95 = arith.mulf %94, %93 : vector<8x128xf32>
    %96 = math.tanh %95 : vector<8x128xf32>
    %cst_41 = arith.constant 5.000000e-01 : f32
    %97 = vector.broadcast %cst_41 : f32 to vector<8x128xf32>
    %98 = arith.mulf %97, %96 : vector<8x128xf32>
    %cst_42 = arith.constant 5.000000e-01 : f32
    %99 = vector.broadcast %cst_42 : f32 to vector<8x128xf32>
    %100 = arith.addf %98, %99 : vector<8x128xf32>
    %101 = vector.extract_strided_slice %92 {offsets = [0, 128], sizes = [8, 128], strides = [1, 1]} : vector<8x384xf32> to vector<8x128xf32>
    %cst_43 = arith.constant 5.000000e-01 : f32
    %102 = vector.broadcast %cst_43 : f32 to vector<8x128xf32>
    %103 = arith.mulf %102, %101 : vector<8x128xf32>
    %104 = math.tanh %103 : vector<8x128xf32>
    %cst_44 = arith.constant 5.000000e-01 : f32
    %105 = vector.broadcast %cst_44 : f32 to vector<8x128xf32>
    %106 = arith.mulf %105, %104 : vector<8x128xf32>
    %cst_45 = arith.constant 5.000000e-01 : f32
    %107 = vector.broadcast %cst_45 : f32 to vector<8x128xf32>
    %108 = arith.addf %106, %107 : vector<8x128xf32>
    %109 = vector.extract_strided_slice %89 {offsets = [0, 256], sizes = [8, 128], strides = [1, 1]} : vector<8x384xf32> to vector<8x128xf32>
    %110 = vector.extract_strided_slice %91 {offsets = [0, 256], sizes = [8, 128], strides = [1, 1]} : vector<8x384xf32> to vector<8x128xf32>
    %111 = vector.broadcast %11 : vector<1x128xf32> to vector<8x128xf32>
    %112 = arith.addf %110, %111 : vector<8x128xf32>
    %113 = arith.mulf %100, %112 : vector<8x128xf32>
    %114 = arith.addf %109, %113 : vector<8x128xf32>
    %115 = math.tanh %114 : vector<8x128xf32>
    %cst_46 = arith.constant 1.000000e+00 : f32
    %116 = vector.broadcast %cst_46 : f32 to vector<8x128xf32>
    %117 = arith.subf %116, %108 : vector<8x128xf32>
    %118 = arith.mulf %117, %115 : vector<8x128xf32>
    %119 = arith.mulf %108, %83 : vector<8x128xf32>
    %120 = arith.addf %118, %119 : vector<8x128xf32>
    %121 = vector.extract_strided_slice %120 {offsets = [0, 0], sizes = [8, 32], strides = [1, 1]} : vector<8x128xf32> to vector<8x32xf32>
    %cst_47 = arith.constant dense<0.000000e+00> : vector<8x384xf32>
    %122 = tpu.matmul %121, %12, %cst_47 {dimension_numbers = #tpu.dot_dimension_numbers<[1], [0], [0], [1], [0, 0, 1, 1], [], []>} : vector<8x32xf32>, vector<32x384xf32>, vector<8x384xf32> -> vector<8x384xf32>
    %123 = vector.broadcast %13 : vector<1x384xf32> to vector<8x384xf32>
    %124 = arith.addf %122, %123 : vector<8x384xf32>
    %c16_48 = arith.constant 16 : index
    %c0_49 = arith.constant 0 : index
    %125 = vector.load %arg7[%c16_48, %c0_49] : memref<64x384xf32, #tpu.memory_space<vmem>>, vector<8x384xf32>
    tpu.vector_store %arg7[%c16_48, %c0_49], %124 {strides = array<i32>} : memref<64x384xf32, #tpu.memory_space<vmem>>, vector<8x384xf32>,
    %c24 = arith.constant 24 : index
    %c0_50 = arith.constant 0 : index
    %126 = vector.load %arg7[%c24, %c0_50] : memref<64x384xf32, #tpu.memory_space<vmem>>, vector<8x384xf32>
    %127 = vector.extract_strided_slice %120 {offsets = [0, 0], sizes = [8, 32], strides = [1, 1]} : vector<8x128xf32> to vector<8x32xf32>
    %cst_51 = arith.constant dense<0.000000e+00> : vector<8x384xf32>
    %128 = tpu.matmul %127, %9, %cst_51 {dimension_numbers = #tpu.dot_dimension_numbers<[1], [0], [0], [1], [0, 0, 1, 1], [], []>} : vector<8x32xf32>, vector<32x384xf32>, vector<8x384xf32> -> vector<8x384xf32>
    %129 = arith.addf %126, %128 : vector<8x384xf32>
    %130 = vector.extract_strided_slice %129 {offsets = [0, 0], sizes = [8, 128], strides = [1, 1]} : vector<8x384xf32> to vector<8x128xf32>
    %cst_52 = arith.constant 5.000000e-01 : f32
    %131 = vector.broadcast %cst_52 : f32 to vector<8x128xf32>
    %132 = arith.mulf %131, %130 : vector<8x128xf32>
    %133 = math.tanh %132 : vector<8x128xf32>
    %cst_53 = arith.constant 5.000000e-01 : f32
    %134 = vector.broadcast %cst_53 : f32 to vector<8x128xf32>
    %135 = arith.mulf %134, %133 : vector<8x128xf32>
    %cst_54 = arith.constant 5.000000e-01 : f32
    %136 = vector.broadcast %cst_54 : f32 to vector<8x128xf32>
    %137 = arith.addf %135, %136 : vector<8x128xf32>
    %138 = vector.extract_strided_slice %129 {offsets = [0, 128], sizes = [8, 128], strides = [1, 1]} : vector<8x384xf32> to vector<8x128xf32>
    %cst_55 = arith.constant 5.000000e-01 : f32
    %139 = vector.broadcast %cst_55 : f32 to vector<8x128xf32>
    %140 = arith.mulf %139, %138 : vector<8x128xf32>
    %141 = math.tanh %140 : vector<8x128xf32>
    %cst_56 = arith.constant 5.000000e-01 : f32
    %142 = vector.broadcast %cst_56 : f32 to vector<8x128xf32>
    %143 = arith.mulf %142, %141 : vector<8x128xf32>
    %cst_57 = arith.constant 5.000000e-01 : f32
    %144 = vector.broadcast %cst_57 : f32 to vector<8x128xf32>
    %145 = arith.addf %143, %144 : vector<8x128xf32>
    %146 = vector.extract_strided_slice %126 {offsets = [0, 256], sizes = [8, 128], strides = [1, 1]} : vector<8x384xf32> to vector<8x128xf32>
    %147 = vector.extract_strided_slice %128 {offsets = [0, 256], sizes = [8, 128], strides = [1, 1]} : vector<8x384xf32> to vector<8x128xf32>
    %148 = vector.broadcast %11 : vector<1x128xf32> to vector<8x128xf32>
    %149 = arith.addf %147, %148 : vector<8x128xf32>
    %150 = arith.mulf %137, %149 : vector<8x128xf32>
    %151 = arith.addf %146, %150 : vector<8x128xf32>
    %152 = math.tanh %151 : vector<8x128xf32>
    %cst_58 = arith.constant 1.000000e+00 : f32
    %153 = vector.broadcast %cst_58 : f32 to vector<8x128xf32>
    %154 = arith.subf %153, %145 : vector<8x128xf32>
    %155 = arith.mulf %154, %152 : vector<8x128xf32>
    %156 = arith.mulf %145, %120 : vector<8x128xf32>
    %157 = arith.addf %155, %156 : vector<8x128xf32>
    %158 = vector.extract_strided_slice %157 {offsets = [0, 0], sizes = [8, 32], strides = [1, 1]} : vector<8x128xf32> to vector<8x32xf32>
    %cst_59 = arith.constant dense<0.000000e+00> : vector<8x384xf32>
    %159 = tpu.matmul %158, %12, %cst_59 {dimension_numbers = #tpu.dot_dimension_numbers<[1], [0], [0], [1], [0, 0, 1, 1], [], []>} : vector<8x32xf32>, vector<32x384xf32>, vector<8x384xf32> -> vector<8x384xf32>
    %160 = vector.broadcast %13 : vector<1x384xf32> to vector<8x384xf32>
    %161 = arith.addf %159, %160 : vector<8x384xf32>
    %c24_60 = arith.constant 24 : index
    %c0_61 = arith.constant 0 : index
    %162 = vector.load %arg7[%c24_60, %c0_61] : memref<64x384xf32, #tpu.memory_space<vmem>>, vector<8x384xf32>
    tpu.vector_store %arg7[%c24_60, %c0_61], %161 {strides = array<i32>} : memref<64x384xf32, #tpu.memory_space<vmem>>, vector<8x384xf32>,
    %c32 = arith.constant 32 : index
    %c0_62 = arith.constant 0 : index
    %163 = vector.load %arg7[%c32, %c0_62] : memref<64x384xf32, #tpu.memory_space<vmem>>, vector<8x384xf32>
    %164 = vector.extract_strided_slice %157 {offsets = [0, 0], sizes = [8, 32], strides = [1, 1]} : vector<8x128xf32> to vector<8x32xf32>
    %cst_63 = arith.constant dense<0.000000e+00> : vector<8x384xf32>
    %165 = tpu.matmul %164, %9, %cst_63 {dimension_numbers = #tpu.dot_dimension_numbers<[1], [0], [0], [1], [0, 0, 1, 1], [], []>} : vector<8x32xf32>, vector<32x384xf32>, vector<8x384xf32> -> vector<8x384xf32>
    %166 = arith.addf %163, %165 : vector<8x384xf32>
    %167 = vector.extract_strided_slice %166 {offsets = [0, 0], sizes = [8, 128], strides = [1, 1]} : vector<8x384xf32> to vector<8x128xf32>
    %cst_64 = arith.constant 5.000000e-01 : f32
    %168 = vector.broadcast %cst_64 : f32 to vector<8x128xf32>
    %169 = arith.mulf %168, %167 : vector<8x128xf32>
    %170 = math.tanh %169 : vector<8x128xf32>
    %cst_65 = arith.constant 5.000000e-01 : f32
    %171 = vector.broadcast %cst_65 : f32 to vector<8x128xf32>
    %172 = arith.mulf %171, %170 : vector<8x128xf32>
    %cst_66 = arith.constant 5.000000e-01 : f32
    %173 = vector.broadcast %cst_66 : f32 to vector<8x128xf32>
    %174 = arith.addf %172, %173 : vector<8x128xf32>
    %175 = vector.extract_strided_slice %166 {offsets = [0, 128], sizes = [8, 128], strides = [1, 1]} : vector<8x384xf32> to vector<8x128xf32>
    %cst_67 = arith.constant 5.000000e-01 : f32
    %176 = vector.broadcast %cst_67 : f32 to vector<8x128xf32>
    %177 = arith.mulf %176, %175 : vector<8x128xf32>
    %178 = math.tanh %177 : vector<8x128xf32>
    %cst_68 = arith.constant 5.000000e-01 : f32
    %179 = vector.broadcast %cst_68 : f32 to vector<8x128xf32>
    %180 = arith.mulf %179, %178 : vector<8x128xf32>
    %cst_69 = arith.constant 5.000000e-01 : f32
    %181 = vector.broadcast %cst_69 : f32 to vector<8x128xf32>
    %182 = arith.addf %180, %181 : vector<8x128xf32>
    %183 = vector.extract_strided_slice %163 {offsets = [0, 256], sizes = [8, 128], strides = [1, 1]} : vector<8x384xf32> to vector<8x128xf32>
    %184 = vector.extract_strided_slice %165 {offsets = [0, 256], sizes = [8, 128], strides = [1, 1]} : vector<8x384xf32> to vector<8x128xf32>
    %185 = vector.broadcast %11 : vector<1x128xf32> to vector<8x128xf32>
    %186 = arith.addf %184, %185 : vector<8x128xf32>
    %187 = arith.mulf %174, %186 : vector<8x128xf32>
    %188 = arith.addf %183, %187 : vector<8x128xf32>
    %189 = math.tanh %188 : vector<8x128xf32>
    %cst_70 = arith.constant 1.000000e+00 : f32
    %190 = vector.broadcast %cst_70 : f32 to vector<8x128xf32>
    %191 = arith.subf %190, %182 : vector<8x128xf32>
    %192 = arith.mulf %191, %189 : vector<8x128xf32>
    %193 = arith.mulf %182, %157 : vector<8x128xf32>
    %194 = arith.addf %192, %193 : vector<8x128xf32>
    %195 = vector.extract_strided_slice %194 {offsets = [0, 0], sizes = [8, 32], strides = [1, 1]} : vector<8x128xf32> to vector<8x32xf32>
    %cst_71 = arith.constant dense<0.000000e+00> : vector<8x384xf32>
    %196 = tpu.matmul %195, %12, %cst_71 {dimension_numbers = #tpu.dot_dimension_numbers<[1], [0], [0], [1], [0, 0, 1, 1], [], []>} : vector<8x32xf32>, vector<32x384xf32>, vector<8x384xf32> -> vector<8x384xf32>
    %197 = vector.broadcast %13 : vector<1x384xf32> to vector<8x384xf32>
    %198 = arith.addf %196, %197 : vector<8x384xf32>
    %c32_72 = arith.constant 32 : index
    %c0_73 = arith.constant 0 : index
    %199 = vector.load %arg7[%c32_72, %c0_73] : memref<64x384xf32, #tpu.memory_space<vmem>>, vector<8x384xf32>
    tpu.vector_store %arg7[%c32_72, %c0_73], %198 {strides = array<i32>} : memref<64x384xf32, #tpu.memory_space<vmem>>, vector<8x384xf32>,
    %c40 = arith.constant 40 : index
    %c0_74 = arith.constant 0 : index
    %200 = vector.load %arg7[%c40, %c0_74] : memref<64x384xf32, #tpu.memory_space<vmem>>, vector<8x384xf32>
    %201 = vector.extract_strided_slice %194 {offsets = [0, 0], sizes = [8, 32], strides = [1, 1]} : vector<8x128xf32> to vector<8x32xf32>
    %cst_75 = arith.constant dense<0.000000e+00> : vector<8x384xf32>
    %202 = tpu.matmul %201, %9, %cst_75 {dimension_numbers = #tpu.dot_dimension_numbers<[1], [0], [0], [1], [0, 0, 1, 1], [], []>} : vector<8x32xf32>, vector<32x384xf32>, vector<8x384xf32> -> vector<8x384xf32>
    %203 = arith.addf %200, %202 : vector<8x384xf32>
    %204 = vector.extract_strided_slice %203 {offsets = [0, 0], sizes = [8, 128], strides = [1, 1]} : vector<8x384xf32> to vector<8x128xf32>
    %cst_76 = arith.constant 5.000000e-01 : f32
    %205 = vector.broadcast %cst_76 : f32 to vector<8x128xf32>
    %206 = arith.mulf %205, %204 : vector<8x128xf32>
    %207 = math.tanh %206 : vector<8x128xf32>
    %cst_77 = arith.constant 5.000000e-01 : f32
    %208 = vector.broadcast %cst_77 : f32 to vector<8x128xf32>
    %209 = arith.mulf %208, %207 : vector<8x128xf32>
    %cst_78 = arith.constant 5.000000e-01 : f32
    %210 = vector.broadcast %cst_78 : f32 to vector<8x128xf32>
    %211 = arith.addf %209, %210 : vector<8x128xf32>
    %212 = vector.extract_strided_slice %203 {offsets = [0, 128], sizes = [8, 128], strides = [1, 1]} : vector<8x384xf32> to vector<8x128xf32>
    %cst_79 = arith.constant 5.000000e-01 : f32
    %213 = vector.broadcast %cst_79 : f32 to vector<8x128xf32>
    %214 = arith.mulf %213, %212 : vector<8x128xf32>
    %215 = math.tanh %214 : vector<8x128xf32>
    %cst_80 = arith.constant 5.000000e-01 : f32
    %216 = vector.broadcast %cst_80 : f32 to vector<8x128xf32>
    %217 = arith.mulf %216, %215 : vector<8x128xf32>
    %cst_81 = arith.constant 5.000000e-01 : f32
    %218 = vector.broadcast %cst_81 : f32 to vector<8x128xf32>
    %219 = arith.addf %217, %218 : vector<8x128xf32>
    %220 = vector.extract_strided_slice %200 {offsets = [0, 256], sizes = [8, 128], strides = [1, 1]} : vector<8x384xf32> to vector<8x128xf32>
    %221 = vector.extract_strided_slice %202 {offsets = [0, 256], sizes = [8, 128], strides = [1, 1]} : vector<8x384xf32> to vector<8x128xf32>
    %222 = vector.broadcast %11 : vector<1x128xf32> to vector<8x128xf32>
    %223 = arith.addf %221, %222 : vector<8x128xf32>
    %224 = arith.mulf %211, %223 : vector<8x128xf32>
    %225 = arith.addf %220, %224 : vector<8x128xf32>
    %226 = math.tanh %225 : vector<8x128xf32>
    %cst_82 = arith.constant 1.000000e+00 : f32
    %227 = vector.broadcast %cst_82 : f32 to vector<8x128xf32>
    %228 = arith.subf %227, %219 : vector<8x128xf32>
    %229 = arith.mulf %228, %226 : vector<8x128xf32>
    %230 = arith.mulf %219, %194 : vector<8x128xf32>
    %231 = arith.addf %229, %230 : vector<8x128xf32>
    %232 = vector.extract_strided_slice %231 {offsets = [0, 0], sizes = [8, 32], strides = [1, 1]} : vector<8x128xf32> to vector<8x32xf32>
    %cst_83 = arith.constant dense<0.000000e+00> : vector<8x384xf32>
    %233 = tpu.matmul %232, %12, %cst_83 {dimension_numbers = #tpu.dot_dimension_numbers<[1], [0], [0], [1], [0, 0, 1, 1], [], []>} : vector<8x32xf32>, vector<32x384xf32>, vector<8x384xf32> -> vector<8x384xf32>
    %234 = vector.broadcast %13 : vector<1x384xf32> to vector<8x384xf32>
    %235 = arith.addf %233, %234 : vector<8x384xf32>
    %c40_84 = arith.constant 40 : index
    %c0_85 = arith.constant 0 : index
    %236 = vector.load %arg7[%c40_84, %c0_85] : memref<64x384xf32, #tpu.memory_space<vmem>>, vector<8x384xf32>
    tpu.vector_store %arg7[%c40_84, %c0_85], %235 {strides = array<i32>} : memref<64x384xf32, #tpu.memory_space<vmem>>, vector<8x384xf32>,
    %c48 = arith.constant 48 : index
    %c0_86 = arith.constant 0 : index
    %237 = vector.load %arg7[%c48, %c0_86] : memref<64x384xf32, #tpu.memory_space<vmem>>, vector<8x384xf32>
    %238 = vector.extract_strided_slice %231 {offsets = [0, 0], sizes = [8, 32], strides = [1, 1]} : vector<8x128xf32> to vector<8x32xf32>
    %cst_87 = arith.constant dense<0.000000e+00> : vector<8x384xf32>
    %239 = tpu.matmul %238, %9, %cst_87 {dimension_numbers = #tpu.dot_dimension_numbers<[1], [0], [0], [1], [0, 0, 1, 1], [], []>} : vector<8x32xf32>, vector<32x384xf32>, vector<8x384xf32> -> vector<8x384xf32>
    %240 = arith.addf %237, %239 : vector<8x384xf32>
    %241 = vector.extract_strided_slice %240 {offsets = [0, 0], sizes = [8, 128], strides = [1, 1]} : vector<8x384xf32> to vector<8x128xf32>
    %cst_88 = arith.constant 5.000000e-01 : f32
    %242 = vector.broadcast %cst_88 : f32 to vector<8x128xf32>
    %243 = arith.mulf %242, %241 : vector<8x128xf32>
    %244 = math.tanh %243 : vector<8x128xf32>
    %cst_89 = arith.constant 5.000000e-01 : f32
    %245 = vector.broadcast %cst_89 : f32 to vector<8x128xf32>
    %246 = arith.mulf %245, %244 : vector<8x128xf32>
    %cst_90 = arith.constant 5.000000e-01 : f32
    %247 = vector.broadcast %cst_90 : f32 to vector<8x128xf32>
    %248 = arith.addf %246, %247 : vector<8x128xf32>
    %249 = vector.extract_strided_slice %240 {offsets = [0, 128], sizes = [8, 128], strides = [1, 1]} : vector<8x384xf32> to vector<8x128xf32>
    %cst_91 = arith.constant 5.000000e-01 : f32
    %250 = vector.broadcast %cst_91 : f32 to vector<8x128xf32>
    %251 = arith.mulf %250, %249 : vector<8x128xf32>
    %252 = math.tanh %251 : vector<8x128xf32>
    %cst_92 = arith.constant 5.000000e-01 : f32
    %253 = vector.broadcast %cst_92 : f32 to vector<8x128xf32>
    %254 = arith.mulf %253, %252 : vector<8x128xf32>
    %cst_93 = arith.constant 5.000000e-01 : f32
    %255 = vector.broadcast %cst_93 : f32 to vector<8x128xf32>
    %256 = arith.addf %254, %255 : vector<8x128xf32>
    %257 = vector.extract_strided_slice %237 {offsets = [0, 256], sizes = [8, 128], strides = [1, 1]} : vector<8x384xf32> to vector<8x128xf32>
    %258 = vector.extract_strided_slice %239 {offsets = [0, 256], sizes = [8, 128], strides = [1, 1]} : vector<8x384xf32> to vector<8x128xf32>
    %259 = vector.broadcast %11 : vector<1x128xf32> to vector<8x128xf32>
    %260 = arith.addf %258, %259 : vector<8x128xf32>
    %261 = arith.mulf %248, %260 : vector<8x128xf32>
    %262 = arith.addf %257, %261 : vector<8x128xf32>
    %263 = math.tanh %262 : vector<8x128xf32>
    %cst_94 = arith.constant 1.000000e+00 : f32
    %264 = vector.broadcast %cst_94 : f32 to vector<8x128xf32>
    %265 = arith.subf %264, %256 : vector<8x128xf32>
    %266 = arith.mulf %265, %263 : vector<8x128xf32>
    %267 = arith.mulf %256, %231 : vector<8x128xf32>
    %268 = arith.addf %266, %267 : vector<8x128xf32>
    %269 = vector.extract_strided_slice %268 {offsets = [0, 0], sizes = [8, 32], strides = [1, 1]} : vector<8x128xf32> to vector<8x32xf32>
    %cst_95 = arith.constant dense<0.000000e+00> : vector<8x384xf32>
    %270 = tpu.matmul %269, %12, %cst_95 {dimension_numbers = #tpu.dot_dimension_numbers<[1], [0], [0], [1], [0, 0, 1, 1], [], []>} : vector<8x32xf32>, vector<32x384xf32>, vector<8x384xf32> -> vector<8x384xf32>
    %271 = vector.broadcast %13 : vector<1x384xf32> to vector<8x384xf32>
    %272 = arith.addf %270, %271 : vector<8x384xf32>
    %c48_96 = arith.constant 48 : index
    %c0_97 = arith.constant 0 : index
    %273 = vector.load %arg7[%c48_96, %c0_97] : memref<64x384xf32, #tpu.memory_space<vmem>>, vector<8x384xf32>
    tpu.vector_store %arg7[%c48_96, %c0_97], %272 {strides = array<i32>} : memref<64x384xf32, #tpu.memory_space<vmem>>, vector<8x384xf32>,
    %c56 = arith.constant 56 : index
    %c0_98 = arith.constant 0 : index
    %274 = vector.load %arg7[%c56, %c0_98] : memref<64x384xf32, #tpu.memory_space<vmem>>, vector<8x384xf32>
    %275 = vector.extract_strided_slice %268 {offsets = [0, 0], sizes = [8, 32], strides = [1, 1]} : vector<8x128xf32> to vector<8x32xf32>
    %cst_99 = arith.constant dense<0.000000e+00> : vector<8x384xf32>
    %276 = tpu.matmul %275, %9, %cst_99 {dimension_numbers = #tpu.dot_dimension_numbers<[1], [0], [0], [1], [0, 0, 1, 1], [], []>} : vector<8x32xf32>, vector<32x384xf32>, vector<8x384xf32> -> vector<8x384xf32>
    %277 = arith.addf %274, %276 : vector<8x384xf32>
    %278 = vector.extract_strided_slice %277 {offsets = [0, 0], sizes = [8, 128], strides = [1, 1]} : vector<8x384xf32> to vector<8x128xf32>
    %cst_100 = arith.constant 5.000000e-01 : f32
    %279 = vector.broadcast %cst_100 : f32 to vector<8x128xf32>
    %280 = arith.mulf %279, %278 : vector<8x128xf32>
    %281 = math.tanh %280 : vector<8x128xf32>
    %cst_101 = arith.constant 5.000000e-01 : f32
    %282 = vector.broadcast %cst_101 : f32 to vector<8x128xf32>
    %283 = arith.mulf %282, %281 : vector<8x128xf32>
    %cst_102 = arith.constant 5.000000e-01 : f32
    %284 = vector.broadcast %cst_102 : f32 to vector<8x128xf32>
    %285 = arith.addf %283, %284 : vector<8x128xf32>
    %286 = vector.extract_strided_slice %277 {offsets = [0, 128], sizes = [8, 128], strides = [1, 1]} : vector<8x384xf32> to vector<8x128xf32>
    %cst_103 = arith.constant 5.000000e-01 : f32
    %287 = vector.broadcast %cst_103 : f32 to vector<8x128xf32>
    %288 = arith.mulf %287, %286 : vector<8x128xf32>
    %289 = math.tanh %288 : vector<8x128xf32>
    %cst_104 = arith.constant 5.000000e-01 : f32
    %290 = vector.broadcast %cst_104 : f32 to vector<8x128xf32>
    %291 = arith.mulf %290, %289 : vector<8x128xf32>
    %cst_105 = arith.constant 5.000000e-01 : f32
    %292 = vector.broadcast %cst_105 : f32 to vector<8x128xf32>
    %293 = arith.addf %291, %292 : vector<8x128xf32>
    %294 = vector.extract_strided_slice %274 {offsets = [0, 256], sizes = [8, 128], strides = [1, 1]} : vector<8x384xf32> to vector<8x128xf32>
    %295 = vector.extract_strided_slice %276 {offsets = [0, 256], sizes = [8, 128], strides = [1, 1]} : vector<8x384xf32> to vector<8x128xf32>
    %296 = vector.broadcast %11 : vector<1x128xf32> to vector<8x128xf32>
    %297 = arith.addf %295, %296 : vector<8x128xf32>
    %298 = arith.mulf %285, %297 : vector<8x128xf32>
    %299 = arith.addf %294, %298 : vector<8x128xf32>
    %300 = math.tanh %299 : vector<8x128xf32>
    %cst_106 = arith.constant 1.000000e+00 : f32
    %301 = vector.broadcast %cst_106 : f32 to vector<8x128xf32>
    %302 = arith.subf %301, %293 : vector<8x128xf32>
    %303 = arith.mulf %302, %300 : vector<8x128xf32>
    %304 = arith.mulf %293, %268 : vector<8x128xf32>
    %305 = arith.addf %303, %304 : vector<8x128xf32>
    %306 = vector.extract_strided_slice %305 {offsets = [0, 0], sizes = [8, 32], strides = [1, 1]} : vector<8x128xf32> to vector<8x32xf32>
    %cst_107 = arith.constant dense<0.000000e+00> : vector<8x384xf32>
    %307 = tpu.matmul %306, %12, %cst_107 {dimension_numbers = #tpu.dot_dimension_numbers<[1], [0], [0], [1], [0, 0, 1, 1], [], []>} : vector<8x32xf32>, vector<32x384xf32>, vector<8x384xf32> -> vector<8x384xf32>
    %308 = vector.broadcast %13 : vector<1x384xf32> to vector<8x384xf32>
    %309 = arith.addf %307, %308 : vector<8x384xf32>
    %c56_108 = arith.constant 56 : index
    %c0_109 = arith.constant 0 : index
    %310 = vector.load %arg7[%c56_108, %c0_109] : memref<64x384xf32, #tpu.memory_space<vmem>>, vector<8x384xf32>
    tpu.vector_store %arg7[%c56_108, %c0_109], %309 {strides = array<i32>} : memref<64x384xf32, #tpu.memory_space<vmem>>, vector<8x384xf32>,
    %c32_110 = arith.constant 32 : index
    %c0_111 = arith.constant 0 : index
    %311 = vector.load %arg3[%c32_110, %c0_111] : memref<96x384xf32, #tpu.memory_space<vmem>>, vector<32x384xf32>
    %c16_112 = arith.constant 16 : index
    %c0_113 = arith.constant 0 : index
    %312 = vector.load %arg4[%c16_112, %c0_113] : memref<24x384xf32, #tpu.memory_space<vmem>>, vector<1x384xf32>
    %313 = vector.extract_strided_slice %312 {offsets = [0, 0], sizes = [1, 128], strides = [1, 1]} : vector<1x384xf32> to vector<1x128xf32>
    %cst_114 = arith.constant 0.000000e+00 : f32
    %314 = vector.broadcast %cst_114 : f32 to vector<8x128xf32>
    %c0_115 = arith.constant 0 : index
    %c0_116 = arith.constant 0 : index
    %315 = vector.load %arg7[%c0_115, %c0_116] : memref<64x384xf32, #tpu.memory_space<vmem>>, vector<8x384xf32>
    %316 = vector.extract_strided_slice %314 {offsets = [0, 0], sizes = [8, 32], strides = [1, 1]} : vector<8x128xf32> to vector<8x32xf32>
    %cst_117 = arith.constant dense<0.000000e+00> : vector<8x384xf32>
    %317 = tpu.matmul %316, %311, %cst_117 {dimension_numbers = #tpu.dot_dimension_numbers<[1], [0], [0], [1], [0, 0, 1, 1], [], []>} : vector<8x32xf32>, vector<32x384xf32>, vector<8x384xf32> -> vector<8x384xf32>
    %318 = arith.addf %315, %317 : vector<8x384xf32>
    %319 = vector.extract_strided_slice %318 {offsets = [0, 0], sizes = [8, 128], strides = [1, 1]} : vector<8x384xf32> to vector<8x128xf32>
    %cst_118 = arith.constant 5.000000e-01 : f32
    %320 = vector.broadcast %cst_118 : f32 to vector<8x128xf32>
    %321 = arith.mulf %320, %319 : vector<8x128xf32>
    %322 = math.tanh %321 : vector<8x128xf32>
    %cst_119 = arith.constant 5.000000e-01 : f32
    %323 = vector.broadcast %cst_119 : f32 to vector<8x128xf32>
    %324 = arith.mulf %323, %322 : vector<8x128xf32>
    %cst_120 = arith.constant 5.000000e-01 : f32
    %325 = vector.broadcast %cst_120 : f32 to vector<8x128xf32>
    %326 = arith.addf %324, %325 : vector<8x128xf32>
    %327 = vector.extract_strided_slice %318 {offsets = [0, 128], sizes = [8, 128], strides = [1, 1]} : vector<8x384xf32> to vector<8x128xf32>
    %cst_121 = arith.constant 5.000000e-01 : f32
    %328 = vector.broadcast %cst_121 : f32 to vector<8x128xf32>
    %329 = arith.mulf %328, %327 : vector<8x128xf32>
    %330 = math.tanh %329 : vector<8x128xf32>
    %cst_122 = arith.constant 5.000000e-01 : f32
    %331 = vector.broadcast %cst_122 : f32 to vector<8x128xf32>
    %332 = arith.mulf %331, %330 : vector<8x128xf32>
    %cst_123 = arith.constant 5.000000e-01 : f32
    %333 = vector.broadcast %cst_123 : f32 to vector<8x128xf32>
    %334 = arith.addf %332, %333 : vector<8x128xf32>
    %335 = vector.extract_strided_slice %315 {offsets = [0, 256], sizes = [8, 128], strides = [1, 1]} : vector<8x384xf32> to vector<8x128xf32>
    %336 = vector.extract_strided_slice %317 {offsets = [0, 256], sizes = [8, 128], strides = [1, 1]} : vector<8x384xf32> to vector<8x128xf32>
    %337 = vector.broadcast %313 : vector<1x128xf32> to vector<8x128xf32>
    %338 = arith.addf %336, %337 : vector<8x128xf32>
    %339 = arith.mulf %326, %338 : vector<8x128xf32>
    %340 = arith.addf %335, %339 : vector<8x128xf32>
    %341 = math.tanh %340 : vector<8x128xf32>
    %cst_124 = arith.constant 1.000000e+00 : f32
    %342 = vector.broadcast %cst_124 : f32 to vector<8x128xf32>
    %343 = arith.subf %342, %334 : vector<8x128xf32>
    %344 = arith.mulf %343, %341 : vector<8x128xf32>
    %345 = arith.mulf %334, %314 : vector<8x128xf32>
    %346 = arith.addf %344, %345 : vector<8x128xf32>
    %c8_125 = arith.constant 8 : index
    %c0_126 = arith.constant 0 : index
    %347 = vector.load %arg7[%c8_125, %c0_126] : memref<64x384xf32, #tpu.memory_space<vmem>>, vector<8x384xf32>
    %348 = vector.extract_strided_slice %346 {offsets = [0, 0], sizes = [8, 32], strides = [1, 1]} : vector<8x128xf32> to vector<8x32xf32>
    %cst_127 = arith.constant dense<0.000000e+00> : vector<8x384xf32>
    %349 = tpu.matmul %348, %311, %cst_127 {dimension_numbers = #tpu.dot_dimension_numbers<[1], [0], [0], [1], [0, 0, 1, 1], [], []>} : vector<8x32xf32>, vector<32x384xf32>, vector<8x384xf32> -> vector<8x384xf32>
    %350 = arith.addf %347, %349 : vector<8x384xf32>
    %351 = vector.extract_strided_slice %350 {offsets = [0, 0], sizes = [8, 128], strides = [1, 1]} : vector<8x384xf32> to vector<8x128xf32>
    %cst_128 = arith.constant 5.000000e-01 : f32
    %352 = vector.broadcast %cst_128 : f32 to vector<8x128xf32>
    %353 = arith.mulf %352, %351 : vector<8x128xf32>
    %354 = math.tanh %353 : vector<8x128xf32>
    %cst_129 = arith.constant 5.000000e-01 : f32
    %355 = vector.broadcast %cst_129 : f32 to vector<8x128xf32>
    %356 = arith.mulf %355, %354 : vector<8x128xf32>
    %cst_130 = arith.constant 5.000000e-01 : f32
    %357 = vector.broadcast %cst_130 : f32 to vector<8x128xf32>
    %358 = arith.addf %356, %357 : vector<8x128xf32>
    %359 = vector.extract_strided_slice %350 {offsets = [0, 128], sizes = [8, 128], strides = [1, 1]} : vector<8x384xf32> to vector<8x128xf32>
    %cst_131 = arith.constant 5.000000e-01 : f32
    %360 = vector.broadcast %cst_131 : f32 to vector<8x128xf32>
    %361 = arith.mulf %360, %359 : vector<8x128xf32>
    %362 = math.tanh %361 : vector<8x128xf32>
    %cst_132 = arith.constant 5.000000e-01 : f32
    %363 = vector.broadcast %cst_132 : f32 to vector<8x128xf32>
    %364 = arith.mulf %363, %362 : vector<8x128xf32>
    %cst_133 = arith.constant 5.000000e-01 : f32
    %365 = vector.broadcast %cst_133 : f32 to vector<8x128xf32>
    %366 = arith.addf %364, %365 : vector<8x128xf32>
    %367 = vector.extract_strided_slice %347 {offsets = [0, 256], sizes = [8, 128], strides = [1, 1]} : vector<8x384xf32> to vector<8x128xf32>
    %368 = vector.extract_strided_slice %349 {offsets = [0, 256], sizes = [8, 128], strides = [1, 1]} : vector<8x384xf32> to vector<8x128xf32>
    %369 = vector.broadcast %313 : vector<1x128xf32> to vector<8x128xf32>
    %370 = arith.addf %368, %369 : vector<8x128xf32>
    %371 = arith.mulf %358, %370 : vector<8x128xf32>
    %372 = arith.addf %367, %371 : vector<8x128xf32>
    %373 = math.tanh %372 : vector<8x128xf32>
    %cst_134 = arith.constant 1.000000e+00 : f32
    %374 = vector.broadcast %cst_134 : f32 to vector<8x128xf32>
    %375 = arith.subf %374, %366 : vector<8x128xf32>
    %376 = arith.mulf %375, %373 : vector<8x128xf32>
    %377 = arith.mulf %366, %346 : vector<8x128xf32>
    %378 = arith.addf %376, %377 : vector<8x128xf32>
    %c16_135 = arith.constant 16 : index
    %c0_136 = arith.constant 0 : index
    %379 = vector.load %arg7[%c16_135, %c0_136] : memref<64x384xf32, #tpu.memory_space<vmem>>, vector<8x384xf32>
    %380 = vector.extract_strided_slice %378 {offsets = [0, 0], sizes = [8, 32], strides = [1, 1]} : vector<8x128xf32> to vector<8x32xf32>
    %cst_137 = arith.constant dense<0.000000e+00> : vector<8x384xf32>
    %381 = tpu.matmul %380, %311, %cst_137 {dimension_numbers = #tpu.dot_dimension_numbers<[1], [0], [0], [1], [0, 0, 1, 1], [], []>} : vector<8x32xf32>, vector<32x384xf32>, vector<8x384xf32> -> vector<8x384xf32>
    %382 = arith.addf %379, %381 : vector<8x384xf32>
    %383 = vector.extract_strided_slice %382 {offsets = [0, 0], sizes = [8, 128], strides = [1, 1]} : vector<8x384xf32> to vector<8x128xf32>
    %cst_138 = arith.constant 5.000000e-01 : f32
    %384 = vector.broadcast %cst_138 : f32 to vector<8x128xf32>
    %385 = arith.mulf %384, %383 : vector<8x128xf32>
    %386 = math.tanh %385 : vector<8x128xf32>
    %cst_139 = arith.constant 5.000000e-01 : f32
    %387 = vector.broadcast %cst_139 : f32 to vector<8x128xf32>
    %388 = arith.mulf %387, %386 : vector<8x128xf32>
    %cst_140 = arith.constant 5.000000e-01 : f32
    %389 = vector.broadcast %cst_140 : f32 to vector<8x128xf32>
    %390 = arith.addf %388, %389 : vector<8x128xf32>
    %391 = vector.extract_strided_slice %382 {offsets = [0, 128], sizes = [8, 128], strides = [1, 1]} : vector<8x384xf32> to vector<8x128xf32>
    %cst_141 = arith.constant 5.000000e-01 : f32
    %392 = vector.broadcast %cst_141 : f32 to vector<8x128xf32>
    %393 = arith.mulf %392, %391 : vector<8x128xf32>
    %394 = math.tanh %393 : vector<8x128xf32>
    %cst_142 = arith.constant 5.000000e-01 : f32
    %395 = vector.broadcast %cst_142 : f32 to vector<8x128xf32>
    %396 = arith.mulf %395, %394 : vector<8x128xf32>
    %cst_143 = arith.constant 5.000000e-01 : f32
    %397 = vector.broadcast %cst_143 : f32 to vector<8x128xf32>
    %398 = arith.addf %396, %397 : vector<8x128xf32>
    %399 = vector.extract_strided_slice %379 {offsets = [0, 256], sizes = [8, 128], strides = [1, 1]} : vector<8x384xf32> to vector<8x128xf32>
    %400 = vector.extract_strided_slice %381 {offsets = [0, 256], sizes = [8, 128], strides = [1, 1]} : vector<8x384xf32> to vector<8x128xf32>
    %401 = vector.broadcast %313 : vector<1x128xf32> to vector<8x128xf32>
    %402 = arith.addf %400, %401 : vector<8x128xf32>
    %403 = arith.mulf %390, %402 : vector<8x128xf32>
    %404 = arith.addf %399, %403 : vector<8x128xf32>
    %405 = math.tanh %404 : vector<8x128xf32>
    %cst_144 = arith.constant 1.000000e+00 : f32
    %406 = vector.broadcast %cst_144 : f32 to vector<8x128xf32>
    %407 = arith.subf %406, %398 : vector<8x128xf32>
    %408 = arith.mulf %407, %405 : vector<8x128xf32>
    %409 = arith.mulf %398, %378 : vector<8x128xf32>
    %410 = arith.addf %408, %409 : vector<8x128xf32>
    %c24_145 = arith.constant 24 : index
    %c0_146 = arith.constant 0 : index
    %411 = vector.load %arg7[%c24_145, %c0_146] : memref<64x384xf32, #tpu.memory_space<vmem>>, vector<8x384xf32>
    %412 = vector.extract_strided_slice %410 {offsets = [0, 0], sizes = [8, 32], strides = [1, 1]} : vector<8x128xf32> to vector<8x32xf32>
    %cst_147 = arith.constant dense<0.000000e+00> : vector<8x384xf32>
    %413 = tpu.matmul %412, %311, %cst_147 {dimension_numbers = #tpu.dot_dimension_numbers<[1], [0], [0], [1], [0, 0, 1, 1], [], []>} : vector<8x32xf32>, vector<32x384xf32>, vector<8x384xf32> -> vector<8x384xf32>
    %414 = arith.addf %411, %413 : vector<8x384xf32>
    %415 = vector.extract_strided_slice %414 {offsets = [0, 0], sizes = [8, 128], strides = [1, 1]} : vector<8x384xf32> to vector<8x128xf32>
    %cst_148 = arith.constant 5.000000e-01 : f32
    %416 = vector.broadcast %cst_148 : f32 to vector<8x128xf32>
    %417 = arith.mulf %416, %415 : vector<8x128xf32>
    %418 = math.tanh %417 : vector<8x128xf32>
    %cst_149 = arith.constant 5.000000e-01 : f32
    %419 = vector.broadcast %cst_149 : f32 to vector<8x128xf32>
    %420 = arith.mulf %419, %418 : vector<8x128xf32>
    %cst_150 = arith.constant 5.000000e-01 : f32
    %421 = vector.broadcast %cst_150 : f32 to vector<8x128xf32>
    %422 = arith.addf %420, %421 : vector<8x128xf32>
    %423 = vector.extract_strided_slice %414 {offsets = [0, 128], sizes = [8, 128], strides = [1, 1]} : vector<8x384xf32> to vector<8x128xf32>
    %cst_151 = arith.constant 5.000000e-01 : f32
    %424 = vector.broadcast %cst_151 : f32 to vector<8x128xf32>
    %425 = arith.mulf %424, %423 : vector<8x128xf32>
    %426 = math.tanh %425 : vector<8x128xf32>
    %cst_152 = arith.constant 5.000000e-01 : f32
    %427 = vector.broadcast %cst_152 : f32 to vector<8x128xf32>
    %428 = arith.mulf %427, %426 : vector<8x128xf32>
    %cst_153 = arith.constant 5.000000e-01 : f32
    %429 = vector.broadcast %cst_153 : f32 to vector<8x128xf32>
    %430 = arith.addf %428, %429 : vector<8x128xf32>
    %431 = vector.extract_strided_slice %411 {offsets = [0, 256], sizes = [8, 128], strides = [1, 1]} : vector<8x384xf32> to vector<8x128xf32>
    %432 = vector.extract_strided_slice %413 {offsets = [0, 256], sizes = [8, 128], strides = [1, 1]} : vector<8x384xf32> to vector<8x128xf32>
    %433 = vector.broadcast %313 : vector<1x128xf32> to vector<8x128xf32>
    %434 = arith.addf %432, %433 : vector<8x128xf32>
    %435 = arith.mulf %422, %434 : vector<8x128xf32>
    %436 = arith.addf %431, %435 : vector<8x128xf32>
    %437 = math.tanh %436 : vector<8x128xf32>
    %cst_154 = arith.constant 1.000000e+00 : f32
    %438 = vector.broadcast %cst_154 : f32 to vector<8x128xf32>
    %439 = arith.subf %438, %430 : vector<8x128xf32>
    %440 = arith.mulf %439, %437 : vector<8x128xf32>
    %441 = arith.mulf %430, %410 : vector<8x128xf32>
    %442 = arith.addf %440, %441 : vector<8x128xf32>
    %c32_155 = arith.constant 32 : index
    %c0_156 = arith.constant 0 : index
    %443 = vector.load %arg7[%c32_155, %c0_156] : memref<64x384xf32, #tpu.memory_space<vmem>>, vector<8x384xf32>
    %444 = vector.extract_strided_slice %442 {offsets = [0, 0], sizes = [8, 32], strides = [1, 1]} : vector<8x128xf32> to vector<8x32xf32>
    %cst_157 = arith.constant dense<0.000000e+00> : vector<8x384xf32>
    %445 = tpu.matmul %444, %311, %cst_157 {dimension_numbers = #tpu.dot_dimension_numbers<[1], [0], [0], [1], [0, 0, 1, 1], [], []>} : vector<8x32xf32>, vector<32x384xf32>, vector<8x384xf32> -> vector<8x384xf32>
    %446 = arith.addf %443, %445 : vector<8x384xf32>
    %447 = vector.extract_strided_slice %446 {offsets = [0, 0], sizes = [8, 128], strides = [1, 1]} : vector<8x384xf32> to vector<8x128xf32>
    %cst_158 = arith.constant 5.000000e-01 : f32
    %448 = vector.broadcast %cst_158 : f32 to vector<8x128xf32>
    %449 = arith.mulf %448, %447 : vector<8x128xf32>
    %450 = math.tanh %449 : vector<8x128xf32>
    %cst_159 = arith.constant 5.000000e-01 : f32
    %451 = vector.broadcast %cst_159 : f32 to vector<8x128xf32>
    %452 = arith.mulf %451, %450 : vector<8x128xf32>
    %cst_160 = arith.constant 5.000000e-01 : f32
    %453 = vector.broadcast %cst_160 : f32 to vector<8x128xf32>
    %454 = arith.addf %452, %453 : vector<8x128xf32>
    %455 = vector.extract_strided_slice %446 {offsets = [0, 128], sizes = [8, 128], strides = [1, 1]} : vector<8x384xf32> to vector<8x128xf32>
    %cst_161 = arith.constant 5.000000e-01 : f32
    %456 = vector.broadcast %cst_161 : f32 to vector<8x128xf32>
    %457 = arith.mulf %456, %455 : vector<8x128xf32>
    %458 = math.tanh %457 : vector<8x128xf32>
    %cst_162 = arith.constant 5.000000e-01 : f32
    %459 = vector.broadcast %cst_162 : f32 to vector<8x128xf32>
    %460 = arith.mulf %459, %458 : vector<8x128xf32>
    %cst_163 = arith.constant 5.000000e-01 : f32
    %461 = vector.broadcast %cst_163 : f32 to vector<8x128xf32>
    %462 = arith.addf %460, %461 : vector<8x128xf32>
    %463 = vector.extract_strided_slice %443 {offsets = [0, 256], sizes = [8, 128], strides = [1, 1]} : vector<8x384xf32> to vector<8x128xf32>
    %464 = vector.extract_strided_slice %445 {offsets = [0, 256], sizes = [8, 128], strides = [1, 1]} : vector<8x384xf32> to vector<8x128xf32>
    %465 = vector.broadcast %313 : vector<1x128xf32> to vector<8x128xf32>
    %466 = arith.addf %464, %465 : vector<8x128xf32>
    %467 = arith.mulf %454, %466 : vector<8x128xf32>
    %468 = arith.addf %463, %467 : vector<8x128xf32>
    %469 = math.tanh %468 : vector<8x128xf32>
    %cst_164 = arith.constant 1.000000e+00 : f32
    %470 = vector.broadcast %cst_164 : f32 to vector<8x128xf32>
    %471 = arith.subf %470, %462 : vector<8x128xf32>
    %472 = arith.mulf %471, %469 : vector<8x128xf32>
    %473 = arith.mulf %462, %442 : vector<8x128xf32>
    %474 = arith.addf %472, %473 : vector<8x128xf32>
    %c40_165 = arith.constant 40 : index
    %c0_166 = arith.constant 0 : index
    %475 = vector.load %arg7[%c40_165, %c0_166] : memref<64x384xf32, #tpu.memory_space<vmem>>, vector<8x384xf32>
    %476 = vector.extract_strided_slice %474 {offsets = [0, 0], sizes = [8, 32], strides = [1, 1]} : vector<8x128xf32> to vector<8x32xf32>
    %cst_167 = arith.constant dense<0.000000e+00> : vector<8x384xf32>
    %477 = tpu.matmul %476, %311, %cst_167 {dimension_numbers = #tpu.dot_dimension_numbers<[1], [0], [0], [1], [0, 0, 1, 1], [], []>} : vector<8x32xf32>, vector<32x384xf32>, vector<8x384xf32> -> vector<8x384xf32>
    %478 = arith.addf %475, %477 : vector<8x384xf32>
    %479 = vector.extract_strided_slice %478 {offsets = [0, 0], sizes = [8, 128], strides = [1, 1]} : vector<8x384xf32> to vector<8x128xf32>
    %cst_168 = arith.constant 5.000000e-01 : f32
    %480 = vector.broadcast %cst_168 : f32 to vector<8x128xf32>
    %481 = arith.mulf %480, %479 : vector<8x128xf32>
    %482 = math.tanh %481 : vector<8x128xf32>
    %cst_169 = arith.constant 5.000000e-01 : f32
    %483 = vector.broadcast %cst_169 : f32 to vector<8x128xf32>
    %484 = arith.mulf %483, %482 : vector<8x128xf32>
    %cst_170 = arith.constant 5.000000e-01 : f32
    %485 = vector.broadcast %cst_170 : f32 to vector<8x128xf32>
    %486 = arith.addf %484, %485 : vector<8x128xf32>
    %487 = vector.extract_strided_slice %478 {offsets = [0, 128], sizes = [8, 128], strides = [1, 1]} : vector<8x384xf32> to vector<8x128xf32>
    %cst_171 = arith.constant 5.000000e-01 : f32
    %488 = vector.broadcast %cst_171 : f32 to vector<8x128xf32>
    %489 = arith.mulf %488, %487 : vector<8x128xf32>
    %490 = math.tanh %489 : vector<8x128xf32>
    %cst_172 = arith.constant 5.000000e-01 : f32
    %491 = vector.broadcast %cst_172 : f32 to vector<8x128xf32>
    %492 = arith.mulf %491, %490 : vector<8x128xf32>
    %cst_173 = arith.constant 5.000000e-01 : f32
    %493 = vector.broadcast %cst_173 : f32 to vector<8x128xf32>
    %494 = arith.addf %492, %493 : vector<8x128xf32>
    %495 = vector.extract_strided_slice %475 {offsets = [0, 256], sizes = [8, 128], strides = [1, 1]} : vector<8x384xf32> to vector<8x128xf32>
    %496 = vector.extract_strided_slice %477 {offsets = [0, 256], sizes = [8, 128], strides = [1, 1]} : vector<8x384xf32> to vector<8x128xf32>
    %497 = vector.broadcast %313 : vector<1x128xf32> to vector<8x128xf32>
    %498 = arith.addf %496, %497 : vector<8x128xf32>
    %499 = arith.mulf %486, %498 : vector<8x128xf32>
    %500 = arith.addf %495, %499 : vector<8x128xf32>
    %501 = math.tanh %500 : vector<8x128xf32>
    %cst_174 = arith.constant 1.000000e+00 : f32
    %502 = vector.broadcast %cst_174 : f32 to vector<8x128xf32>
    %503 = arith.subf %502, %494 : vector<8x128xf32>
    %504 = arith.mulf %503, %501 : vector<8x128xf32>
    %505 = arith.mulf %494, %474 : vector<8x128xf32>
    %506 = arith.addf %504, %505 : vector<8x128xf32>
    %c48_175 = arith.constant 48 : index
    %c0_176 = arith.constant 0 : index
    %507 = vector.load %arg7[%c48_175, %c0_176] : memref<64x384xf32, #tpu.memory_space<vmem>>, vector<8x384xf32>
    %508 = vector.extract_strided_slice %506 {offsets = [0, 0], sizes = [8, 32], strides = [1, 1]} : vector<8x128xf32> to vector<8x32xf32>
    %cst_177 = arith.constant dense<0.000000e+00> : vector<8x384xf32>
    %509 = tpu.matmul %508, %311, %cst_177 {dimension_numbers = #tpu.dot_dimension_numbers<[1], [0], [0], [1], [0, 0, 1, 1], [], []>} : vector<8x32xf32>, vector<32x384xf32>, vector<8x384xf32> -> vector<8x384xf32>
    %510 = arith.addf %507, %509 : vector<8x384xf32>
    %511 = vector.extract_strided_slice %510 {offsets = [0, 0], sizes = [8, 128], strides = [1, 1]} : vector<8x384xf32> to vector<8x128xf32>
    %cst_178 = arith.constant 5.000000e-01 : f32
    %512 = vector.broadcast %cst_178 : f32 to vector<8x128xf32>
    %513 = arith.mulf %512, %511 : vector<8x128xf32>
    %514 = math.tanh %513 : vector<8x128xf32>
    %cst_179 = arith.constant 5.000000e-01 : f32
    %515 = vector.broadcast %cst_179 : f32 to vector<8x128xf32>
    %516 = arith.mulf %515, %514 : vector<8x128xf32>
    %cst_180 = arith.constant 5.000000e-01 : f32
    %517 = vector.broadcast %cst_180 : f32 to vector<8x128xf32>
    %518 = arith.addf %516, %517 : vector<8x128xf32>
    %519 = vector.extract_strided_slice %510 {offsets = [0, 128], sizes = [8, 128], strides = [1, 1]} : vector<8x384xf32> to vector<8x128xf32>
    %cst_181 = arith.constant 5.000000e-01 : f32
    %520 = vector.broadcast %cst_181 : f32 to vector<8x128xf32>
    %521 = arith.mulf %520, %519 : vector<8x128xf32>
    %522 = math.tanh %521 : vector<8x128xf32>
    %cst_182 = arith.constant 5.000000e-01 : f32
    %523 = vector.broadcast %cst_182 : f32 to vector<8x128xf32>
    %524 = arith.mulf %523, %522 : vector<8x128xf32>
    %cst_183 = arith.constant 5.000000e-01 : f32
    %525 = vector.broadcast %cst_183 : f32 to vector<8x128xf32>
    %526 = arith.addf %524, %525 : vector<8x128xf32>
    %527 = vector.extract_strided_slice %507 {offsets = [0, 256], sizes = [8, 128], strides = [1, 1]} : vector<8x384xf32> to vector<8x128xf32>
    %528 = vector.extract_strided_slice %509 {offsets = [0, 256], sizes = [8, 128], strides = [1, 1]} : vector<8x384xf32> to vector<8x128xf32>
    %529 = vector.broadcast %313 : vector<1x128xf32> to vector<8x128xf32>
    %530 = arith.addf %528, %529 : vector<8x128xf32>
    %531 = arith.mulf %518, %530 : vector<8x128xf32>
    %532 = arith.addf %527, %531 : vector<8x128xf32>
    %533 = math.tanh %532 : vector<8x128xf32>
    %cst_184 = arith.constant 1.000000e+00 : f32
    %534 = vector.broadcast %cst_184 : f32 to vector<8x128xf32>
    %535 = arith.subf %534, %526 : vector<8x128xf32>
    %536 = arith.mulf %535, %533 : vector<8x128xf32>
    %537 = arith.mulf %526, %506 : vector<8x128xf32>
    %538 = arith.addf %536, %537 : vector<8x128xf32>
    %c56_185 = arith.constant 56 : index
    %c0_186 = arith.constant 0 : index
    %539 = vector.load %arg7[%c56_185, %c0_186] : memref<64x384xf32, #tpu.memory_space<vmem>>, vector<8x384xf32>
    %540 = vector.extract_strided_slice %538 {offsets = [0, 0], sizes = [8, 32], strides = [1, 1]} : vector<8x128xf32> to vector<8x32xf32>
    %cst_187 = arith.constant dense<0.000000e+00> : vector<8x384xf32>
    %541 = tpu.matmul %540, %311, %cst_187 {dimension_numbers = #tpu.dot_dimension_numbers<[1], [0], [0], [1], [0, 0, 1, 1], [], []>} : vector<8x32xf32>, vector<32x384xf32>, vector<8x384xf32> -> vector<8x384xf32>
    %542 = arith.addf %539, %541 : vector<8x384xf32>
    %543 = vector.extract_strided_slice %542 {offsets = [0, 0], sizes = [8, 128], strides = [1, 1]} : vector<8x384xf32> to vector<8x128xf32>
    %cst_188 = arith.constant 5.000000e-01 : f32
    %544 = vector.broadcast %cst_188 : f32 to vector<8x128xf32>
    %545 = arith.mulf %544, %543 : vector<8x128xf32>
    %546 = math.tanh %545 : vector<8x128xf32>
    %cst_189 = arith.constant 5.000000e-01 : f32
    %547 = vector.broadcast %cst_189 : f32 to vector<8x128xf32>
    %548 = arith.mulf %547, %546 : vector<8x128xf32>
    %cst_190 = arith.constant 5.000000e-01 : f32
    %549 = vector.broadcast %cst_190 : f32 to vector<8x128xf32>
    %550 = arith.addf %548, %549 : vector<8x128xf32>
    %551 = vector.extract_strided_slice %542 {offsets = [0, 128], sizes = [8, 128], strides = [1, 1]} : vector<8x384xf32> to vector<8x128xf32>
    %cst_191 = arith.constant 5.000000e-01 : f32
    %552 = vector.broadcast %cst_191 : f32 to vector<8x128xf32>
    %553 = arith.mulf %552, %551 : vector<8x128xf32>
    %554 = math.tanh %553 : vector<8x128xf32>
    %cst_192 = arith.constant 5.000000e-01 : f32
    %555 = vector.broadcast %cst_192 : f32 to vector<8x128xf32>
    %556 = arith.mulf %555, %554 : vector<8x128xf32>
    %cst_193 = arith.constant 5.000000e-01 : f32
    %557 = vector.broadcast %cst_193 : f32 to vector<8x128xf32>
    %558 = arith.addf %556, %557 : vector<8x128xf32>
    %559 = vector.extract_strided_slice %539 {offsets = [0, 256], sizes = [8, 128], strides = [1, 1]} : vector<8x384xf32> to vector<8x128xf32>
    %560 = vector.extract_strided_slice %541 {offsets = [0, 256], sizes = [8, 128], strides = [1, 1]} : vector<8x384xf32> to vector<8x128xf32>
    %561 = vector.broadcast %313 : vector<1x128xf32> to vector<8x128xf32>
    %562 = arith.addf %560, %561 : vector<8x128xf32>
    %563 = arith.mulf %550, %562 : vector<8x128xf32>
    %564 = arith.addf %559, %563 : vector<8x128xf32>
    %565 = math.tanh %564 : vector<8x128xf32>
    %cst_194 = arith.constant 1.000000e+00 : f32
    %566 = vector.broadcast %cst_194 : f32 to vector<8x128xf32>
    %567 = arith.subf %566, %558 : vector<8x128xf32>
    %568 = arith.mulf %567, %565 : vector<8x128xf32>
    %569 = arith.mulf %558, %538 : vector<8x128xf32>
    %570 = arith.addf %568, %569 : vector<8x128xf32>
    %c0_195 = arith.constant 0 : index
    %c0_196 = arith.constant 0 : index
    %571 = vector.load %arg5[%c0_195, %c0_196] : memref<41x1xf32, #tpu.memory_space<vmem>>, vector<8x1xf32>
    %c8_197 = arith.constant 8 : index
    %c0_198 = arith.constant 0 : index
    %572 = vector.load %arg5[%c8_197, %c0_198] : memref<41x1xf32, #tpu.memory_space<vmem>>, vector<32x1xf32>
    %c40_199 = arith.constant 40 : index
    %c0_200 = arith.constant 0 : index
    %573 = vector.load %arg5[%c40_199, %c0_200] : memref<41x1xf32, #tpu.memory_space<vmem>>, vector<1x1xf32>
    %c0_201 = arith.constant 0 : index
    %c0_202 = arith.constant 0 : index
    %574 = vector.load %arg1[%c0_201, %c0_202] : memref<8x8xf32, #tpu.memory_space<vmem>>, vector<8x8xf32>
    %cst_203 = arith.constant dense<0.000000e+00> : vector<8x1xf32>
    %575 = tpu.matmul %574, %571, %cst_203 {dimension_numbers = #tpu.dot_dimension_numbers<[1], [0], [0], [1], [0, 0, 1, 1], [], []>} : vector<8x8xf32>, vector<8x1xf32>, vector<8x1xf32> -> vector<8x1xf32>
    %576 = vector.extract_strided_slice %570 {offsets = [0, 0], sizes = [8, 32], strides = [1, 1]} : vector<8x128xf32> to vector<8x32xf32>
    %cst_204 = arith.constant dense<0.000000e+00> : vector<8x1xf32>
    %577 = tpu.matmul %576, %572, %cst_204 {dimension_numbers = #tpu.dot_dimension_numbers<[1], [0], [0], [1], [0, 0, 1, 1], [], []>} : vector<8x32xf32>, vector<32x1xf32>, vector<8x1xf32> -> vector<8x1xf32>
    %578 = arith.addf %575, %577 : vector<8x1xf32>
    %579 = vector.broadcast %573 : vector<1x1xf32> to vector<8x1xf32>
    %580 = arith.addf %578, %579 : vector<8x1xf32>
    %581 = arith.negf %580 : vector<8x1xf32>
    %582 = math.exp %581 : vector<8x1xf32>
    %cst_205 = arith.constant 1.000000e+00 : f32
    %583 = vector.broadcast %cst_205 : f32 to vector<8x1xf32>
    %584 = arith.addf %583, %582 : vector<8x1xf32>
    %585 = arith.divf %583, %584 : vector<8x1xf32>
    %c0_206 = arith.constant 0 : index
    %c0_207 = arith.constant 0 : index
    %586 = vector.load %arg6[%c0_206, %c0_207] : memref<8x1xf32, #tpu.memory_space<vmem>>, vector<8x1xf32>
    tpu.vector_store %arg6[%c0_206, %c0_207], %585 {strides = array<i32>} : memref<8x1xf32, #tpu.memory_space<vmem>>, vector<8x1xf32>,
    return
  }
}

</mosaic_0001>

<llo_original>
// kernel: tpu_custom_call.1
$region0: #{tpu_custom_call.1}
  #allocation0 [shape = 'u32[]', space=smem, size = 0x4, offset = 0x4, fixed_abs, tag = 'smem constant byte address 0x4 - core index']
  #allocation1 [shape = 'u32[144,128]{1,0:T(1,128)}', space=vmem, size = 0x12000, scoped, tag = 'internal scratch']
  #allocation2 [shape = 'f32[64,384]{1,0:T(8,128)}', space=vmem, size = 0x18000, scoped, tag = 'scratch operand']
  %s0 = inlined_call_operand.vmem [shape: s32[64,1], index: 0, kind: input, shape index: {}]
  %s1 = inlined_call_operand.vmem [shape: f32[8,8], index: 1, kind: input, shape index: {}]
  %s2 = inlined_call_operand.hbm [shape: f32[50,384], index: 2, kind: input, shape index: {}]
  %s3 = inlined_call_operand.hbm [shape: f32[96,384], index: 3, kind: input, shape index: {}]
  %s4 = inlined_call_operand.vmem [shape: f32[24,384], index: 4, kind: input, shape index: {}]
  %s5 = inlined_call_operand.vmem [shape: f32[41,1], index: 5, kind: input, shape index: {}]
  %s6 = inlined_call_operand.vmem [shape: f32[8,1], index: 6, kind: output, shape index: {}]
  %s7 = sld [smem:[#allocation0]]
  $region42: #{tpu_custom_call.1} parent=0
    _
  %s9 = ssub.s32 1, %s7
  %s10 = scalar_select 0, %s9, %s7
  $region1: #{tpu_custom_call.1} parent=0
    #allocation3 [shape = 'u8[86016]{0}', space=vmem, size = 0x15000, scoped, tag = 'input window, operand 2, single buffered']
    #allocation4 [shape = 's32[1]{0}', space=sflag, size = 0x4, scoped, tag = 'scoped memory for tpu_custom_call.1']
    #allocation5 [shape = 'u8[147456]{0}', space=vmem, size = 0x24000, scoped, tag = 'input window, operand 3, single buffered']
    #allocation6 [shape = 's32[1]{0}', space=sflag, size = 0x4, scoped, tag = 'scoped memory for tpu_custom_call.1']
    %11 = vsyncpa [#allocation4], 0
    %12 = vsyncpa [#allocation6], 0
    // Predicated region
    $region2: #{tpu_custom_call.1} parent=1 // pred_check
      _
    $region3: #{tpu_custom_call.1} parent=1 // pred_check_branch
      %14 = sbr.rel (0) target = $region5
    $region4: #{tpu_custom_call.1} parent=1 // pred_region
      _
    $region5: #{tpu_custom_call.1} parent=1 // pred_fallthru
      _
    // Predicated region
    $region6: #{tpu_custom_call.1} parent=1 // pred_check
      _
    $region7: #{tpu_custom_call.1} parent=1 // pred_check_branch
      %16 = sbr.rel (0) target = $region9
    $region8: #{tpu_custom_call.1} parent=1 // pred_region
      _
    $region9: #{tpu_custom_call.1} parent=1 // pred_fallthru
      _
    // Predicated region
    $region10: #{tpu_custom_call.1} parent=1 // pred_check
      _
    $region11: #{tpu_custom_call.1} parent=1 // pred_check_branch
      %18 = sbr.rel (0) target = $region13
    $region12: #{tpu_custom_call.1} parent=1 // pred_region
      %s20 = ssub.s32 2688, 2688
      %21 = vsyncadd [#allocation4], %s20
      %s22 = sshll.u32 [#allocation3], 4
      %s23 = int_to_ptr.vmem [resolvable:$true] %s22
      %28 = dma.hbm_to_vmem [thread:$0]  %s2, 2688, %s23, [#allocation4], 384, 384, 24
    $region13: #{tpu_custom_call.1} parent=1 // pred_fallthru
      _
    // Predicated region
    $region14: #{tpu_custom_call.1} parent=1 // pred_check
      _
    $region15: #{tpu_custom_call.1} parent=1 // pred_check_branch
      %30 = sbr.rel (0) target = $region17
    $region16: #{tpu_custom_call.1} parent=1 // pred_region
      %s32 = ssub.s32 4608, 4608
      %33 = vsyncadd [#allocation6], %s32
      %s34 = sshll.u32 [#allocation5], 4
      %s35 = int_to_ptr.vmem [resolvable:$true] %s34
      %40 = dma.hbm_to_vmem [thread:$0]  %s3, 4608, %s35, [#allocation6], 384, 384, 24
    $region17: #{tpu_custom_call.1} parent=1 // pred_fallthru
      _
    // Predicated region
    $region18: #{tpu_custom_call.1} parent=1 // pred_check
      _
    $region19: #{tpu_custom_call.1} parent=1 // pred_check_branch
      %42 = sbr.rel (0) target = $region21
    $region20: #{tpu_custom_call.1} parent=1 // pred_region
      _
    $region21: #{tpu_custom_call.1} parent=1 // pred_fallthru
      _
    // Predicated region
    $region22: #{tpu_custom_call.1} parent=1 // pred_check
      _
    $region23: #{tpu_custom_call.1} parent=1 // pred_check_branch
      %44 = sbr.rel (0) target = $region25
    $region24: #{tpu_custom_call.1} parent=1 // pred_region
      _
    $region25: #{tpu_custom_call.1} parent=1 // pred_fallthru
      _
    // Predicated region
    $region26: #{tpu_custom_call.1} parent=1 // pred_check
      _
    $region27: #{tpu_custom_call.1} parent=1 // pred_check_branch
      %46 = sbr.rel (0) target = $region29
    $region28: #{tpu_custom_call.1} parent=1 // pred_region
      %47 = dma.done [#allocation4], 2688
    $region29: #{tpu_custom_call.1} parent=1 // pred_fallthru
      _
    // Predicated region
    $region30: #{tpu_custom_call.1} parent=1 // pred_check
      _
    $region31: #{tpu_custom_call.1} parent=1 // pred_check_branch
      %49 = sbr.rel (0) target = $region33
    $region32: #{tpu_custom_call.1} parent=1 // pred_region
      %50 = dma.done [#allocation6], 4608
    $region33: #{tpu_custom_call.1} parent=1 // pred_fallthru
      _
    %v51 = vld [vmem:[%s0] sm:$0xff]
    %v52 = vld [vmem:[%s0 + $0x8] sm:$0xff]
    %v53 = vld [vmem:[%s0 + $0x10] sm:$0xff]
    %v54 = vld [vmem:[%s0 + $0x18] sm:$0xff]
    %v55 = vld [vmem:[%s0 + $0x20] sm:$0xff]
    %v56 = vld [vmem:[%s0 + $0x28] sm:$0xff]
    %v57 = vld [vmem:[%s0 + $0x30] sm:$0xff]
    %v58 = vld [vmem:[%s0 + $0x38] sm:$0xff]
    %v59 = vlaneseq
    %v60 = vand.u32 %v59, 127
    %61 = vset.pattern.permute.xlu0 0
    %62 = vperm.xlu0 %61, %v51
    %v63 = vpop.permute.xlu0 %62
    %64 = vset.pattern.permute.xlu0 0
    %65 = vperm.xlu0 %64, %v52
    %v66 = vpop.permute.xlu0 %65
    %67 = vset.pattern.permute.xlu0 0
    %68 = vperm.xlu0 %67, %v53
    %v69 = vpop.permute.xlu0 %68
    %70 = vset.pattern.permute.xlu0 0
    %71 = vperm.xlu0 %70, %v54
    %v72 = vpop.permute.xlu0 %71
    %73 = vset.pattern.permute.xlu0 0
    %74 = vperm.xlu0 %73, %v55
    %v75 = vpop.permute.xlu0 %74
    %76 = vset.pattern.permute.xlu0 0
    %77 = vperm.xlu0 %76, %v56
    %v78 = vpop.permute.xlu0 %77
    %79 = vset.pattern.permute.xlu0 0
    %80 = vperm.xlu0 %79, %v57
    %v81 = vpop.permute.xlu0 %80
    %82 = vset.pattern.permute.xlu0 0
    %83 = vperm.xlu0 %82, %v58
    %v84 = vpop.permute.xlu0 %83
    %vm85 = vcmp.eq.s32.totalorder %v63, %v60
    %vm86 = vcmp.eq.s32.totalorder %v66, %v60
    %vm87 = vcmp.eq.s32.totalorder %v69, %v60
    %vm88 = vcmp.eq.s32.totalorder %v72, %v60
    %vm89 = vcmp.eq.s32.totalorder %v75, %v60
    %vm90 = vcmp.eq.s32.totalorder %v78, %v60
    %vm91 = vcmp.eq.s32.totalorder %v81, %v60
    %vm92 = vcmp.eq.s32.totalorder %v84, %v60
    %v93 = vsel %vm85, 1, 0
    %v94 = vsel %vm86, 1, 0
    %v95 = vsel %vm87, 1, 0
    %v96 = vsel %vm88, 1, 0
    %v97 = vsel %vm89, 1, 0
    %v98 = vsel %vm90, 1, 0
    %v99 = vsel %vm91, 1, 0
    %v100 = vsel %vm92, 1, 0
    %v101 = vcvt.s32.f32 %v93
    %v102 = vcvt.s32.f32 %v94
    %v103 = vcvt.s32.f32 %v95
    %v104 = vcvt.s32.f32 %v96
    %v105 = vcvt.s32.f32 %v97
    %v106 = vcvt.s32.f32 %v98
    %v107 = vcvt.s32.f32 %v99
    %v108 = vcvt.s32.f32 %v100
    %v109 = vld [vmem:[#allocation3] sm:$0xff]
    %v110 = vld [vmem:[#allocation3 + $0x8] sm:$0xff]
    %v111 = vld [vmem:[#allocation3 + $0x10] sm:$0xff]
    %v112 = vld [vmem:[#allocation3 + $0x18] sm:$0xff]
    %v113 = vld [vmem:[#allocation3 + $0x20] sm:$0xff]
    %v114 = vld [vmem:[#allocation3 + $0x28] sm:$0xff]
    %v115 = vld [vmem:[#allocation3 + $0x30] sm:$0xff]
    %v116 = vld [vmem:[#allocation3 + $0x38] sm:$0xff]
    %v117 = vld [vmem:[#allocation3 + $0x40] sm:$0xff]
    %v118 = vld [vmem:[#allocation3 + $0x48] sm:$0xff]
    %v119 = vld [vmem:[#allocation3 + $0x50] sm:$0xff]
    %v120 = vld [vmem:[#allocation3 + $0x58] sm:$0xff]
    %v121 = vld [vmem:[#allocation3 + $0x60] sm:$0xff]
    %v122 = vld [vmem:[#allocation3 + $0x68] sm:$0xff]
    %v123 = vld [vmem:[#allocation3 + $0x70] sm:$0xff]
    %v124 = vld [vmem:[#allocation3 + $0x78] sm:$0xff]
    %v125 = vld [vmem:[#allocation3 + $0x80] sm:$0xff]
    %v126 = vld [vmem:[#allocation3 + $0x88] sm:$0xff]
    %v127 = vld [vmem:[#allocation3 + $0x90] sm:$0x3]
    %v128 = vld [vmem:[#allocation3 + $0x98] sm:$0x3]
    %v129 = vld [vmem:[#allocation3 + $0xa0] sm:$0x3]
    %vm130 = vcmask 408576
    %v132 = vsel %vm130, %v101, 0
    %v135 = vsel %vm130, %v102, 0
    %v138 = vsel %vm130, %v103, 0
    %v141 = vsel %vm130, %v104, 0
    %v144 = vsel %vm130, %v105, 0
    %v147 = vsel %vm130, %v106, 0
    %v150 = vsel %vm130, %v107, 0
    %v153 = vsel %vm130, %v108, 0
    %vm155 = vcmask 1041408
    %v157 = vsel %vm155, %v127, 0
    %v160 = vsel %vm155, %v128, 0
    %v163 = vsel %vm155, %v129, 0
    %165 = vmatprep.subr.mxu0 0.0
    %166 = vmatpush1.msra.mxu0 0.0
    %167 = vmatprep.subr.mxu0 0.0
    %168 = vmatpush1.msra.mxu0 0.0
    %169 = vmatprep.subr.mxu0 0.0
    %170 = vmatpush1.msra.mxu0 0.0
    %171 = vmatprep.subr.mxu0 0.0
    %172 = vmatpush1.msra.mxu0 0.0
    %173 = vmatprep.subr.mxu0 0.0
    %174 = vmatpush1.msra.mxu0 0.0
    %175 = vmatprep.subr.mxu0 0.0
    %176 = vmatpush1.msra.mxu0 0.0
    %177 = vmatprep.subr.mxu0 0.0
    %178 = vmatpush1.msra.mxu0 0.0
    %179 = vmatprep.subr.mxu0 0.0
    %180 = vmatpush1.msra.mxu0 0.0
    %181 = vmatprep.subr.mxu0 0.0
    %182 = vmatpush1.msra.mxu0 0.0
    %183 = vmatprep.subr.mxu0 %v160
    %184 = vmatpush1.msra.mxu0 %v157
    %185 = vmatprep.subr.mxu0 %v125
    %186 = vmatpush1.msra.mxu0 %v124
    %187 = vmatprep.subr.mxu0 %v122
    %188 = vmatpush1.msra.mxu0 %v121
    %189 = vmatprep.subr.mxu0 %v119
    %190 = vmatpush1.msra.mxu0 %v118
    %191 = vmatprep.subr.mxu0 %v116
    %192 = vmatpush1.msra.mxu0 %v115
    %193 = vmatprep.subr.mxu0 %v113
    %194 = vmatpush1.msra.mxu0 %v112
    %195 = vmatprep.subr.mxu0 %v110
    %196 = vmatpush1.msra.mxu0 %v109
    %197 = vmatprep.subr.mxu0 0.0
    %198 = vmatpush2.msra.mxu0 0.0
    %199 = vmatprep.subr.mxu0 0.0
    %200 = vmatpush2.msra.mxu0 0.0
    %201 = vmatprep.subr.mxu0 0.0
    %202 = vmatpush2.msra.mxu0 0.0
    %203 = vmatprep.subr.mxu0 0.0
    %204 = vmatpush2.msra.mxu0 0.0
    %205 = vmatprep.subr.mxu0 0.0
    %206 = vmatpush2.msra.mxu0 0.0
    %207 = vmatprep.subr.mxu0 0.0
    %208 = vmatpush2.msra.mxu0 0.0
    %209 = vmatprep.subr.mxu0 0.0
    %210 = vmatpush2.msra.mxu0 0.0
    %211 = vmatprep.subr.mxu0 0.0
    %212 = vmatpush2.msra.mxu0 0.0
    %213 = vmatprep.subr.mxu0 0.0
    %214 = vmatpush2.msra.mxu0 0.0
    %215 = vmatprep.subr.mxu0 0.0
    %216 = vmatpush2.msra.mxu0 0.0
    %217 = vmatprep.subr.mxu0 0.0
    %218 = vmatpush2.msra.mxu0 0.0
    %219 = vmatprep.subr.mxu0 0.0
    %220 = vmatpush2.msra.mxu0 0.0
    %221 = vmatprep.subr.mxu0 0.0
    %222 = vmatpush2.msra.mxu0 0.0
    %223 = vmatprep.subr.mxu0 0.0
    %224 = vmatpush2.msra.mxu0 0.0
    %225 = vmatprep.subr.mxu0 0.0
    %226 = vmatpush2.msra.mxu0 0.0
    %227 = vmatprep.subr.mxu0 0.0
    %228 = vmatpush2.msra.mxu0 0.0
    %229 = vmatprep.mubr.f32.mxu0 0.0
    %230 = vmatmul.mubr.f32.gmra.mxu0 %v132
    %v231 = vpop.f32.mrf.mxu0
    %v232 = vadd.f32 0.0, %v231
    %v233 = vpop.f32.mrf.mxu0
    %v234 = vadd.f32 0.0, %v233
    %235 = vmatprep.mubr.f32.mxu0 0.0
    %236 = vmatmul.mubr.f32.gmra.mxu0 %v135
    %v237 = vpop.f32.mrf.mxu0
    %v238 = vadd.f32 0.0, %v237
    %v239 = vpop.f32.mrf.mxu0
    %v240 = vadd.f32 0.0, %v239
    %241 = vmatprep.mubr.f32.mxu0 0.0
    %242 = vmatmul.mubr.f32.gmra.mxu0 %v138
    %v243 = vpop.f32.mrf.mxu0
    %v244 = vadd.f32 0.0, %v243
    %v245 = vpop.f32.mrf.mxu0
    %v246 = vadd.f32 0.0, %v245
    %247 = vmatprep.mubr.f32.mxu0 0.0
    %248 = vmatmul.mubr.f32.gmra.mxu0 %v141
    %v249 = vpop.f32.mrf.mxu0
    %v250 = vadd.f32 0.0, %v249
    %v251 = vpop.f32.mrf.mxu0
    %v252 = vadd.f32 0.0, %v251
    %253 = vmatprep.mubr.f32.mxu0 0.0
    %254 = vmatmul.mubr.f32.gmra.mxu0 %v144
    %v255 = vpop.f32.mrf.mxu0
    %v256 = vadd.f32 0.0, %v255
    %v257 = vpop.f32.mrf.mxu0
    %v258 = vadd.f32 0.0, %v257
    %259 = vmatprep.mubr.f32.mxu0 0.0
    %260 = vmatmul.mubr.f32.gmra.mxu0 %v147
    %v261 = vpop.f32.mrf.mxu0
    %v262 = vadd.f32 0.0, %v261
    %v263 = vpop.f32.mrf.mxu0
    %v264 = vadd.f32 0.0, %v263
    %265 = vmatprep.mubr.f32.mxu0 0.0
    %266 = vmatmul.mubr.f32.gmra.mxu0 %v150
    %v267 = vpop.f32.mrf.mxu0
    %v268 = vadd.f32 0.0, %v267
    %v269 = vpop.f32.mrf.mxu0
    %v270 = vadd.f32 0.0, %v269
    %271 = vmatprep.mubr.f32.mxu0 0.0
    %272 = vmatmul.mubr.f32.gmra.mxu0 %v153
    %v273 = vpop.f32.mrf.mxu0
    %v274 = vadd.f32 0.0, %v273
    %v275 = vpop.f32.mrf.mxu0
    %v276 = vadd.f32 0.0, %v275
    %277 = vdwg.mxu0
    %278 = vmatprep.subr.mxu0 0.0
    %279 = vmatpush1.msra.mxu0 0.0
    %280 = vmatprep.subr.mxu0 0.0
    %281 = vmatpush1.msra.mxu0 0.0
    %282 = vmatprep.subr.mxu0 0.0
    %283 = vmatpush1.msra.mxu0 0.0
    %284 = vmatprep.subr.mxu0 0.0
    %285 = vmatpush1.msra.mxu0 0.0
    %286 = vmatprep.subr.mxu0 0.0
    %287 = vmatpush1.msra.mxu0 0.0
    %288 = vmatprep.subr.mxu0 0.0
    %289 = vmatpush1.msra.mxu0 0.0
    %290 = vmatprep.subr.mxu0 0.0
    %291 = vmatpush1.msra.mxu0 0.0
    %292 = vmatprep.subr.mxu0 0.0
    %293 = vmatpush1.msra.mxu0 0.0
    %294 = vmatprep.subr.mxu0 0.0
    %295 = vmatpush1.msra.mxu0 0.0
    %296 = vmatprep.subr.mxu0 0.0
    %297 = vmatpush1.msra.mxu0 %v163
    %298 = vmatprep.subr.mxu0 0.0
    %299 = vmatpush1.msra.mxu0 %v126
    %300 = vmatprep.subr.mxu0 0.0
    %301 = vmatpush1.msra.mxu0 %v123
    %302 = vmatprep.subr.mxu0 0.0
    %303 = vmatpush1.msra.mxu0 %v120
    %304 = vmatprep.subr.mxu0 0.0
    %305 = vmatpush1.msra.mxu0 %v117
    %306 = vmatprep.subr.mxu0 0.0
    %307 = vmatpush1.msra.mxu0 %v114
    %308 = vmatprep.subr.mxu0 0.0
    %309 = vmatpush1.msra.mxu0 %v111
    %310 = vmatprep.subr.mxu0 0.0
    %311 = vmatpush2.msra.mxu0 0.0
    %312 = vmatprep.subr.mxu0 0.0
    %313 = vmatpush2.msra.mxu0 0.0
    %314 = vmatprep.subr.mxu0 0.0
    %315 = vmatpush2.msra.mxu0 0.0
    %316 = vmatprep.subr.mxu0 0.0
    %317 = vmatpush2.msra.mxu0 0.0
    %318 = vmatprep.subr.mxu0 0.0
    %319 = vmatpush2.msra.mxu0 0.0
    %320 = vmatprep.subr.mxu0 0.0
    %321 = vmatpush2.msra.mxu0 0.0
    %322 = vmatprep.subr.mxu0 0.0
    %323 = vmatpush2.msra.mxu0 0.0
    %324 = vmatprep.subr.mxu0 0.0
    %325 = vmatpush2.msra.mxu0 0.0
    %326 = vmatprep.subr.mxu0 0.0
    %327 = vmatpush2.msra.mxu0 0.0
    %328 = vmatprep.subr.mxu0 0.0
    %329 = vmatpush2.msra.mxu0 0.0
    %330 = vmatprep.subr.mxu0 0.0
    %331 = vmatpush2.msra.mxu0 0.0
    %332 = vmatprep.subr.mxu0 0.0
    %333 = vmatpush2.msra.mxu0 0.0
    %334 = vmatprep.subr.mxu0 0.0
    %335 = vmatpush2.msra.mxu0 0.0
    %336 = vmatprep.subr.mxu0 0.0
    %337 = vmatpush2.msra.mxu0 0.0
    %338 = vmatprep.subr.mxu0 0.0
    %339 = vmatpush2.msra.mxu0 0.0
    %340 = vmatprep.subr.mxu0 0.0
    %341 = vmatpush2.msra.mxu0 0.0
    %342 = vmatprep.mubr.f32.mxu0 0.0
    %343 = vmatmul.mubr.f32.gmra.mxu0 %v132
    %v344 = vpop.f32.mrf.mxu0
    %v345 = vadd.f32 0.0, %v344
    %v346 = vpop.f32.mrf.mxu0
    %347 = vmatprep.mubr.f32.mxu0 0.0
    %348 = vmatmul.mubr.f32.gmra.mxu0 %v135
    %v349 = vpop.f32.mrf.mxu0
    %v350 = vadd.f32 0.0, %v349
    %v351 = vpop.f32.mrf.mxu0
    %352 = vmatprep.mubr.f32.mxu0 0.0
    %353 = vmatmul.mubr.f32.gmra.mxu0 %v138
    %v354 = vpop.f32.mrf.mxu0
    %v355 = vadd.f32 0.0, %v354
    %v356 = vpop.f32.mrf.mxu0
    %357 = vmatprep.mubr.f32.mxu0 0.0
    %358 = vmatmul.mubr.f32.gmra.mxu0 %v141
    %v359 = vpop.f32.mrf.mxu0
    %v360 = vadd.f32 0.0, %v359
    %v361 = vpop.f32.mrf.mxu0
    %362 = vmatprep.mubr.f32.mxu0 0.0
    %363 = vmatmul.mubr.f32.gmra.mxu0 %v144
    %v364 = vpop.f32.mrf.mxu0
    %v365 = vadd.f32 0.0, %v364
    %v366 = vpop.f32.mrf.mxu0
    %367 = vmatprep.mubr.f32.mxu0 0.0
    %368 = vmatmul.mubr.f32.gmra.mxu0 %v147
    %v369 = vpop.f32.mrf.mxu0
    %v370 = vadd.f32 0.0, %v369
    %v371 = vpop.f32.mrf.mxu0
    %372 = vmatprep.mubr.f32.mxu0 0.0
    %373 = vmatmul.mubr.f32.gmra.mxu0 %v150
    %v374 = vpop.f32.mrf.mxu0
    %v375 = vadd.f32 0.0, %v374
    %v376 = vpop.f32.mrf.mxu0
    %377 = vmatprep.mubr.f32.mxu0 0.0
    %378 = vmatmul.mubr.f32.gmra.mxu0 %v153
    %v379 = vpop.f32.mrf.mxu0
    %v380 = vadd.f32 0.0, %v379
    %v381 = vpop.f32.mrf.mxu0
    %382 = vdwg.mxu0
    %383 = vst [vmem:[#allocation2] sm:$0xff] %v232
    %384 = vst [vmem:[#allocation2 + $0x8] sm:$0xff] %v234
    %385 = vst [vmem:[#allocation2 + $0x10] sm:$0xff] %v345
    %386 = vst [vmem:[#allocation2 + $0x18] sm:$0xff] %v238
    %387 = vst [vmem:[#allocation2 + $0x20] sm:$0xff] %v240
    %388 = vst [vmem:[#allocation2 + $0x28] sm:$0xff] %v350
    %389 = vst [vmem:[#allocation2 + $0x30] sm:$0xff] %v244
    %390 = vst [vmem:[#allocation2 + $0x38] sm:$0xff] %v246
    %391 = vst [vmem:[#allocation2 + $0x40] sm:$0xff] %v355
    %392 = vst [vmem:[#allocation2 + $0x48] sm:$0xff] %v250
    %393 = vst [vmem:[#allocation2 + $0x50] sm:$0xff] %v252
    %394 = vst [vmem:[#allocation2 + $0x58] sm:$0xff] %v360
    %395 = vst [vmem:[#allocation2 + $0x60] sm:$0xff] %v256
    %396 = vst [vmem:[#allocation2 + $0x68] sm:$0xff] %v258
    %397 = vst [vmem:[#allocation2 + $0x70] sm:$0xff] %v365
    %398 = vst [vmem:[#allocation2 + $0x78] sm:$0xff] %v262
    %399 = vst [vmem:[#allocation2 + $0x80] sm:$0xff] %v264
    %400 = vst [vmem:[#allocation2 + $0x88] sm:$0xff] %v370
    %401 = vst [vmem:[#allocation2 + $0x90] sm:$0xff] %v268
    %402 = vst [vmem:[#allocation2 + $0x98] sm:$0xff] %v270
    %403 = vst [vmem:[#allocation2 + $0xa0] sm:$0xff] %v375
    %404 = vst [vmem:[#allocation2 + $0xa8] sm:$0xff] %v274
    %405 = vst [vmem:[#allocation2 + $0xb0] sm:$0xff] %v276
    %406 = vst [vmem:[#allocation2 + $0xb8] sm:$0xff] %v380
    %v407 = vld [vmem:[#allocation5] sm:$0xff]
    %v408 = vld [vmem:[#allocation5 + $0x8] sm:$0xff]
    %v409 = vld [vmem:[#allocation5 + $0x10] sm:$0xff]
    %v410 = vld [vmem:[#allocation5 + $0x18] sm:$0xff]
    %v411 = vld [vmem:[#allocation5 + $0x20] sm:$0xff]
    %v412 = vld [vmem:[#allocation5 + $0x28] sm:$0xff]
    %v413 = vld [vmem:[#allocation5 + $0x30] sm:$0xff]
    %v414 = vld [vmem:[#allocation5 + $0x38] sm:$0xff]
    %v415 = vld [vmem:[#allocation5 + $0x40] sm:$0xff]
    %v416 = vld [vmem:[#allocation5 + $0x48] sm:$0xff]
    %v417 = vld [vmem:[#allocation5 + $0x50] sm:$0xff]
    %v418 = vld [vmem:[#allocation5 + $0x58] sm:$0xff]
    %s419 = scalar_lea.vmem %s4, 24
    %v420 = vld [vmem:[%s419] ss:$8 sm:$0x7]
    %v421 = vld [vmem:[#allocation5 + $0xc0] sm:$0xff]
    %v422 = vld [vmem:[#allocation5 + $0xc8] sm:$0xff]
    %v423 = vld [vmem:[#allocation5 + $0xd0] sm:$0xff]
    %v424 = vld [vmem:[#allocation5 + $0xd8] sm:$0xff]
    %v425 = vld [vmem:[#allocation5 + $0xe0] sm:$0xff]
    %v426 = vld [vmem:[#allocation5 + $0xe8] sm:$0xff]
    %v427 = vld [vmem:[#allocation5 + $0xf0] sm:$0xff]
    %v428 = vld [vmem:[#allocation5 + $0xf8] sm:$0xff]
    %v429 = vld [vmem:[#allocation5 + $0x100] sm:$0xff]
    %v430 = vld [vmem:[#allocation5 + $0x108] sm:$0xff]
    %v431 = vld [vmem:[#allocation5 + $0x110] sm:$0xff]
    %v432 = vld [vmem:[#allocation5 + $0x118] sm:$0xff]
    %v433 = vld [vmem:[%s4] ss:$8 sm:$0x7]
    %v434 = vld [vmem:[#allocation2] sm:$0xff]
    %v435 = vld [vmem:[#allocation2 + $0x8] sm:$0xff]
    %v436 = vld [vmem:[#allocation2 + $0x10] sm:$0xff]
    %vm437 = vcmask 261120
    %v439 = vsel %vm437, 0.0, 0
    %441 = vmatprep.subr.mxu0 0.0
    %442 = vmatpush1.msra.mxu0 0.0
    %443 = vmatprep.subr.mxu0 0.0
    %444 = vmatpush1.msra.mxu0 0.0
    %445 = vmatprep.subr.mxu0 0.0
    %446 = vmatpush1.msra.mxu0 0.0
    %447 = vmatprep.subr.mxu0 0.0
    %448 = vmatpush1.msra.mxu0 0.0
    %449 = vmatprep.subr.mxu0 0.0
    %450 = vmatpush1.msra.mxu0 0.0
    %451 = vmatprep.subr.mxu0 0.0
    %452 = vmatpush1.msra.mxu0 0.0
    %453 = vmatprep.subr.mxu0 0.0
    %454 = vmatpush1.msra.mxu0 0.0
    %455 = vmatprep.subr.mxu0 0.0
    %456 = vmatpush1.msra.mxu0 0.0
    %457 = vmatprep.subr.mxu0 0.0
    %458 = vmatpush1.msra.mxu0 0.0
    %459 = vmatprep.subr.mxu0 0.0
    %460 = vmatpush1.msra.mxu0 0.0
    %461 = vmatprep.subr.mxu0 0.0
    %462 = vmatpush1.msra.mxu0 0.0
    %463 = vmatprep.subr.mxu0 0.0
    %464 = vmatpush1.msra.mxu0 0.0
    %465 = vmatprep.subr.mxu0 %v417
    %466 = vmatpush1.msra.mxu0 %v416
    %467 = vmatprep.subr.mxu0 %v414
    %468 = vmatpush1.msra.mxu0 %v413
    %469 = vmatprep.subr.mxu0 %v411
    %470 = vmatpush1.msra.mxu0 %v410
    %471 = vmatprep.subr.mxu0 %v408
    %472 = vmatpush1.msra.mxu0 %v407
    %473 = vmatprep.subr.mxu0 0.0
    %474 = vmatpush2.msra.mxu0 0.0
    %475 = vmatprep.subr.mxu0 0.0
    %476 = vmatpush2.msra.mxu0 0.0
    %477 = vmatprep.subr.mxu0 0.0
    %478 = vmatpush2.msra.mxu0 0.0
    %479 = vmatprep.subr.mxu0 0.0
    %480 = vmatpush2.msra.mxu0 0.0
    %481 = vmatprep.subr.mxu0 0.0
    %482 = vmatpush2.msra.mxu0 0.0
    %483 = vmatprep.subr.mxu0 0.0
    %484 = vmatpush2.msra.mxu0 0.0
    %485 = vmatprep.subr.mxu0 0.0
    %486 = vmatpush2.msra.mxu0 0.0
    %487 = vmatprep.subr.mxu0 0.0
    %488 = vmatpush2.msra.mxu0 0.0
    %489 = vmatprep.subr.mxu0 0.0
    %490 = vmatpush2.msra.mxu0 0.0
    %491 = vmatprep.subr.mxu0 0.0
    %492 = vmatpush2.msra.mxu0 0.0
    %493 = vmatprep.subr.mxu0 0.0
    %494 = vmatpush2.msra.mxu0 0.0
    %495 = vmatprep.subr.mxu0 0.0
    %496 = vmatpush2.msra.mxu0 0.0
    %497 = vmatprep.subr.mxu0 0.0
    %498 = vmatpush2.msra.mxu0 0.0
    %499 = vmatprep.subr.mxu0 0.0
    %500 = vmatpush2.msra.mxu0 0.0
    %501 = vmatprep.subr.mxu0 0.0
    %502 = vmatpush2.msra.mxu0 0.0
    %503 = vmatprep.subr.mxu0 0.0
    %504 = vmatpush2.msra.mxu0 0.0
    %505 = vmatprep.mubr.f32.mxu0 0.0
    %506 = vmatmul.mubr.f32.gmra.mxu0 %v439
    %v507 = vpop.f32.mrf.mxu0
    %v508 = vadd.f32 0.0, %v507
    %v509 = vpop.f32.mrf.mxu0
    %v510 = vadd.f32 0.0, %v509
    %511 = vdwg.mxu0
    %512 = vmatprep.subr.mxu0 0.0
    %513 = vmatpush1.msra.mxu0 0.0
    %514 = vmatprep.subr.mxu0 0.0
    %515 = vmatpush1.msra.mxu0 0.0
    %516 = vmatprep.subr.mxu0 0.0
    %517 = vmatpush1.msra.mxu0 0.0
    %518 = vmatprep.subr.mxu0 0.0
    %519 = vmatpush1.msra.mxu0 0.0
    %520 = vmatprep.subr.mxu0 0.0
    %521 = vmatpush1.msra.mxu0 0.0
    %522 = vmatprep.subr.mxu0 0.0
    %523 = vmatpush1.msra.mxu0 0.0
    %524 = vmatprep.subr.mxu0 0.0
    %525 = vmatpush1.msra.mxu0 0.0
    %526 = vmatprep.subr.mxu0 0.0
    %527 = vmatpush1.msra.mxu0 0.0
    %528 = vmatprep.subr.mxu0 0.0
    %529 = vmatpush1.msra.mxu0 0.0
    %530 = vmatprep.subr.mxu0 0.0
    %531 = vmatpush1.msra.mxu0 0.0
    %532 = vmatprep.subr.mxu0 0.0
    %533 = vmatpush1.msra.mxu0 0.0
    %534 = vmatprep.subr.mxu0 0.0
    %535 = vmatpush1.msra.mxu0 0.0
    %536 = vmatprep.subr.mxu0 0.0
    %537 = vmatpush1.msra.mxu0 %v418
    %538 = vmatprep.subr.mxu0 0.0
    %539 = vmatpush1.msra.mxu0 %v415
    %540 = vmatprep.subr.mxu0 0.0
    %541 = vmatpush1.msra.mxu0 %v412
    %542 = vmatprep.subr.mxu0 0.0
    %543 = vmatpush1.msra.mxu0 %v409
    %544 = vmatprep.subr.mxu0 0.0
    %545 = vmatpush2.msra.mxu0 0.0
    %546 = vmatprep.subr.mxu0 0.0
    %547 = vmatpush2.msra.mxu0 0.0
    %548 = vmatprep.subr.mxu0 0.0
    %549 = vmatpush2.msra.mxu0 0.0
    %550 = vmatprep.subr.mxu0 0.0
    %551 = vmatpush2.msra.mxu0 0.0
    %552 = vmatprep.subr.mxu0 0.0
    %553 = vmatpush2.msra.mxu0 0.0
    %554 = vmatprep.subr.mxu0 0.0
    %555 = vmatpush2.msra.mxu0 0.0
    %556 = vmatprep.subr.mxu0 0.0
    %557 = vmatpush2.msra.mxu0 0.0
    %558 = vmatprep.subr.mxu0 0.0
    %559 = vmatpush2.msra.mxu0 0.0
    %560 = vmatprep.subr.mxu0 0.0
    %561 = vmatpush2.msra.mxu0 0.0
    %562 = vmatprep.subr.mxu0 0.0
    %563 = vmatpush2.msra.mxu0 0.0
    %564 = vmatprep.subr.mxu0 0.0
    %565 = vmatpush2.msra.mxu0 0.0
    %566 = vmatprep.subr.mxu0 0.0
    %567 = vmatpush2.msra.mxu0 0.0
    %568 = vmatprep.subr.mxu0 0.0
    %569 = vmatpush2.msra.mxu0 0.0
    %570 = vmatprep.subr.mxu0 0.0
    %571 = vmatpush2.msra.mxu0 0.0
    %572 = vmatprep.subr.mxu0 0.0
    %573 = vmatpush2.msra.mxu0 0.0
    %574 = vmatprep.subr.mxu0 0.0
    %575 = vmatpush2.msra.mxu0 0.0
    %576 = vmatprep.mubr.f32.mxu0 0.0
    %577 = vmatmul.mubr.f32.gmra.mxu0 %v439
    %v578 = vpop.f32.mrf.mxu0
    %v579 = vadd.f32 0.0, %v578
    %v580 = vpop.f32.mrf.mxu0
    %581 = vdwg.mxu0
    %v582 = vadd.f32 %v434, %v508
    %v583 = vadd.f32 %v435, %v510
    %v584 = vmul.f32 %v582, 0.5
    %v585 = vtanh.pop %v584
    %v586 = vmul.f32 %v585, 0.5
    %v587 = vadd.f32 %v586, 0.5
    %v588 = vmul.f32 %v583, 0.5
    %v589 = vtanh.pop %v588
    %v590 = vmul.f32 %v589, 0.5
    %v591 = vadd.f32 %v590, 0.5
    %v593 = vlaneseq
    %v594 = vshrl.u32 %v593, 7
    %v595 = vsub.s32 0, %v594
    %v596 = vrot.slane %v420, %v595
    %v598 = vadd.f32 %v579, %v596
    %v599 = vmul.f32 %v587, %v598
    %v600 = vadd.f32 %v436, %v599
    %v601 = vtanh.pop %v600
    %v602 = vsub.f32 1.0, %v591
    %v603 = vmul.f32 %v602, %v601
    %v604 = vmul.f32 %v591, 0.0
    %v605 = vadd.f32 %v603, %v604
    %v607 = vlaneseq
    %v608 = vshrl.u32 %v607, 7
    %v609 = vsub.s32 0, %v608
    %v610 = vrot.slane %v433, %v609
    %v611 = vlaneseq
    %v612 = vshrl.u32 %v611, 7
    %v613 = vsub.s32 1, %v612
    %v614 = vrot.slane %v433, %v613
    %v615 = vlaneseq
    %v616 = vshrl.u32 %v615, 7
    %v617 = vsub.s32 2, %v616
    %v618 = vrot.slane %v433, %v617
    %v623 = vsel %vm437, %v605, 0
    %625 = vmatprep.subr.mxu0 0.0
    %626 = vmatpush1.msra.mxu0 0.0
    %627 = vmatprep.subr.mxu0 0.0
    %628 = vmatpush1.msra.mxu0 0.0
    %629 = vmatprep.subr.mxu0 0.0
    %630 = vmatpush1.msra.mxu0 0.0
    %631 = vmatprep.subr.mxu0 0.0
    %632 = vmatpush1.msra.mxu0 0.0
    %633 = vmatprep.subr.mxu0 0.0
    %634 = vmatpush1.msra.mxu0 0.0
    %635 = vmatprep.subr.mxu0 0.0
    %636 = vmatpush1.msra.mxu0 0.0
    %637 = vmatprep.subr.mxu0 0.0
    %638 = vmatpush1.msra.mxu0 0.0
    %639 = vmatprep.subr.mxu0 0.0
    %640 = vmatpush1.msra.mxu0 0.0
    %641 = vmatprep.subr.mxu0 0.0
    %642 = vmatpush1.msra.mxu0 0.0
    %643 = vmatprep.subr.mxu0 0.0
    %644 = vmatpush1.msra.mxu0 0.0
    %645 = vmatprep.subr.mxu0 0.0
    %646 = vmatpush1.msra.mxu0 0.0
    %647 = vmatprep.subr.mxu0 0.0
    %648 = vmatpush1.msra.mxu0 0.0
    %649 = vmatprep.subr.mxu0 %v431
    %650 = vmatpush1.msra.mxu0 %v430
    %651 = vmatprep.subr.mxu0 %v428
    %652 = vmatpush1.msra.mxu0 %v427
    %653 = vmatprep.subr.mxu0 %v425
    %654 = vmatpush1.msra.mxu0 %v424
    %655 = vmatprep.subr.mxu0 %v422
    %656 = vmatpush1.msra.mxu0 %v421
    %657 = vmatprep.subr.mxu0 0.0
    %658 = vmatpush2.msra.mxu0 0.0
    %659 = vmatprep.subr.mxu0 0.0
    %660 = vmatpush2.msra.mxu0 0.0
    %661 = vmatprep.subr.mxu0 0.0
    %662 = vmatpush2.msra.mxu0 0.0
    %663 = vmatprep.subr.mxu0 0.0
    %664 = vmatpush2.msra.mxu0 0.0
    %665 = vmatprep.subr.mxu0 0.0
    %666 = vmatpush2.msra.mxu0 0.0
    %667 = vmatprep.subr.mxu0 0.0
    %668 = vmatpush2.msra.mxu0 0.0
    %669 = vmatprep.subr.mxu0 0.0
    %670 = vmatpush2.msra.mxu0 0.0
    %671 = vmatprep.subr.mxu0 0.0
    %672 = vmatpush2.msra.mxu0 0.0
    %673 = vmatprep.subr.mxu0 0.0
    %674 = vmatpush2.msra.mxu0 0.0
    %675 = vmatprep.subr.mxu0 0.0
    %676 = vmatpush2.msra.mxu0 0.0
    %677 = vmatprep.subr.mxu0 0.0
    %678 = vmatpush2.msra.mxu0 0.0
    %679 = vmatprep.subr.mxu0 0.0
    %680 = vmatpush2.msra.mxu0 0.0
    %681 = vmatprep.subr.mxu0 0.0
    %682 = vmatpush2.msra.mxu0 0.0
    %683 = vmatprep.subr.mxu0 0.0
    %684 = vmatpush2.msra.mxu0 0.0
    %685 = vmatprep.subr.mxu0 0.0
    %686 = vmatpush2.msra.mxu0 0.0
    %687 = vmatprep.subr.mxu0 0.0
    %688 = vmatpush2.msra.mxu0 0.0
    %689 = vmatprep.mubr.f32.mxu0 0.0
    %690 = vmatmul.mubr.f32.gmra.mxu0 %v623
    %v691 = vpop.f32.mrf.mxu0
    %v692 = vadd.f32 %v610, %v691
    %v693 = vpop.f32.mrf.mxu0
    %v694 = vadd.f32 %v614, %v693
    %695 = vdwg.mxu0
    %696 = vmatprep.subr.mxu0 0.0
    %697 = vmatpush1.msra.mxu0 0.0
    %698 = vmatprep.subr.mxu0 0.0
    %699 = vmatpush1.msra.mxu0 0.0
    %700 = vmatprep.subr.mxu0 0.0
    %701 = vmatpush1.msra.mxu0 0.0
    %702 = vmatprep.subr.mxu0 0.0
    %703 = vmatpush1.msra.mxu0 0.0
    %704 = vmatprep.subr.mxu0 0.0
    %705 = vmatpush1.msra.mxu0 0.0
    %706 = vmatprep.subr.mxu0 0.0
    %707 = vmatpush1.msra.mxu0 0.0
    %708 = vmatprep.subr.mxu0 0.0
    %709 = vmatpush1.msra.mxu0 0.0
    %710 = vmatprep.subr.mxu0 0.0
    %711 = vmatpush1.msra.mxu0 0.0
    %712 = vmatprep.subr.mxu0 0.0
    %713 = vmatpush1.msra.mxu0 0.0
    %714 = vmatprep.subr.mxu0 0.0
    %715 = vmatpush1.msra.mxu0 0.0
    %716 = vmatprep.subr.mxu0 0.0
    %717 = vmatpush1.msra.mxu0 0.0
    %718 = vmatprep.subr.mxu0 0.0
    %719 = vmatpush1.msra.mxu0 0.0
    %720 = vmatprep.subr.mxu0 0.0
    %721 = vmatpush1.msra.mxu0 %v432
    %722 = vmatprep.subr.mxu0 0.0
    %723 = vmatpush1.msra.mxu0 %v429
    %724 = vmatprep.subr.mxu0 0.0
    %725 = vmatpush1.msra.mxu0 %v426
    %726 = vmatprep.subr.mxu0 0.0
    %727 = vmatpush1.msra.mxu0 %v423
    %728 = vmatprep.subr.mxu0 0.0
    %729 = vmatpush2.msra.mxu0 0.0
    %730 = vmatprep.subr.mxu0 0.0
    %731 = vmatpush2.msra.mxu0 0.0
    %732 = vmatprep.subr.mxu0 0.0
    %733 = vmatpush2.msra.mxu0 0.0
    %734 = vmatprep.subr.mxu0 0.0
    %735 = vmatpush2.msra.mxu0 0.0
    %736 = vmatprep.subr.mxu0 0.0
    %737 = vmatpush2.msra.mxu0 0.0
    %738 = vmatprep.subr.mxu0 0.0
    %739 = vmatpush2.msra.mxu0 0.0
    %740 = vmatprep.subr.mxu0 0.0
    %741 = vmatpush2.msra.mxu0 0.0
    %742 = vmatprep.subr.mxu0 0.0
    %743 = vmatpush2.msra.mxu0 0.0
    %744 = vmatprep.subr.mxu0 0.0
    %745 = vmatpush2.msra.mxu0 0.0
    %746 = vmatprep.subr.mxu0 0.0
    %747 = vmatpush2.msra.mxu0 0.0
    %748 = vmatprep.subr.mxu0 0.0
    %749 = vmatpush2.msra.mxu0 0.0
    %750 = vmatprep.subr.mxu0 0.0
    %751 = vmatpush2.msra.mxu0 0.0
    %752 = vmatprep.subr.mxu0 0.0
    %753 = vmatpush2.msra.mxu0 0.0
    %754 = vmatprep.subr.mxu0 0.0
    %755 = vmatpush2.msra.mxu0 0.0
    %756 = vmatprep.subr.mxu0 0.0
    %757 = vmatpush2.msra.mxu0 0.0
    %758 = vmatprep.subr.mxu0 0.0
    %759 = vmatpush2.msra.mxu0 0.0
    %760 = vmatprep.mubr.f32.mxu0 0.0
    %761 = vmatmul.mubr.f32.gmra.mxu0 %v623
    %v762 = vpop.f32.mrf.mxu0
    %v763 = vadd.f32 %v618, %v762
    %v764 = vpop.f32.mrf.mxu0
    %765 = vdwg.mxu0
    %766 = vst [vmem:[#allocation2] sm:$0xff] %v692
    %767 = vst [vmem:[#allocation2 + $0x8] sm:$0xff] %v694
    %768 = vst [vmem:[#allocation2 + $0x10] sm:$0xff] %v763
    %v769 = vld [vmem:[#allocation2 + $0x18] sm:$0xff]
    %v770 = vld [vmem:[#allocation2 + $0x20] sm:$0xff]
    %v771 = vld [vmem:[#allocation2 + $0x28] sm:$0xff]
    %772 = vmatprep.subr.mxu0 0.0
    %773 = vmatpush1.msra.mxu0 0.0
    %774 = vmatprep.subr.mxu0 0.0
    %775 = vmatpush1.msra.mxu0 0.0
    %776 = vmatprep.subr.mxu0 0.0
    %777 = vmatpush1.msra.mxu0 0.0
    %778 = vmatprep.subr.mxu0 0.0
    %779 = vmatpush1.msra.mxu0 0.0
    %780 = vmatprep.subr.mxu0 0.0
    %781 = vmatpush1.msra.mxu0 0.0
    %782 = vmatprep.subr.mxu0 0.0
    %783 = vmatpush1.msra.mxu0 0.0
    %784 = vmatprep.subr.mxu0 0.0
    %785 = vmatpush1.msra.mxu0 0.0
    %786 = vmatprep.subr.mxu0 0.0
    %787 = vmatpush1.msra.mxu0 0.0
    %788 = vmatprep.subr.mxu0 0.0
    %789 = vmatpush1.msra.mxu0 0.0
    %790 = vmatprep.subr.mxu0 0.0
    %791 = vmatpush1.msra.mxu0 0.0
    %792 = vmatprep.subr.mxu0 0.0
    %793 = vmatpush1.msra.mxu0 0.0
    %794 = vmatprep.subr.mxu0 0.0
    %795 = vmatpush1.msra.mxu0 0.0
    %796 = vmatprep.subr.mxu0 %v417
    %797 = vmatpush1.msra.mxu0 %v416
    %798 = vmatprep.subr.mxu0 %v414
    %799 = vmatpush1.msra.mxu0 %v413
    %800 = vmatprep.subr.mxu0 %v411
    %801 = vmatpush1.msra.mxu0 %v410
    %802 = vmatprep.subr.mxu0 %v408
    %803 = vmatpush1.msra.mxu0 %v407
    %804 = vmatprep.subr.mxu0 0.0
    %805 = vmatpush2.msra.mxu0 0.0
    %806 = vmatprep.subr.mxu0 0.0
    %807 = vmatpush2.msra.mxu0 0.0
    %808 = vmatprep.subr.mxu0 0.0
    %809 = vmatpush2.msra.mxu0 0.0
    %810 = vmatprep.subr.mxu0 0.0
    %811 = vmatpush2.msra.mxu0 0.0
    %812 = vmatprep.subr.mxu0 0.0
    %813 = vmatpush2.msra.mxu0 0.0
    %814 = vmatprep.subr.mxu0 0.0
    %815 = vmatpush2.msra.mxu0 0.0
    %816 = vmatprep.subr.mxu0 0.0
    %817 = vmatpush2.msra.mxu0 0.0
    %818 = vmatprep.subr.mxu0 0.0
    %819 = vmatpush2.msra.mxu0 0.0
    %820 = vmatprep.subr.mxu0 0.0
    %821 = vmatpush2.msra.mxu0 0.0
    %822 = vmatprep.subr.mxu0 0.0
    %823 = vmatpush2.msra.mxu0 0.0
    %824 = vmatprep.subr.mxu0 0.0
    %825 = vmatpush2.msra.mxu0 0.0
    %826 = vmatprep.subr.mxu0 0.0
    %827 = vmatpush2.msra.mxu0 0.0
    %828 = vmatprep.subr.mxu0 0.0
    %829 = vmatpush2.msra.mxu0 0.0
    %830 = vmatprep.subr.mxu0 0.0
    %831 = vmatpush2.msra.mxu0 0.0
    %832 = vmatprep.subr.mxu0 0.0
    %833 = vmatpush2.msra.mxu0 0.0
    %834 = vmatprep.subr.mxu0 0.0
    %835 = vmatpush2.msra.mxu0 0.0
    %836 = vmatprep.mubr.f32.mxu0 0.0
    %837 = vmatmul.mubr.f32.gmra.mxu0 %v623
    %v838 = vpop.f32.mrf.mxu0
    %v839 = vadd.f32 0.0, %v838
    %v840 = vpop.f32.mrf.mxu0
    %v841 = vadd.f32 0.0, %v840
    %842 = vdwg.mxu0
    %843 = vmatprep.subr.mxu0 0.0
    %844 = vmatpush1.msra.mxu0 0.0
    %845 = vmatprep.subr.mxu0 0.0
    %846 = vmatpush1.msra.mxu0 0.0
    %847 = vmatprep.subr.mxu0 0.0
    %848 = vmatpush1.msra.mxu0 0.0
    %849 = vmatprep.subr.mxu0 0.0
    %850 = vmatpush1.msra.mxu0 0.0
    %851 = vmatprep.subr.mxu0 0.0
    %852 = vmatpush1.msra.mxu0 0.0
    %853 = vmatprep.subr.mxu0 0.0
    %854 = vmatpush1.msra.mxu0 0.0
    %855 = vmatprep.subr.mxu0 0.0
    %856 = vmatpush1.msra.mxu0 0.0
    %857 = vmatprep.subr.mxu0 0.0
    %858 = vmatpush1.msra.mxu0 0.0
    %859 = vmatprep.subr.mxu0 0.0
    %860 = vmatpush1.msra.mxu0 0.0
    %861 = vmatprep.subr.mxu0 0.0
    %862 = vmatpush1.msra.mxu0 0.0
    %863 = vmatprep.subr.mxu0 0.0
    %864 = vmatpush1.msra.mxu0 0.0
    %865 = vmatprep.subr.mxu0 0.0
    %866 = vmatpush1.msra.mxu0 0.0
    %867 = vmatprep.subr.mxu0 0.0
    %868 = vmatpush1.msra.mxu0 %v418
    %869 = vmatprep.subr.mxu0 0.0
    %870 = vmatpush1.msra.mxu0 %v415
    %871 = vmatprep.subr.mxu0 0.0
    %872 = vmatpush1.msra.mxu0 %v412
    %873 = vmatprep.subr.mxu0 0.0
    %874 = vmatpush1.msra.mxu0 %v409
    %875 = vmatprep.subr.mxu0 0.0
    %876 = vmatpush2.msra.mxu0 0.0
    %877 = vmatprep.subr.mxu0 0.0
    %878 = vmatpush2.msra.mxu0 0.0
    %879 = vmatprep.subr.mxu0 0.0
    %880 = vmatpush2.msra.mxu0 0.0
    %881 = vmatprep.subr.mxu0 0.0
    %882 = vmatpush2.msra.mxu0 0.0
    %883 = vmatprep.subr.mxu0 0.0
    %884 = vmatpush2.msra.mxu0 0.0
    %885 = vmatprep.subr.mxu0 0.0
    %886 = vmatpush2.msra.mxu0 0.0
    %887 = vmatprep.subr.mxu0 0.0
    %888 = vmatpush2.msra.mxu0 0.0
    %889 = vmatprep.subr.mxu0 0.0
    %890 = vmatpush2.msra.mxu0 0.0
    %891 = vmatprep.subr.mxu0 0.0
    %892 = vmatpush2.msra.mxu0 0.0
    %893 = vmatprep.subr.mxu0 0.0
    %894 = vmatpush2.msra.mxu0 0.0
    %895 = vmatprep.subr.mxu0 0.0
    %896 = vmatpush2.msra.mxu0 0.0
    %897 = vmatprep.subr.mxu0 0.0
    %898 = vmatpush2.msra.mxu0 0.0
    %899 = vmatprep.subr.mxu0 0.0
    %900 = vmatpush2.msra.mxu0 0.0
    %901 = vmatprep.subr.mxu0 0.0
    %902 = vmatpush2.msra.mxu0 0.0
    %903 = vmatprep.subr.mxu0 0.0
    %904 = vmatpush2.msra.mxu0 0.0
    %905 = vmatprep.subr.mxu0 0.0
    %906 = vmatpush2.msra.mxu0 0.0
    %907 = vmatprep.mubr.f32.mxu0 0.0
    %908 = vmatmul.mubr.f32.gmra.mxu0 %v623
    %v909 = vpop.f32.mrf.mxu0
    %v910 = vadd.f32 0.0, %v909
    %v911 = vpop.f32.mrf.mxu0
    %912 = vdwg.mxu0
    %v913 = vadd.f32 %v769, %v839
    %v914 = vadd.f32 %v770, %v841
    %v915 = vmul.f32 %v913, 0.5
    %v916 = vtanh.pop %v915
    %v917 = vmul.f32 %v916, 0.5
    %v918 = vadd.f32 %v917, 0.5
    %v919 = vmul.f32 %v914, 0.5
    %v920 = vtanh.pop %v919
    %v921 = vmul.f32 %v920, 0.5
    %v922 = vadd.f32 %v921, 0.5
    %v923 = vadd.f32 %v910, %v596
    %v924 = vmul.f32 %v918, %v923
    %v925 = vadd.f32 %v771, %v924
    %v926 = vtanh.pop %v925
    %v927 = vsub.f32 1.0, %v922
    %v928 = vmul.f32 %v927, %v926
    %v929 = vmul.f32 %v922, %v605
    %v930 = vadd.f32 %v928, %v929
    %v932 = vsel %vm437, %v930, 0
    %934 = vmatprep.subr.mxu0 0.0
    %935 = vmatpush1.msra.mxu0 0.0
    %936 = vmatprep.subr.mxu0 0.0
    %937 = vmatpush1.msra.mxu0 0.0
    %938 = vmatprep.subr.mxu0 0.0
    %939 = vmatpush1.msra.mxu0 0.0
    %940 = vmatprep.subr.mxu0 0.0
    %941 = vmatpush1.msra.mxu0 0.0
    %942 = vmatprep.subr.mxu0 0.0
    %943 = vmatpush1.msra.mxu0 0.0
    %944 = vmatprep.subr.mxu0 0.0
    %945 = vmatpush1.msra.mxu0 0.0
    %946 = vmatprep.subr.mxu0 0.0
    %947 = vmatpush1.msra.mxu0 0.0
    %948 = vmatprep.subr.mxu0 0.0
    %949 = vmatpush1.msra.mxu0 0.0
    %950 = vmatprep.subr.mxu0 0.0
    %951 = vmatpush1.msra.mxu0 0.0
    %952 = vmatprep.subr.mxu0 0.0
    %953 = vmatpush1.msra.mxu0 0.0
    %954 = vmatprep.subr.mxu0 0.0
    %955 = vmatpush1.msra.mxu0 0.0
    %956 = vmatprep.subr.mxu0 0.0
    %957 = vmatpush1.msra.mxu0 0.0
    %958 = vmatprep.subr.mxu0 %v431
    %959 = vmatpush1.msra.mxu0 %v430
    %960 = vmatprep.subr.mxu0 %v428
    %961 = vmatpush1.msra.mxu0 %v427
    %962 = vmatprep.subr.mxu0 %v425
    %963 = vmatpush1.msra.mxu0 %v424
    %964 = vmatprep.subr.mxu0 %v422
    %965 = vmatpush1.msra.mxu0 %v421
    %966 = vmatprep.subr.mxu0 0.0
    %967 = vmatpush2.msra.mxu0 0.0
    %968 = vmatprep.subr.mxu0 0.0
    %969 = vmatpush2.msra.mxu0 0.0
    %970 = vmatprep.subr.mxu0 0.0
    %971 = vmatpush2.msra.mxu0 0.0
    %972 = vmatprep.subr.mxu0 0.0
    %973 = vmatpush2.msra.mxu0 0.0
    %974 = vmatprep.subr.mxu0 0.0
    %975 = vmatpush2.msra.mxu0 0.0
    %976 = vmatprep.subr.mxu0 0.0
    %977 = vmatpush2.msra.mxu0 0.0
    %978 = vmatprep.subr.mxu0 0.0
    %979 = vmatpush2.msra.mxu0 0.0
    %980 = vmatprep.subr.mxu0 0.0
    %981 = vmatpush2.msra.mxu0 0.0
    %982 = vmatprep.subr.mxu0 0.0
    %983 = vmatpush2.msra.mxu0 0.0
    %984 = vmatprep.subr.mxu0 0.0
    %985 = vmatpush2.msra.mxu0 0.0
    %986 = vmatprep.subr.mxu0 0.0
    %987 = vmatpush2.msra.mxu0 0.0
    %988 = vmatprep.subr.mxu0 0.0
    %989 = vmatpush2.msra.mxu0 0.0
    %990 = vmatprep.subr.mxu0 0.0
    %991 = vmatpush2.msra.mxu0 0.0
    %992 = vmatprep.subr.mxu0 0.0
    %993 = vmatpush2.msra.mxu0 0.0
    %994 = vmatprep.subr.mxu0 0.0
    %995 = vmatpush2.msra.mxu0 0.0
    %996 = vmatprep.subr.mxu0 0.0
    %997 = vmatpush2.msra.mxu0 0.0
    %998 = vmatprep.mubr.f32.mxu0 0.0
    %999 = vmatmul.mubr.f32.gmra.mxu0 %v932
    %v1000 = vpop.f32.mrf.mxu0
    %v1001 = vadd.f32 %v610, %v1000
    %v1002 = vpop.f32.mrf.mxu0
    %v1003 = vadd.f32 %v614, %v1002
    %1004 = vdwg.mxu0
    %1005 = vmatprep.subr.mxu0 0.0
    %1006 = vmatpush1.msra.mxu0 0.0
    %1007 = vmatprep.subr.mxu0 0.0
    %1008 = vmatpush1.msra.mxu0 0.0
    %1009 = vmatprep.subr.mxu0 0.0
    %1010 = vmatpush1.msra.mxu0 0.0
    %1011 = vmatprep.subr.mxu0 0.0
    %1012 = vmatpush1.msra.mxu0 0.0
    %1013 = vmatprep.subr.mxu0 0.0
    %1014 = vmatpush1.msra.mxu0 0.0
    %1015 = vmatprep.subr.mxu0 0.0
    %1016 = vmatpush1.msra.mxu0 0.0
    %1017 = vmatprep.subr.mxu0 0.0
    %1018 = vmatpush1.msra.mxu0 0.0
    %1019 = vmatprep.subr.mxu0 0.0
    %1020 = vmatpush1.msra.mxu0 0.0
    %1021 = vmatprep.subr.mxu0 0.0
    %1022 = vmatpush1.msra.mxu0 0.0
    %1023 = vmatprep.subr.mxu0 0.0
    %1024 = vmatpush1.msra.mxu0 0.0
    %1025 = vmatprep.subr.mxu0 0.0
    %1026 = vmatpush1.msra.mxu0 0.0
    %1027 = vmatprep.subr.mxu0 0.0
    %1028 = vmatpush1.msra.mxu0 0.0
    %1029 = vmatprep.subr.mxu0 0.0
    %1030 = vmatpush1.msra.mxu0 %v432
    %1031 = vmatprep.subr.mxu0 0.0
    %1032 = vmatpush1.msra.mxu0 %v429
    %1033 = vmatprep.subr.mxu0 0.0
    %1034 = vmatpush1.msra.mxu0 %v426
    %1035 = vmatprep.subr.mxu0 0.0
    %1036 = vmatpush1.msra.mxu0 %v423
    %1037 = vmatprep.subr.mxu0 0.0
    %1038 = vmatpush2.msra.mxu0 0.0
    %1039 = vmatprep.subr.mxu0 0.0
    %1040 = vmatpush2.msra.mxu0 0.0
    %1041 = vmatprep.subr.mxu0 0.0
    %1042 = vmatpush2.msra.mxu0 0.0
    %1043 = vmatprep.subr.mxu0 0.0
    %1044 = vmatpush2.msra.mxu0 0.0
    %1045 = vmatprep.subr.mxu0 0.0
    %1046 = vmatpush2.msra.mxu0 0.0
    %1047 = vmatprep.subr.mxu0 0.0
    %1048 = vmatpush2.msra.mxu0 0.0
    %1049 = vmatprep.subr.mxu0 0.0
    %1050 = vmatpush2.msra.mxu0 0.0
    %1051 = vmatprep.subr.mxu0 0.0
    %1052 = vmatpush2.msra.mxu0 0.0
    %1053 = vmatprep.subr.mxu0 0.0
    %1054 = vmatpush2.msra.mxu0 0.0
    %1055 = vmatprep.subr.mxu0 0.0
    %1056 = vmatpush2.msra.mxu0 0.0
    %1057 = vmatprep.subr.mxu0 0.0
    %1058 = vmatpush2.msra.mxu0 0.0
    %1059 = vmatprep.subr.mxu0 0.0
    %1060 = vmatpush2.msra.mxu0 0.0
    %1061 = vmatprep.subr.mxu0 0.0
    %1062 = vmatpush2.msra.mxu0 0.0
    %1063 = vmatprep.subr.mxu0 0.0
    %1064 = vmatpush2.msra.mxu0 0.0
    %1065 = vmatprep.subr.mxu0 0.0
    %1066 = vmatpush2.msra.mxu0 0.0
    %1067 = vmatprep.subr.mxu0 0.0
    %1068 = vmatpush2.msra.mxu0 0.0
    %1069 = vmatprep.mubr.f32.mxu0 0.0
    %1070 = vmatmul.mubr.f32.gmra.mxu0 %v932
    %v1071 = vpop.f32.mrf.mxu0
    %v1072 = vadd.f32 %v618, %v1071
    %v1073 = vpop.f32.mrf.mxu0
    %1074 = vdwg.mxu0
    %1075 = vst [vmem:[#allocation2 + $0x18] sm:$0xff] %v1001
    %1076 = vst [vmem:[#allocation2 + $0x20] sm:$0xff] %v1003
    %1077 = vst [vmem:[#allocation2 + $0x28] sm:$0xff] %v1072
    %v1078 = vld [vmem:[#allocation2 + $0x30] sm:$0xff]
    %v1079 = vld [vmem:[#allocation2 + $0x38] sm:$0xff]
    %v1080 = vld [vmem:[#allocation2 + $0x40] sm:$0xff]
    %1081 = vmatprep.subr.mxu0 0.0
    %1082 = vmatpush1.msra.mxu0 0.0
    %1083 = vmatprep.subr.mxu0 0.0
    %1084 = vmatpush1.msra.mxu0 0.0
    %1085 = vmatprep.subr.mxu0 0.0
    %1086 = vmatpush1.msra.mxu0 0.0
    %1087 = vmatprep.subr.mxu0 0.0
    %1088 = vmatpush1.msra.mxu0 0.0
    %1089 = vmatprep.subr.mxu0 0.0
    %1090 = vmatpush1.msra.mxu0 0.0
    %1091 = vmatprep.subr.mxu0 0.0
    %1092 = vmatpush1.msra.mxu0 0.0
    %1093 = vmatprep.subr.mxu0 0.0
    %1094 = vmatpush1.msra.mxu0 0.0
    %1095 = vmatprep.subr.mxu0 0.0
    %1096 = vmatpush1.msra.mxu0 0.0
    %1097 = vmatprep.subr.mxu0 0.0
    %1098 = vmatpush1.msra.mxu0 0.0
    %1099 = vmatprep.subr.mxu0 0.0
    %1100 = vmatpush1.msra.mxu0 0.0
    %1101 = vmatprep.subr.mxu0 0.0
    %1102 = vmatpush1.msra.mxu0 0.0
    %1103 = vmatprep.subr.mxu0 0.0
    %1104 = vmatpush1.msra.mxu0 0.0
    %1105 = vmatprep.subr.mxu0 %v417
    %1106 = vmatpush1.msra.mxu0 %v416
    %1107 = vmatprep.subr.mxu0 %v414
    %1108 = vmatpush1.msra.mxu0 %v413
    %1109 = vmatprep.subr.mxu0 %v411
    %1110 = vmatpush1.msra.mxu0 %v410
    %1111 = vmatprep.subr.mxu0 %v408
    %1112 = vmatpush1.msra.mxu0 %v407
    %1113 = vmatprep.subr.mxu0 0.0
    %1114 = vmatpush2.msra.mxu0 0.0
    %1115 = vmatprep.subr.mxu0 0.0
    %1116 = vmatpush2.msra.mxu0 0.0
    %1117 = vmatprep.subr.mxu0 0.0
    %1118 = vmatpush2.msra.mxu0 0.0
    %1119 = vmatprep.subr.mxu0 0.0
    %1120 = vmatpush2.msra.mxu0 0.0
    %1121 = vmatprep.subr.mxu0 0.0
    %1122 = vmatpush2.msra.mxu0 0.0
    %1123 = vmatprep.subr.mxu0 0.0
    %1124 = vmatpush2.msra.mxu0 0.0
    %1125 = vmatprep.subr.mxu0 0.0
    %1126 = vmatpush2.msra.mxu0 0.0
    %1127 = vmatprep.subr.mxu0 0.0
    %1128 = vmatpush2.msra.mxu0 0.0
    %1129 = vmatprep.subr.mxu0 0.0
    %1130 = vmatpush2.msra.mxu0 0.0
    %1131 = vmatprep.subr.mxu0 0.0
    %1132 = vmatpush2.msra.mxu0 0.0
    %1133 = vmatprep.subr.mxu0 0.0
    %1134 = vmatpush2.msra.mxu0 0.0
    %1135 = vmatprep.subr.mxu0 0.0
    %1136 = vmatpush2.msra.mxu0 0.0
    %1137 = vmatprep.subr.mxu0 0.0
    %1138 = vmatpush2.msra.mxu0 0.0
    %1139 = vmatprep.subr.mxu0 0.0
    %1140 = vmatpush2.msra.mxu0 0.0
    %1141 = vmatprep.subr.mxu0 0.0
    %1142 = vmatpush2.msra.mxu0 0.0
    %1143 = vmatprep.subr.mxu0 0.0
    %1144 = vmatpush2.msra.mxu0 0.0
    %1145 = vmatprep.mubr.f32.mxu0 0.0
    %1146 = vmatmul.mubr.f32.gmra.mxu0 %v932
    %v1147 = vpop.f32.mrf.mxu0
    %v1148 = vadd.f32 0.0, %v1147
    %v1149 = vpop.f32.mrf.mxu0
    %v1150 = vadd.f32 0.0, %v1149
    %1151 = vdwg.mxu0
    %1152 = vmatprep.subr.mxu0 0.0
    %1153 = vmatpush1.msra.mxu0 0.0
    %1154 = vmatprep.subr.mxu0 0.0
    %1155 = vmatpush1.msra.mxu0 0.0
    %1156 = vmatprep.subr.mxu0 0.0
    %1157 = vmatpush1.msra.mxu0 0.0
    %1158 = vmatprep.subr.mxu0 0.0
    %1159 = vmatpush1.msra.mxu0 0.0
    %1160 = vmatprep.subr.mxu0 0.0
    %1161 = vmatpush1.msra.mxu0 0.0
    %1162 = vmatprep.subr.mxu0 0.0
    %1163 = vmatpush1.msra.mxu0 0.0
    %1164 = vmatprep.subr.mxu0 0.0
    %1165 = vmatpush1.msra.mxu0 0.0
    %1166 = vmatprep.subr.mxu0 0.0
    %1167 = vmatpush1.msra.mxu0 0.0
    %1168 = vmatprep.subr.mxu0 0.0
    %1169 = vmatpush1.msra.mxu0 0.0
    %1170 = vmatprep.subr.mxu0 0.0
    %1171 = vmatpush1.msra.mxu0 0.0
    %1172 = vmatprep.subr.mxu0 0.0
    %1173 = vmatpush1.msra.mxu0 0.0
    %1174 = vmatprep.subr.mxu0 0.0
    %1175 = vmatpush1.msra.mxu0 0.0
    %1176 = vmatprep.subr.mxu0 0.0
    %1177 = vmatpush1.msra.mxu0 %v418
    %1178 = vmatprep.subr.mxu0 0.0
    %1179 = vmatpush1.msra.mxu0 %v415
    %1180 = vmatprep.subr.mxu0 0.0
    %1181 = vmatpush1.msra.mxu0 %v412
    %1182 = vmatprep.subr.mxu0 0.0
    %1183 = vmatpush1.msra.mxu0 %v409
    %1184 = vmatprep.subr.mxu0 0.0
    %1185 = vmatpush2.msra.mxu0 0.0
    %1186 = vmatprep.subr.mxu0 0.0
    %1187 = vmatpush2.msra.mxu0 0.0
    %1188 = vmatprep.subr.mxu0 0.0
    %1189 = vmatpush2.msra.mxu0 0.0
    %1190 = vmatprep.subr.mxu0 0.0
    %1191 = vmatpush2.msra.mxu0 0.0
    %1192 = vmatprep.subr.mxu0 0.0
    %1193 = vmatpush2.msra.mxu0 0.0
    %1194 = vmatprep.subr.mxu0 0.0
    %1195 = vmatpush2.msra.mxu0 0.0
    %1196 = vmatprep.subr.mxu0 0.0
    %1197 = vmatpush2.msra.mxu0 0.0
    %1198 = vmatprep.subr.mxu0 0.0
    %1199 = vmatpush2.msra.mxu0 0.0
    %1200 = vmatprep.subr.mxu0 0.0
    %1201 = vmatpush2.msra.mxu0 0.0
    %1202 = vmatprep.subr.mxu0 0.0
    %1203 = vmatpush2.msra.mxu0 0.0
    %1204 = vmatprep.subr.mxu0 0.0
    %1205 = vmatpush2.msra.mxu0 0.0
    %1206 = vmatprep.subr.mxu0 0.0
    %1207 = vmatpush2.msra.mxu0 0.0
    %1208 = vmatprep.subr.mxu0 0.0
    %1209 = vmatpush2.msra.mxu0 0.0
    %1210 = vmatprep.subr.mxu0 0.0
    %1211 = vmatpush2.msra.mxu0 0.0
    %1212 = vmatprep.subr.mxu0 0.0
    %1213 = vmatpush2.msra.mxu0 0.0
    %1214 = vmatprep.subr.mxu0 0.0
    %1215 = vmatpush2.msra.mxu0 0.0
    %1216 = vmatprep.mubr.f32.mxu0 0.0
    %1217 = vmatmul.mubr.f32.gmra.mxu0 %v932
    %v1218 = vpop.f32.mrf.mxu0
    %v1219 = vadd.f32 0.0, %v1218
    %v1220 = vpop.f32.mrf.mxu0
    %1221 = vdwg.mxu0
    %v1222 = vadd.f32 %v1078, %v1148
    %v1223 = vadd.f32 %v1079, %v1150
    %v1224 = vmul.f32 %v1222, 0.5
    %v1225 = vtanh.pop %v1224
    %v1226 = vmul.f32 %v1225, 0.5
    %v1227 = vadd.f32 %v1226, 0.5
    %v1228 = vmul.f32 %v1223, 0.5
    %v1229 = vtanh.pop %v1228
    %v1230 = vmul.f32 %v1229, 0.5
    %v1231 = vadd.f32 %v1230, 0.5
    %v1232 = vadd.f32 %v1219, %v596
    %v1233 = vmul.f32 %v1227, %v1232
    %v1234 = vadd.f32 %v1080, %v1233
    %v1235 = vtanh.pop %v1234
    %v1236 = vsub.f32 1.0, %v1231
    %v1237 = vmul.f32 %v1236, %v1235
    %v1238 = vmul.f32 %v1231, %v930
    %v1239 = vadd.f32 %v1237, %v1238
    %v1241 = vsel %vm437, %v1239, 0
    %1243 = vmatprep.subr.mxu0 0.0
    %1244 = vmatpush1.msra.mxu0 0.0
    %1245 = vmatprep.subr.mxu0 0.0
    %1246 = vmatpush1.msra.mxu0 0.0
    %1247 = vmatprep.subr.mxu0 0.0
    %1248 = vmatpush1.msra.mxu0 0.0
    %1249 = vmatprep.subr.mxu0 0.0
    %1250 = vmatpush1.msra.mxu0 0.0
    %1251 = vmatprep.subr.mxu0 0.0
    %1252 = vmatpush1.msra.mxu0 0.0
    %1253 = vmatprep.subr.mxu0 0.0
    %1254 = vmatpush1.msra.mxu0 0.0
    %1255 = vmatprep.subr.mxu0 0.0
    %1256 = vmatpush1.msra.mxu0 0.0
    %1257 = vmatprep.subr.mxu0 0.0
    %1258 = vmatpush1.msra.mxu0 0.0
    %1259 = vmatprep.subr.mxu0 0.0
    %1260 = vmatpush1.msra.mxu0 0.0
    %1261 = vmatprep.subr.mxu0 0.0
    %1262 = vmatpush1.msra.mxu0 0.0
    %1263 = vmatprep.subr.mxu0 0.0
    %1264 = vmatpush1.msra.mxu0 0.0
    %1265 = vmatprep.subr.mxu0 0.0
    %1266 = vmatpush1.msra.mxu0 0.0
    %1267 = vmatprep.subr.mxu0 %v431
    %1268 = vmatpush1.msra.mxu0 %v430
    %1269 = vmatprep.subr.mxu0 %v428
    %1270 = vmatpush1.msra.mxu0 %v427
    %1271 = vmatprep.subr.mxu0 %v425
    %1272 = vmatpush1.msra.mxu0 %v424
    %1273 = vmatprep.subr.mxu0 %v422
    %1274 = vmatpush1.msra.mxu0 %v421
    %1275 = vmatprep.subr.mxu0 0.0
    %1276 = vmatpush2.msra.mxu0 0.0
    %1277 = vmatprep.subr.mxu0 0.0
    %1278 = vmatpush2.msra.mxu0 0.0
    %1279 = vmatprep.subr.mxu0 0.0
    %1280 = vmatpush2.msra.mxu0 0.0
    %1281 = vmatprep.subr.mxu0 0.0
    %1282 = vmatpush2.msra.mxu0 0.0
    %1283 = vmatprep.subr.mxu0 0.0
    %1284 = vmatpush2.msra.mxu0 0.0
    %1285 = vmatprep.subr.mxu0 0.0
    %1286 = vmatpush2.msra.mxu0 0.0
    %1287 = vmatprep.subr.mxu0 0.0
    %1288 = vmatpush2.msra.mxu0 0.0
    %1289 = vmatprep.subr.mxu0 0.0
    %1290 = vmatpush2.msra.mxu0 0.0
    %1291 = vmatprep.subr.mxu0 0.0
    %1292 = vmatpush2.msra.mxu0 0.0
    %1293 = vmatprep.subr.mxu0 0.0
    %1294 = vmatpush2.msra.mxu0 0.0
    %1295 = vmatprep.subr.mxu0 0.0
    %1296 = vmatpush2.msra.mxu0 0.0
    %1297 = vmatprep.subr.mxu0 0.0
    %1298 = vmatpush2.msra.mxu0 0.0
    %1299 = vmatprep.subr.mxu0 0.0
    %1300 = vmatpush2.msra.mxu0 0.0
    %1301 = vmatprep.subr.mxu0 0.0
    %1302 = vmatpush2.msra.mxu0 0.0
    %1303 = vmatprep.subr.mxu0 0.0
    %1304 = vmatpush2.msra.mxu0 0.0
    %1305 = vmatprep.subr.mxu0 0.0
    %1306 = vmatpush2.msra.mxu0 0.0
    %1307 = vmatprep.mubr.f32.mxu0 0.0
    %1308 = vmatmul.mubr.f32.gmra.mxu0 %v1241
    %v1309 = vpop.f32.mrf.mxu0
    %v1310 = vadd.f32 %v610, %v1309
    %v1311 = vpop.f32.mrf.mxu0
    %v1312 = vadd.f32 %v614, %v1311
    %1313 = vdwg.mxu0
    %1314 = vmatprep.subr.mxu0 0.0
    %1315 = vmatpush1.msra.mxu0 0.0
    %1316 = vmatprep.subr.mxu0 0.0
    %1317 = vmatpush1.msra.mxu0 0.0
    %1318 = vmatprep.subr.mxu0 0.0
    %1319 = vmatpush1.msra.mxu0 0.0
    %1320 = vmatprep.subr.mxu0 0.0
    %1321 = vmatpush1.msra.mxu0 0.0
    %1322 = vmatprep.subr.mxu0 0.0
    %1323 = vmatpush1.msra.mxu0 0.0
    %1324 = vmatprep.subr.mxu0 0.0
    %1325 = vmatpush1.msra.mxu0 0.0
    %1326 = vmatprep.subr.mxu0 0.0
    %1327 = vmatpush1.msra.mxu0 0.0
    %1328 = vmatprep.subr.mxu0 0.0
    %1329 = vmatpush1.msra.mxu0 0.0
    %1330 = vmatprep.subr.mxu0 0.0
    %1331 = vmatpush1.msra.mxu0 0.0
    %1332 = vmatprep.subr.mxu0 0.0
    %1333 = vmatpush1.msra.mxu0 0.0
    %1334 = vmatprep.subr.mxu0 0.0
    %1335 = vmatpush1.msra.mxu0 0.0
    %1336 = vmatprep.subr.mxu0 0.0
    %1337 = vmatpush1.msra.mxu0 0.0
    %1338 = vmatprep.subr.mxu0 0.0
    %1339 = vmatpush1.msra.mxu0 %v432
    %1340 = vmatprep.subr.mxu0 0.0
    %1341 = vmatpush1.msra.mxu0 %v429
    %1342 = vmatprep.subr.mxu0 0.0
    %1343 = vmatpush1.msra.mxu0 %v426
    %1344 = vmatprep.subr.mxu0 0.0
    %1345 = vmatpush1.msra.mxu0 %v423
    %1346 = vmatprep.subr.mxu0 0.0
    %1347 = vmatpush2.msra.mxu0 0.0
    %1348 = vmatprep.subr.mxu0 0.0
    %1349 = vmatpush2.msra.mxu0 0.0
    %1350 = vmatprep.subr.mxu0 0.0
    %1351 = vmatpush2.msra.mxu0 0.0
    %1352 = vmatprep.subr.mxu0 0.0
    %1353 = vmatpush2.msra.mxu0 0.0
    %1354 = vmatprep.subr.mxu0 0.0
    %1355 = vmatpush2.msra.mxu0 0.0
    %1356 = vmatprep.subr.mxu0 0.0
    %1357 = vmatpush2.msra.mxu0 0.0
    %1358 = vmatprep.subr.mxu0 0.0
    %1359 = vmatpush2.msra.mxu0 0.0
    %1360 = vmatprep.subr.mxu0 0.0
    %1361 = vmatpush2.msra.mxu0 0.0
    %1362 = vmatprep.subr.mxu0 0.0
    %1363 = vmatpush2.msra.mxu0 0.0
    %1364 = vmatprep.subr.mxu0 0.0
    %1365 = vmatpush2.msra.mxu0 0.0
    %1366 = vmatprep.subr.mxu0 0.0
    %1367 = vmatpush2.msra.mxu0 0.0
    %1368 = vmatprep.subr.mxu0 0.0
    %1369 = vmatpush2.msra.mxu0 0.0
    %1370 = vmatprep.subr.mxu0 0.0
    %1371 = vmatpush2.msra.mxu0 0.0
    %1372 = vmatprep.subr.mxu0 0.0
    %1373 = vmatpush2.msra.mxu0 0.0
    %1374 = vmatprep.subr.mxu0 0.0
    %1375 = vmatpush2.msra.mxu0 0.0
    %1376 = vmatprep.subr.mxu0 0.0
    %1377 = vmatpush2.msra.mxu0 0.0
    %1378 = vmatprep.mubr.f32.mxu0 0.0
    %1379 = vmatmul.mubr.f32.gmra.mxu0 %v1241
    %v1380 = vpop.f32.mrf.mxu0
    %v1381 = vadd.f32 %v618, %v1380
    %v1382 = vpop.f32.mrf.mxu0
    %1383 = vdwg.mxu0
    %1384 = vst [vmem:[#allocation2 + $0x30] sm:$0xff] %v1310
    %1385 = vst [vmem:[#allocation2 + $0x38] sm:$0xff] %v1312
    %1386 = vst [vmem:[#allocation2 + $0x40] sm:$0xff] %v1381
    %v1387 = vld [vmem:[#allocation2 + $0x48] sm:$0xff]
    %v1388 = vld [vmem:[#allocation2 + $0x50] sm:$0xff]
    %v1389 = vld [vmem:[#allocation2 + $0x58] sm:$0xff]
    %1390 = vmatprep.subr.mxu0 0.0
    %1391 = vmatpush1.msra.mxu0 0.0
    %1392 = vmatprep.subr.mxu0 0.0
    %1393 = vmatpush1.msra.mxu0 0.0
    %1394 = vmatprep.subr.mxu0 0.0
    %1395 = vmatpush1.msra.mxu0 0.0
    %1396 = vmatprep.subr.mxu0 0.0
    %1397 = vmatpush1.msra.mxu0 0.0
    %1398 = vmatprep.subr.mxu0 0.0
    %1399 = vmatpush1.msra.mxu0 0.0
    %1400 = vmatprep.subr.mxu0 0.0
    %1401 = vmatpush1.msra.mxu0 0.0
    %1402 = vmatprep.subr.mxu0 0.0
    %1403 = vmatpush1.msra.mxu0 0.0
    %1404 = vmatprep.subr.mxu0 0.0
    %1405 = vmatpush1.msra.mxu0 0.0
    %1406 = vmatprep.subr.mxu0 0.0
    %1407 = vmatpush1.msra.mxu0 0.0
    %1408 = vmatprep.subr.mxu0 0.0
    %1409 = vmatpush1.msra.mxu0 0.0
    %1410 = vmatprep.subr.mxu0 0.0
    %1411 = vmatpush1.msra.mxu0 0.0
    %1412 = vmatprep.subr.mxu0 0.0
    %1413 = vmatpush1.msra.mxu0 0.0
    %1414 = vmatprep.subr.mxu0 %v417
    %1415 = vmatpush1.msra.mxu0 %v416
    %1416 = vmatprep.subr.mxu0 %v414
    %1417 = vmatpush1.msra.mxu0 %v413
    %1418 = vmatprep.subr.mxu0 %v411
    %1419 = vmatpush1.msra.mxu0 %v410
    %1420 = vmatprep.subr.mxu0 %v408
    %1421 = vmatpush1.msra.mxu0 %v407
    %1422 = vmatprep.subr.mxu0 0.0
    %1423 = vmatpush2.msra.mxu0 0.0
    %1424 = vmatprep.subr.mxu0 0.0
    %1425 = vmatpush2.msra.mxu0 0.0
    %1426 = vmatprep.subr.mxu0 0.0
    %1427 = vmatpush2.msra.mxu0 0.0
    %1428 = vmatprep.subr.mxu0 0.0
    %1429 = vmatpush2.msra.mxu0 0.0
    %1430 = vmatprep.subr.mxu0 0.0
    %1431 = vmatpush2.msra.mxu0 0.0
    %1432 = vmatprep.subr.mxu0 0.0
    %1433 = vmatpush2.msra.mxu0 0.0
    %1434 = vmatprep.subr.mxu0 0.0
    %1435 = vmatpush2.msra.mxu0 0.0
    %1436 = vmatprep.subr.mxu0 0.0
    %1437 = vmatpush2.msra.mxu0 0.0
    %1438 = vmatprep.subr.mxu0 0.0
    %1439 = vmatpush2.msra.mxu0 0.0
    %1440 = vmatprep.subr.mxu0 0.0
    %1441 = vmatpush2.msra.mxu0 0.0
    %1442 = vmatprep.subr.mxu0 0.0
    %1443 = vmatpush2.msra.mxu0 0.0
    %1444 = vmatprep.subr.mxu0 0.0
    %1445 = vmatpush2.msra.mxu0 0.0
    %1446 = vmatprep.subr.mxu0 0.0
    %1447 = vmatpush2.msra.mxu0 0.0
    %1448 = vmatprep.subr.mxu0 0.0
    %1449 = vmatpush2.msra.mxu0 0.0
    %1450 = vmatprep.subr.mxu0 0.0
    %1451 = vmatpush2.msra.mxu0 0.0
    %1452 = vmatprep.subr.mxu0 0.0
    %1453 = vmatpush2.msra.mxu0 0.0
    %1454 = vmatprep.mubr.f32.mxu0 0.0
    %1455 = vmatmul.mubr.f32.gmra.mxu0 %v1241
    %v1456 = vpop.f32.mrf.mxu0
    %v1457 = vadd.f32 0.0, %v1456
    %v1458 = vpop.f32.mrf.mxu0
    %v1459 = vadd.f32 0.0, %v1458
    %1460 = vdwg.mxu0
    %1461 = vmatprep.subr.mxu0 0.0
    %1462 = vmatpush1.msra.mxu0 0.0
    %1463 = vmatprep.subr.mxu0 0.0
    %1464 = vmatpush1.msra.mxu0 0.0
    %1465 = vmatprep.subr.mxu0 0.0
    %1466 = vmatpush1.msra.mxu0 0.0
    %1467 = vmatprep.subr.mxu0 0.0
    %1468 = vmatpush1.msra.mxu0 0.0
    %1469 = vmatprep.subr.mxu0 0.0
    %1470 = vmatpush1.msra.mxu0 0.0
    %1471 = vmatprep.subr.mxu0 0.0
    %1472 = vmatpush1.msra.mxu0 0.0
    %1473 = vmatprep.subr.mxu0 0.0
    %1474 = vmatpush1.msra.mxu0 0.0
    %1475 = vmatprep.subr.mxu0 0.0
    %1476 = vmatpush1.msra.mxu0 0.0
    %1477 = vmatprep.subr.mxu0 0.0
    %1478 = vmatpush1.msra.mxu0 0.0
    %1479 = vmatprep.subr.mxu0 0.0
    %1480 = vmatpush1.msra.mxu0 0.0
    %1481 = vmatprep.subr.mxu0 0.0
    %1482 = vmatpush1.msra.mxu0 0.0
    %1483 = vmatprep.subr.mxu0 0.0
    %1484 = vmatpush1.msra.mxu0 0.0
    %1485 = vmatprep.subr.mxu0 0.0
    %1486 = vmatpush1.msra.mxu0 %v418
    %1487 = vmatprep.subr.mxu0 0.0
    %1488 = vmatpush1.msra.mxu0 %v415
    %1489 = vmatprep.subr.mxu0 0.0
    %1490 = vmatpush1.msra.mxu0 %v412
    %1491 = vmatprep.subr.mxu0 0.0
    %1492 = vmatpush1.msra.mxu0 %v409
    %1493 = vmatprep.subr.mxu0 0.0
    %1494 = vmatpush2.msra.mxu0 0.0
    %1495 = vmatprep.subr.mxu0 0.0
    %1496 = vmatpush2.msra.mxu0 0.0
    %1497 = vmatprep.subr.mxu0 0.0
    %1498 = vmatpush2.msra.mxu0 0.0
    %1499 = vmatprep.subr.mxu0 0.0
    %1500 = vmatpush2.msra.mxu0 0.0
    %1501 = vmatprep.subr.mxu0 0.0
    %1502 = vmatpush2.msra.mxu0 0.0
    %1503 = vmatprep.subr.mxu0 0.0
    %1504 = vmatpush2.msra.mxu0 0.0
    %1505 = vmatprep.subr.mxu0 0.0
    %1506 = vmatpush2.msra.mxu0 0.0
    %1507 = vmatprep.subr.mxu0 0.0
    %1508 = vmatpush2.msra.mxu0 0.0
    %1509 = vmatprep.subr.mxu0 0.0
    %1510 = vmatpush2.msra.mxu0 0.0
    %1511 = vmatprep.subr.mxu0 0.0
    %1512 = vmatpush2.msra.mxu0 0.0
    %1513 = vmatprep.subr.mxu0 0.0
    %1514 = vmatpush2.msra.mxu0 0.0
    %1515 = vmatprep.subr.mxu0 0.0
    %1516 = vmatpush2.msra.mxu0 0.0
    %1517 = vmatprep.subr.mxu0 0.0
    %1518 = vmatpush2.msra.mxu0 0.0
    %1519 = vmatprep.subr.mxu0 0.0
    %1520 = vmatpush2.msra.mxu0 0.0
    %1521 = vmatprep.subr.mxu0 0.0
    %1522 = vmatpush2.msra.mxu0 0.0
    %1523 = vmatprep.subr.mxu0 0.0
    %1524 = vmatpush2.msra.mxu0 0.0
    %1525 = vmatprep.mubr.f32.mxu0 0.0
    %1526 = vmatmul.mubr.f32.gmra.mxu0 %v1241
    %v1527 = vpop.f32.mrf.mxu0
    %v1528 = vadd.f32 0.0, %v1527
    %v1529 = vpop.f32.mrf.mxu0
    %1530 = vdwg.mxu0
    %v1531 = vadd.f32 %v1387, %v1457
    %v1532 = vadd.f32 %v1388, %v1459
    %v1533 = vmul.f32 %v1531, 0.5
    %v1534 = vtanh.pop %v1533
    %v1535 = vmul.f32 %v1534, 0.5
    %v1536 = vadd.f32 %v1535, 0.5
    %v1537 = vmul.f32 %v1532, 0.5
    %v1538 = vtanh.pop %v1537
    %v1539 = vmul.f32 %v1538, 0.5
    %v1540 = vadd.f32 %v1539, 0.5
    %v1541 = vadd.f32 %v1528, %v596
    %v1542 = vmul.f32 %v1536, %v1541
    %v1543 = vadd.f32 %v1389, %v1542
    %v1544 = vtanh.pop %v1543
    %v1545 = vsub.f32 1.0, %v1540
    %v1546 = vmul.f32 %v1545, %v1544
    %v1547 = vmul.f32 %v1540, %v1239
    %v1548 = vadd.f32 %v1546, %v1547
    %v1550 = vsel %vm437, %v1548, 0
    %1552 = vmatprep.subr.mxu0 0.0
    %1553 = vmatpush1.msra.mxu0 0.0
    %1554 = vmatprep.subr.mxu0 0.0
    %1555 = vmatpush1.msra.mxu0 0.0
    %1556 = vmatprep.subr.mxu0 0.0
    %1557 = vmatpush1.msra.mxu0 0.0
    %1558 = vmatprep.subr.mxu0 0.0
    %1559 = vmatpush1.msra.mxu0 0.0
    %1560 = vmatprep.subr.mxu0 0.0
    %1561 = vmatpush1.msra.mxu0 0.0
    %1562 = vmatprep.subr.mxu0 0.0
    %1563 = vmatpush1.msra.mxu0 0.0
    %1564 = vmatprep.subr.mxu0 0.0
    %1565 = vmatpush1.msra.mxu0 0.0
    %1566 = vmatprep.subr.mxu0 0.0
    %1567 = vmatpush1.msra.mxu0 0.0
    %1568 = vmatprep.subr.mxu0 0.0
    %1569 = vmatpush1.msra.mxu0 0.0
    %1570 = vmatprep.subr.mxu0 0.0
    %1571 = vmatpush1.msra.mxu0 0.0
    %1572 = vmatprep.subr.mxu0 0.0
    %1573 = vmatpush1.msra.mxu0 0.0
    %1574 = vmatprep.subr.mxu0 0.0
    %1575 = vmatpush1.msra.mxu0 0.0
    %1576 = vmatprep.subr.mxu0 %v431
    %1577 = vmatpush1.msra.mxu0 %v430
    %1578 = vmatprep.subr.mxu0 %v428
    %1579 = vmatpush1.msra.mxu0 %v427
    %1580 = vmatprep.subr.mxu0 %v425
    %1581 = vmatpush1.msra.mxu0 %v424
    %1582 = vmatprep.subr.mxu0 %v422
    %1583 = vmatpush1.msra.mxu0 %v421
    %1584 = vmatprep.subr.mxu0 0.0
    %1585 = vmatpush2.msra.mxu0 0.0
    %1586 = vmatprep.subr.mxu0 0.0
    %1587 = vmatpush2.msra.mxu0 0.0
    %1588 = vmatprep.subr.mxu0 0.0
    %1589 = vmatpush2.msra.mxu0 0.0
    %1590 = vmatprep.subr.mxu0 0.0
    %1591 = vmatpush2.msra.mxu0 0.0
    %1592 = vmatprep.subr.mxu0 0.0
    %1593 = vmatpush2.msra.mxu0 0.0
    %1594 = vmatprep.subr.mxu0 0.0
    %1595 = vmatpush2.msra.mxu0 0.0
    %1596 = vmatprep.subr.mxu0 0.0
    %1597 = vmatpush2.msra.mxu0 0.0
    %1598 = vmatprep.subr.mxu0 0.0
    %1599 = vmatpush2.msra.mxu0 0.0
    %1600 = vmatprep.subr.mxu0 0.0
    %1601 = vmatpush2.msra.mxu0 0.0
    %1602 = vmatprep.subr.mxu0 0.0
    %1603 = vmatpush2.msra.mxu0 0.0
    %1604 = vmatprep.subr.mxu0 0.0
    %1605 = vmatpush2.msra.mxu0 0.0
    %1606 = vmatprep.subr.mxu0 0.0
    %1607 = vmatpush2.msra.mxu0 0.0
    %1608 = vmatprep.subr.mxu0 0.0
    %1609 = vmatpush2.msra.mxu0 0.0
    %1610 = vmatprep.subr.mxu0 0.0
    %1611 = vmatpush2.msra.mxu0 0.0
    %1612 = vmatprep.subr.mxu0 0.0
    %1613 = vmatpush2.msra.mxu0 0.0
    %1614 = vmatprep.subr.mxu0 0.0
    %1615 = vmatpush2.msra.mxu0 0.0
    %1616 = vmatprep.mubr.f32.mxu0 0.0
    %1617 = vmatmul.mubr.f32.gmra.mxu0 %v1550
    %v1618 = vpop.f32.mrf.mxu0
    %v1619 = vadd.f32 %v610, %v1618
    %v1620 = vpop.f32.mrf.mxu0
    %v1621 = vadd.f32 %v614, %v1620
    %1622 = vdwg.mxu0
    %1623 = vmatprep.subr.mxu0 0.0
    %1624 = vmatpush1.msra.mxu0 0.0
    %1625 = vmatprep.subr.mxu0 0.0
    %1626 = vmatpush1.msra.mxu0 0.0
    %1627 = vmatprep.subr.mxu0 0.0
    %1628 = vmatpush1.msra.mxu0 0.0
    %1629 = vmatprep.subr.mxu0 0.0
    %1630 = vmatpush1.msra.mxu0 0.0
    %1631 = vmatprep.subr.mxu0 0.0
    %1632 = vmatpush1.msra.mxu0 0.0
    %1633 = vmatprep.subr.mxu0 0.0
    %1634 = vmatpush1.msra.mxu0 0.0
    %1635 = vmatprep.subr.mxu0 0.0
    %1636 = vmatpush1.msra.mxu0 0.0
    %1637 = vmatprep.subr.mxu0 0.0
    %1638 = vmatpush1.msra.mxu0 0.0
    %1639 = vmatprep.subr.mxu0 0.0
    %1640 = vmatpush1.msra.mxu0 0.0
    %1641 = vmatprep.subr.mxu0 0.0
    %1642 = vmatpush1.msra.mxu0 0.0
    %1643 = vmatprep.subr.mxu0 0.0
    %1644 = vmatpush1.msra.mxu0 0.0
    %1645 = vmatprep.subr.mxu0 0.0
    %1646 = vmatpush1.msra.mxu0 0.0
    %1647 = vmatprep.subr.mxu0 0.0
    %1648 = vmatpush1.msra.mxu0 %v432
    %1649 = vmatprep.subr.mxu0 0.0
    %1650 = vmatpush1.msra.mxu0 %v429
    %1651 = vmatprep.subr.mxu0 0.0
    %1652 = vmatpush1.msra.mxu0 %v426
    %1653 = vmatprep.subr.mxu0 0.0
    %1654 = vmatpush1.msra.mxu0 %v423
    %1655 = vmatprep.subr.mxu0 0.0
    %1656 = vmatpush2.msra.mxu0 0.0
    %1657 = vmatprep.subr.mxu0 0.0
    %1658 = vmatpush2.msra.mxu0 0.0
    %1659 = vmatprep.subr.mxu0 0.0
    %1660 = vmatpush2.msra.mxu0 0.0
    %1661 = vmatprep.subr.mxu0 0.0
    %1662 = vmatpush2.msra.mxu0 0.0
    %1663 = vmatprep.subr.mxu0 0.0
    %1664 = vmatpush2.msra.mxu0 0.0
    %1665 = vmatprep.subr.mxu0 0.0
    %1666 = vmatpush2.msra.mxu0 0.0
    %1667 = vmatprep.subr.mxu0 0.0
    %1668 = vmatpush2.msra.mxu0 0.0
    %1669 = vmatprep.subr.mxu0 0.0
    %1670 = vmatpush2.msra.mxu0 0.0
    %1671 = vmatprep.subr.mxu0 0.0
    %1672 = vmatpush2.msra.mxu0 0.0
    %1673 = vmatprep.subr.mxu0 0.0
    %1674 = vmatpush2.msra.mxu0 0.0
    %1675 = vmatprep.subr.mxu0 0.0
    %1676 = vmatpush2.msra.mxu0 0.0
    %1677 = vmatprep.subr.mxu0 0.0
    %1678 = vmatpush2.msra.mxu0 0.0
    %1679 = vmatprep.subr.mxu0 0.0
    %1680 = vmatpush2.msra.mxu0 0.0
    %1681 = vmatprep.subr.mxu0 0.0
    %1682 = vmatpush2.msra.mxu0 0.0
    %1683 = vmatprep.subr.mxu0 0.0
    %1684 = vmatpush2.msra.mxu0 0.0
    %1685 = vmatprep.subr.mxu0 0.0
    %1686 = vmatpush2.msra.mxu0 0.0
    %1687 = vmatprep.mubr.f32.mxu0 0.0
    %1688 = vmatmul.mubr.f32.gmra.mxu0 %v1550
    %v1689 = vpop.f32.mrf.mxu0
    %v1690 = vadd.f32 %v618, %v1689
    %v1691 = vpop.f32.mrf.mxu0
    %1692 = vdwg.mxu0
    %1693 = vst [vmem:[#allocation2 + $0x48] sm:$0xff] %v1619
    %1694 = vst [vmem:[#allocation2 + $0x50] sm:$0xff] %v1621
    %1695 = vst [vmem:[#allocation2 + $0x58] sm:$0xff] %v1690
    %v1696 = vld [vmem:[#allocation2 + $0x60] sm:$0xff]
    %v1697 = vld [vmem:[#allocation2 + $0x68] sm:$0xff]
    %v1698 = vld [vmem:[#allocation2 + $0x70] sm:$0xff]
    %1699 = vmatprep.subr.mxu0 0.0
    %1700 = vmatpush1.msra.mxu0 0.0
    %1701 = vmatprep.subr.mxu0 0.0
    %1702 = vmatpush1.msra.mxu0 0.0
    %1703 = vmatprep.subr.mxu0 0.0
    %1704 = vmatpush1.msra.mxu0 0.0
    %1705 = vmatprep.subr.mxu0 0.0
    %1706 = vmatpush1.msra.mxu0 0.0
    %1707 = vmatprep.subr.mxu0 0.0
    %1708 = vmatpush1.msra.mxu0 0.0
    %1709 = vmatprep.subr.mxu0 0.0
    %1710 = vmatpush1.msra.mxu0 0.0
    %1711 = vmatprep.subr.mxu0 0.0
    %1712 = vmatpush1.msra.mxu0 0.0
    %1713 = vmatprep.subr.mxu0 0.0
    %1714 = vmatpush1.msra.mxu0 0.0
    %1715 = vmatprep.subr.mxu0 0.0
    %1716 = vmatpush1.msra.mxu0 0.0
    %1717 = vmatprep.subr.mxu0 0.0
    %1718 = vmatpush1.msra.mxu0 0.0
    %1719 = vmatprep.subr.mxu0 0.0
    %1720 = vmatpush1.msra.mxu0 0.0
    %1721 = vmatprep.subr.mxu0 0.0
    %1722 = vmatpush1.msra.mxu0 0.0
    %1723 = vmatprep.subr.mxu0 %v417
    %1724 = vmatpush1.msra.mxu0 %v416
    %1725 = vmatprep.subr.mxu0 %v414
    %1726 = vmatpush1.msra.mxu0 %v413
    %1727 = vmatprep.subr.mxu0 %v411
    %1728 = vmatpush1.msra.mxu0 %v410
    %1729 = vmatprep.subr.mxu0 %v408
    %1730 = vmatpush1.msra.mxu0 %v407
    %1731 = vmatprep.subr.mxu0 0.0
    %1732 = vmatpush2.msra.mxu0 0.0
    %1733 = vmatprep.subr.mxu0 0.0
    %1734 = vmatpush2.msra.mxu0 0.0
    %1735 = vmatprep.subr.mxu0 0.0
    %1736 = vmatpush2.msra.mxu0 0.0
    %1737 = vmatprep.subr.mxu0 0.0
    %1738 = vmatpush2.msra.mxu0 0.0
    %1739 = vmatprep.subr.mxu0 0.0
    %1740 = vmatpush2.msra.mxu0 0.0
    %1741 = vmatprep.subr.mxu0 0.0
    %1742 = vmatpush2.msra.mxu0 0.0
    %1743 = vmatprep.subr.mxu0 0.0
    %1744 = vmatpush2.msra.mxu0 0.0
    %1745 = vmatprep.subr.mxu0 0.0
    %1746 = vmatpush2.msra.mxu0 0.0
    %1747 = vmatprep.subr.mxu0 0.0
    %1748 = vmatpush2.msra.mxu0 0.0
    %1749 = vmatprep.subr.mxu0 0.0
    %1750 = vmatpush2.msra.mxu0 0.0
    %1751 = vmatprep.subr.mxu0 0.0
    %1752 = vmatpush2.msra.mxu0 0.0
    %1753 = vmatprep.subr.mxu0 0.0
    %1754 = vmatpush2.msra.mxu0 0.0
    %1755 = vmatprep.subr.mxu0 0.0
    %1756 = vmatpush2.msra.mxu0 0.0
    %1757 = vmatprep.subr.mxu0 0.0
    %1758 = vmatpush2.msra.mxu0 0.0
    %1759 = vmatprep.subr.mxu0 0.0
    %1760 = vmatpush2.msra.mxu0 0.0
    %1761 = vmatprep.subr.mxu0 0.0
    %1762 = vmatpush2.msra.mxu0 0.0
    %1763 = vmatprep.mubr.f32.mxu0 0.0
    %1764 = vmatmul.mubr.f32.gmra.mxu0 %v1550
    %v1765 = vpop.f32.mrf.mxu0
    %v1766 = vadd.f32 0.0, %v1765
    %v1767 = vpop.f32.mrf.mxu0
    %v1768 = vadd.f32 0.0, %v1767
    %1769 = vdwg.mxu0
    %1770 = vmatprep.subr.mxu0 0.0
    %1771 = vmatpush1.msra.mxu0 0.0
    %1772 = vmatprep.subr.mxu0 0.0
    %1773 = vmatpush1.msra.mxu0 0.0
    %1774 = vmatprep.subr.mxu0 0.0
    %1775 = vmatpush1.msra.mxu0 0.0
    %1776 = vmatprep.subr.mxu0 0.0
    %1777 = vmatpush1.msra.mxu0 0.0
    %1778 = vmatprep.subr.mxu0 0.0
    %1779 = vmatpush1.msra.mxu0 0.0
    %1780 = vmatprep.subr.mxu0 0.0
    %1781 = vmatpush1.msra.mxu0 0.0
    %1782 = vmatprep.subr.mxu0 0.0
    %1783 = vmatpush1.msra.mxu0 0.0
    %1784 = vmatprep.subr.mxu0 0.0
    %1785 = vmatpush1.msra.mxu0 0.0
    %1786 = vmatprep.subr.mxu0 0.0
    %1787 = vmatpush1.msra.mxu0 0.0
    %1788 = vmatprep.subr.mxu0 0.0
    %1789 = vmatpush1.msra.mxu0 0.0
    %1790 = vmatprep.subr.mxu0 0.0
    %1791 = vmatpush1.msra.mxu0 0.0
    %1792 = vmatprep.subr.mxu0 0.0
    %1793 = vmatpush1.msra.mxu0 0.0
    %1794 = vmatprep.subr.mxu0 0.0
    %1795 = vmatpush1.msra.mxu0 %v418
    %1796 = vmatprep.subr.mxu0 0.0
    %1797 = vmatpush1.msra.mxu0 %v415
    %1798 = vmatprep.subr.mxu0 0.0
    %1799 = vmatpush1.msra.mxu0 %v412
    %1800 = vmatprep.subr.mxu0 0.0
    %1801 = vmatpush1.msra.mxu0 %v409
    %1802 = vmatprep.subr.mxu0 0.0
    %1803 = vmatpush2.msra.mxu0 0.0
    %1804 = vmatprep.subr.mxu0 0.0
    %1805 = vmatpush2.msra.mxu0 0.0
    %1806 = vmatprep.subr.mxu0 0.0
    %1807 = vmatpush2.msra.mxu0 0.0
    %1808 = vmatprep.subr.mxu0 0.0
    %1809 = vmatpush2.msra.mxu0 0.0
    %1810 = vmatprep.subr.mxu0 0.0
    %1811 = vmatpush2.msra.mxu0 0.0
    %1812 = vmatprep.subr.mxu0 0.0
    %1813 = vmatpush2.msra.mxu0 0.0
    %1814 = vmatprep.subr.mxu0 0.0
    %1815 = vmatpush2.msra.mxu0 0.0
    %1816 = vmatprep.subr.mxu0 0.0
    %1817 = vmatpush2.msra.mxu0 0.0
    %1818 = vmatprep.subr.mxu0 0.0
    %1819 = vmatpush2.msra.mxu0 0.0
    %1820 = vmatprep.subr.mxu0 0.0
    %1821 = vmatpush2.msra.mxu0 0.0
    %1822 = vmatprep.subr.mxu0 0.0
    %1823 = vmatpush2.msra.mxu0 0.0
    %1824 = vmatprep.subr.mxu0 0.0
    %1825 = vmatpush2.msra.mxu0 0.0
    %1826 = vmatprep.subr.mxu0 0.0
    %1827 = vmatpush2.msra.mxu0 0.0
    %1828 = vmatprep.subr.mxu0 0.0
    %1829 = vmatpush2.msra.mxu0 0.0
    %1830 = vmatprep.subr.mxu0 0.0
    %1831 = vmatpush2.msra.mxu0 0.0
    %1832 = vmatprep.subr.mxu0 0.0
    %1833 = vmatpush2.msra.mxu0 0.0
    %1834 = vmatprep.mubr.f32.mxu0 0.0
    %1835 = vmatmul.mubr.f32.gmra.mxu0 %v1550
    %v1836 = vpop.f32.mrf.mxu0
    %v1837 = vadd.f32 0.0, %v1836
    %v1838 = vpop.f32.mrf.mxu0
    %1839 = vdwg.mxu0
    %v1840 = vadd.f32 %v1696, %v1766
    %v1841 = vadd.f32 %v1697, %v1768
    %v1842 = vmul.f32 %v1840, 0.5
    %v1843 = vtanh.pop %v1842
    %v1844 = vmul.f32 %v1843, 0.5
    %v1845 = vadd.f32 %v1844, 0.5
    %v1846 = vmul.f32 %v1841, 0.5
    %v1847 = vtanh.pop %v1846
    %v1848 = vmul.f32 %v1847, 0.5
    %v1849 = vadd.f32 %v1848, 0.5
    %v1850 = vadd.f32 %v1837, %v596
    %v1851 = vmul.f32 %v1845, %v1850
    %v1852 = vadd.f32 %v1698, %v1851
    %v1853 = vtanh.pop %v1852
    %v1854 = vsub.f32 1.0, %v1849
    %v1855 = vmul.f32 %v1854, %v1853
    %v1856 = vmul.f32 %v1849, %v1548
    %v1857 = vadd.f32 %v1855, %v1856
    %v1859 = vsel %vm437, %v1857, 0
    %1861 = vmatprep.subr.mxu0 0.0
    %1862 = vmatpush1.msra.mxu0 0.0
    %1863 = vmatprep.subr.mxu0 0.0
    %1864 = vmatpush1.msra.mxu0 0.0
    %1865 = vmatprep.subr.mxu0 0.0
    %1866 = vmatpush1.msra.mxu0 0.0
    %1867 = vmatprep.subr.mxu0 0.0
    %1868 = vmatpush1.msra.mxu0 0.0
    %1869 = vmatprep.subr.mxu0 0.0
    %1870 = vmatpush1.msra.mxu0 0.0
    %1871 = vmatprep.subr.mxu0 0.0
    %1872 = vmatpush1.msra.mxu0 0.0
    %1873 = vmatprep.subr.mxu0 0.0
    %1874 = vmatpush1.msra.mxu0 0.0
    %1875 = vmatprep.subr.mxu0 0.0
    %1876 = vmatpush1.msra.mxu0 0.0
    %1877 = vmatprep.subr.mxu0 0.0
    %1878 = vmatpush1.msra.mxu0 0.0
    %1879 = vmatprep.subr.mxu0 0.0
    %1880 = vmatpush1.msra.mxu0 0.0
    %1881 = vmatprep.subr.mxu0 0.0
    %1882 = vmatpush1.msra.mxu0 0.0
    %1883 = vmatprep.subr.mxu0 0.0
    %1884 = vmatpush1.msra.mxu0 0.0
    %1885 = vmatprep.subr.mxu0 %v431
    %1886 = vmatpush1.msra.mxu0 %v430
    %1887 = vmatprep.subr.mxu0 %v428
    %1888 = vmatpush1.msra.mxu0 %v427
    %1889 = vmatprep.subr.mxu0 %v425
    %1890 = vmatpush1.msra.mxu0 %v424
    %1891 = vmatprep.subr.mxu0 %v422
    %1892 = vmatpush1.msra.mxu0 %v421
    %1893 = vmatprep.subr.mxu0 0.0
    %1894 = vmatpush2.msra.mxu0 0.0
    %1895 = vmatprep.subr.mxu0 0.0
    %1896 = vmatpush2.msra.mxu0 0.0
    %1897 = vmatprep.subr.mxu0 0.0
    %1898 = vmatpush2.msra.mxu0 0.0
    %1899 = vmatprep.subr.mxu0 0.0
    %1900 = vmatpush2.msra.mxu0 0.0
    %1901 = vmatprep.subr.mxu0 0.0
    %1902 = vmatpush2.msra.mxu0 0.0
    %1903 = vmatprep.subr.mxu0 0.0
    %1904 = vmatpush2.msra.mxu0 0.0
    %1905 = vmatprep.subr.mxu0 0.0
    %1906 = vmatpush2.msra.mxu0 0.0
    %1907 = vmatprep.subr.mxu0 0.0
    %1908 = vmatpush2.msra.mxu0 0.0
    %1909 = vmatprep.subr.mxu0 0.0
    %1910 = vmatpush2.msra.mxu0 0.0
    %1911 = vmatprep.subr.mxu0 0.0
    %1912 = vmatpush2.msra.mxu0 0.0
    %1913 = vmatprep.subr.mxu0 0.0
    %1914 = vmatpush2.msra.mxu0 0.0
    %1915 = vmatprep.subr.mxu0 0.0
    %1916 = vmatpush2.msra.mxu0 0.0
    %1917 = vmatprep.subr.mxu0 0.0
    %1918 = vmatpush2.msra.mxu0 0.0
    %1919 = vmatprep.subr.mxu0 0.0
    %1920 = vmatpush2.msra.mxu0 0.0
    %1921 = vmatprep.subr.mxu0 0.0
    %1922 = vmatpush2.msra.mxu0 0.0
    %1923 = vmatprep.subr.mxu0 0.0
    %1924 = vmatpush2.msra.mxu0 0.0
    %1925 = vmatprep.mubr.f32.mxu0 0.0
    %1926 = vmatmul.mubr.f32.gmra.mxu0 %v1859
    %v1927 = vpop.f32.mrf.mxu0
    %v1928 = vadd.f32 %v610, %v1927
    %v1929 = vpop.f32.mrf.mxu0
    %v1930 = vadd.f32 %v614, %v1929
    %1931 = vdwg.mxu0
    %1932 = vmatprep.subr.mxu0 0.0
    %1933 = vmatpush1.msra.mxu0 0.0
    %1934 = vmatprep.subr.mxu0 0.0
    %1935 = vmatpush1.msra.mxu0 0.0
    %1936 = vmatprep.subr.mxu0 0.0
    %1937 = vmatpush1.msra.mxu0 0.0
    %1938 = vmatprep.subr.mxu0 0.0
    %1939 = vmatpush1.msra.mxu0 0.0
    %1940 = vmatprep.subr.mxu0 0.0
    %1941 = vmatpush1.msra.mxu0 0.0
    %1942 = vmatprep.subr.mxu0 0.0
    %1943 = vmatpush1.msra.mxu0 0.0
    %1944 = vmatprep.subr.mxu0 0.0
    %1945 = vmatpush1.msra.mxu0 0.0
    %1946 = vmatprep.subr.mxu0 0.0
    %1947 = vmatpush1.msra.mxu0 0.0
    %1948 = vmatprep.subr.mxu0 0.0
    %1949 = vmatpush1.msra.mxu0 0.0
    %1950 = vmatprep.subr.mxu0 0.0
    %1951 = vmatpush1.msra.mxu0 0.0
    %1952 = vmatprep.subr.mxu0 0.0
    %1953 = vmatpush1.msra.mxu0 0.0
    %1954 = vmatprep.subr.mxu0 0.0
    %1955 = vmatpush1.msra.mxu0 0.0
    %1956 = vmatprep.subr.mxu0 0.0
    %1957 = vmatpush1.msra.mxu0 %v432
    %1958 = vmatprep.subr.mxu0 0.0
    %1959 = vmatpush1.msra.mxu0 %v429
    %1960 = vmatprep.subr.mxu0 0.0
    %1961 = vmatpush1.msra.mxu0 %v426
    %1962 = vmatprep.subr.mxu0 0.0
    %1963 = vmatpush1.msra.mxu0 %v423
    %1964 = vmatprep.subr.mxu0 0.0
    %1965 = vmatpush2.msra.mxu0 0.0
    %1966 = vmatprep.subr.mxu0 0.0
    %1967 = vmatpush2.msra.mxu0 0.0
    %1968 = vmatprep.subr.mxu0 0.0
    %1969 = vmatpush2.msra.mxu0 0.0
    %1970 = vmatprep.subr.mxu0 0.0
    %1971 = vmatpush2.msra.mxu0 0.0
    %1972 = vmatprep.subr.mxu0 0.0
    %1973 = vmatpush2.msra.mxu0 0.0
    %1974 = vmatprep.subr.mxu0 0.0
    %1975 = vmatpush2.msra.mxu0 0.0
    %1976 = vmatprep.subr.mxu0 0.0
    %1977 = vmatpush2.msra.mxu0 0.0
    %1978 = vmatprep.subr.mxu0 0.0
    %1979 = vmatpush2.msra.mxu0 0.0
    %1980 = vmatprep.subr.mxu0 0.0
    %1981 = vmatpush2.msra.mxu0 0.0
    %1982 = vmatprep.subr.mxu0 0.0
    %1983 = vmatpush2.msra.mxu0 0.0
    %1984 = vmatprep.subr.mxu0 0.0
    %1985 = vmatpush2.msra.mxu0 0.0
    %1986 = vmatprep.subr.mxu0 0.0
    %1987 = vmatpush2.msra.mxu0 0.0
    %1988 = vmatprep.subr.mxu0 0.0
    %1989 = vmatpush2.msra.mxu0 0.0
    %1990 = vmatprep.subr.mxu0 0.0
    %1991 = vmatpush2.msra.mxu0 0.0
    %1992 = vmatprep.subr.mxu0 0.0
    %1993 = vmatpush2.msra.mxu0 0.0
    %1994 = vmatprep.subr.mxu0 0.0
    %1995 = vmatpush2.msra.mxu0 0.0
    %1996 = vmatprep.mubr.f32.mxu0 0.0
    %1997 = vmatmul.mubr.f32.gmra.mxu0 %v1859
    %v1998 = vpop.f32.mrf.mxu0
    %v1999 = vadd.f32 %v618, %v1998
    %v2000 = vpop.f32.mrf.mxu0
    %2001 = vdwg.mxu0
    %2002 = vst [vmem:[#allocation2 + $0x60] sm:$0xff] %v1928
    %2003 = vst [vmem:[#allocation2 + $0x68] sm:$0xff] %v1930
    %2004 = vst [vmem:[#allocation2 + $0x70] sm:$0xff] %v1999
    %v2005 = vld [vmem:[#allocation2 + $0x78] sm:$0xff]
    %v2006 = vld [vmem:[#allocation2 + $0x80] sm:$0xff]
    %v2007 = vld [vmem:[#allocation2 + $0x88] sm:$0xff]
    %2008 = vmatprep.subr.mxu0 0.0
    %2009 = vmatpush1.msra.mxu0 0.0
    %2010 = vmatprep.subr.mxu0 0.0
    %2011 = vmatpush1.msra.mxu0 0.0
    %2012 = vmatprep.subr.mxu0 0.0
    %2013 = vmatpush1.msra.mxu0 0.0
    %2014 = vmatprep.subr.mxu0 0.0
    %2015 = vmatpush1.msra.mxu0 0.0
    %2016 = vmatprep.subr.mxu0 0.0
    %2017 = vmatpush1.msra.mxu0 0.0
    %2018 = vmatprep.subr.mxu0 0.0
    %2019 = vmatpush1.msra.mxu0 0.0
    %2020 = vmatprep.subr.mxu0 0.0
    %2021 = vmatpush1.msra.mxu0 0.0
    %2022 = vmatprep.subr.mxu0 0.0
    %2023 = vmatpush1.msra.mxu0 0.0
    %2024 = vmatprep.subr.mxu0 0.0
    %2025 = vmatpush1.msra.mxu0 0.0
    %2026 = vmatprep.subr.mxu0 0.0
    %2027 = vmatpush1.msra.mxu0 0.0
    %2028 = vmatprep.subr.mxu0 0.0
    %2029 = vmatpush1.msra.mxu0 0.0
    %2030 = vmatprep.subr.mxu0 0.0
    %2031 = vmatpush1.msra.mxu0 0.0
    %2032 = vmatprep.subr.mxu0 %v417
    %2033 = vmatpush1.msra.mxu0 %v416
    %2034 = vmatprep.subr.mxu0 %v414
    %2035 = vmatpush1.msra.mxu0 %v413
    %2036 = vmatprep.subr.mxu0 %v411
    %2037 = vmatpush1.msra.mxu0 %v410
    %2038 = vmatprep.subr.mxu0 %v408
    %2039 = vmatpush1.msra.mxu0 %v407
    %2040 = vmatprep.subr.mxu0 0.0
    %2041 = vmatpush2.msra.mxu0 0.0
    %2042 = vmatprep.subr.mxu0 0.0
    %2043 = vmatpush2.msra.mxu0 0.0
    %2044 = vmatprep.subr.mxu0 0.0
    %2045 = vmatpush2.msra.mxu0 0.0
    %2046 = vmatprep.subr.mxu0 0.0
    %2047 = vmatpush2.msra.mxu0 0.0
    %2048 = vmatprep.subr.mxu0 0.0
    %2049 = vmatpush2.msra.mxu0 0.0
    %2050 = vmatprep.subr.mxu0 0.0
    %2051 = vmatpush2.msra.mxu0 0.0
    %2052 = vmatprep.subr.mxu0 0.0
    %2053 = vmatpush2.msra.mxu0 0.0
    %2054 = vmatprep.subr.mxu0 0.0
    %2055 = vmatpush2.msra.mxu0 0.0
    %2056 = vmatprep.subr.mxu0 0.0
    %2057 = vmatpush2.msra.mxu0 0.0
    %2058 = vmatprep.subr.mxu0 0.0
    %2059 = vmatpush2.msra.mxu0 0.0
    %2060 = vmatprep.subr.mxu0 0.0
    %2061 = vmatpush2.msra.mxu0 0.0
    %2062 = vmatprep.subr.mxu0 0.0
    %2063 = vmatpush2.msra.mxu0 0.0
    %2064 = vmatprep.subr.mxu0 0.0
    %2065 = vmatpush2.msra.mxu0 0.0
    %2066 = vmatprep.subr.mxu0 0.0
    %2067 = vmatpush2.msra.mxu0 0.0
    %2068 = vmatprep.subr.mxu0 0.0
    %2069 = vmatpush2.msra.mxu0 0.0
    %2070 = vmatprep.subr.mxu0 0.0
    %2071 = vmatpush2.msra.mxu0 0.0
    %2072 = vmatprep.mubr.f32.mxu0 0.0
    %2073 = vmatmul.mubr.f32.gmra.mxu0 %v1859
    %v2074 = vpop.f32.mrf.mxu0
    %v2075 = vadd.f32 0.0, %v2074
    %v2076 = vpop.f32.mrf.mxu0
    %v2077 = vadd.f32 0.0, %v2076
    %2078 = vdwg.mxu0
    %2079 = vmatprep.subr.mxu0 0.0
    %2080 = vmatpush1.msra.mxu0 0.0
    %2081 = vmatprep.subr.mxu0 0.0
    %2082 = vmatpush1.msra.mxu0 0.0
    %2083 = vmatprep.subr.mxu0 0.0
    %2084 = vmatpush1.msra.mxu0 0.0
    %2085 = vmatprep.subr.mxu0 0.0
    %2086 = vmatpush1.msra.mxu0 0.0
    %2087 = vmatprep.subr.mxu0 0.0
    %2088 = vmatpush1.msra.mxu0 0.0
    %2089 = vmatprep.subr.mxu0 0.0
    %2090 = vmatpush1.msra.mxu0 0.0
    %2091 = vmatprep.subr.mxu0 0.0
    %2092 = vmatpush1.msra.mxu0 0.0
    %2093 = vmatprep.subr.mxu0 0.0
    %2094 = vmatpush1.msra.mxu0 0.0
    %2095 = vmatprep.subr.mxu0 0.0
    %2096 = vmatpush1.msra.mxu0 0.0
    %2097 = vmatprep.subr.mxu0 0.0
    %2098 = vmatpush1.msra.mxu0 0.0
    %2099 = vmatprep.subr.mxu0 0.0
    %2100 = vmatpush1.msra.mxu0 0.0
    %2101 = vmatprep.subr.mxu0 0.0
    %2102 = vmatpush1.msra.mxu0 0.0
    %2103 = vmatprep.subr.mxu0 0.0
    %2104 = vmatpush1.msra.mxu0 %v418
    %2105 = vmatprep.subr.mxu0 0.0
    %2106 = vmatpush1.msra.mxu0 %v415
    %2107 = vmatprep.subr.mxu0 0.0
    %2108 = vmatpush1.msra.mxu0 %v412
    %2109 = vmatprep.subr.mxu0 0.0
    %2110 = vmatpush1.msra.mxu0 %v409
    %2111 = vmatprep.subr.mxu0 0.0
    %2112 = vmatpush2.msra.mxu0 0.0
    %2113 = vmatprep.subr.mxu0 0.0
    %2114 = vmatpush2.msra.mxu0 0.0
    %2115 = vmatprep.subr.mxu0 0.0
    %2116 = vmatpush2.msra.mxu0 0.0
    %2117 = vmatprep.subr.mxu0 0.0
    %2118 = vmatpush2.msra.mxu0 0.0
    %2119 = vmatprep.subr.mxu0 0.0
    %2120 = vmatpush2.msra.mxu0 0.0
    %2121 = vmatprep.subr.mxu0 0.0
    %2122 = vmatpush2.msra.mxu0 0.0
    %2123 = vmatprep.subr.mxu0 0.0
    %2124 = vmatpush2.msra.mxu0 0.0
    %2125 = vmatprep.subr.mxu0 0.0
    %2126 = vmatpush2.msra.mxu0 0.0
    %2127 = vmatprep.subr.mxu0 0.0
    %2128 = vmatpush2.msra.mxu0 0.0
    %2129 = vmatprep.subr.mxu0 0.0
    %2130 = vmatpush2.msra.mxu0 0.0
    %2131 = vmatprep.subr.mxu0 0.0
    %2132 = vmatpush2.msra.mxu0 0.0
    %2133 = vmatprep.subr.mxu0 0.0
    %2134 = vmatpush2.msra.mxu0 0.0
    %2135 = vmatprep.subr.mxu0 0.0
    %2136 = vmatpush2.msra.mxu0 0.0
    %2137 = vmatprep.subr.mxu0 0.0
    %2138 = vmatpush2.msra.mxu0 0.0
    %2139 = vmatprep.subr.mxu0 0.0
    %2140 = vmatpush2.msra.mxu0 0.0
    %2141 = vmatprep.subr.mxu0 0.0
    %2142 = vmatpush2.msra.mxu0 0.0
    %2143 = vmatprep.mubr.f32.mxu0 0.0
    %2144 = vmatmul.mubr.f32.gmra.mxu0 %v1859
    %v2145 = vpop.f32.mrf.mxu0
    %v2146 = vadd.f32 0.0, %v2145
    %v2147 = vpop.f32.mrf.mxu0
    %2148 = vdwg.mxu0
    %v2149 = vadd.f32 %v2005, %v2075
    %v2150 = vadd.f32 %v2006, %v2077
    %v2151 = vmul.f32 %v2149, 0.5
    %v2152 = vtanh.pop %v2151
    %v2153 = vmul.f32 %v2152, 0.5
    %v2154 = vadd.f32 %v2153, 0.5
    %v2155 = vmul.f32 %v2150, 0.5
    %v2156 = vtanh.pop %v2155
    %v2157 = vmul.f32 %v2156, 0.5
    %v2158 = vadd.f32 %v2157, 0.5
    %v2159 = vadd.f32 %v2146, %v596
    %v2160 = vmul.f32 %v2154, %v2159
    %v2161 = vadd.f32 %v2007, %v2160
    %v2162 = vtanh.pop %v2161
    %v2163 = vsub.f32 1.0, %v2158
    %v2164 = vmul.f32 %v2163, %v2162
    %v2165 = vmul.f32 %v2158, %v1857
    %v2166 = vadd.f32 %v2164, %v2165
    %v2168 = vsel %vm437, %v2166, 0
    %2170 = vmatprep.subr.mxu0 0.0
    %2171 = vmatpush1.msra.mxu0 0.0
    %2172 = vmatprep.subr.mxu0 0.0
    %2173 = vmatpush1.msra.mxu0 0.0
    %2174 = vmatprep.subr.mxu0 0.0
    %2175 = vmatpush1.msra.mxu0 0.0
    %2176 = vmatprep.subr.mxu0 0.0
    %2177 = vmatpush1.msra.mxu0 0.0
    %2178 = vmatprep.subr.mxu0 0.0
    %2179 = vmatpush1.msra.mxu0 0.0
    %2180 = vmatprep.subr.mxu0 0.0
    %2181 = vmatpush1.msra.mxu0 0.0
    %2182 = vmatprep.subr.mxu0 0.0
    %2183 = vmatpush1.msra.mxu0 0.0
    %2184 = vmatprep.subr.mxu0 0.0
    %2185 = vmatpush1.msra.mxu0 0.0
    %2186 = vmatprep.subr.mxu0 0.0
    %2187 = vmatpush1.msra.mxu0 0.0
    %2188 = vmatprep.subr.mxu0 0.0
    %2189 = vmatpush1.msra.mxu0 0.0
    %2190 = vmatprep.subr.mxu0 0.0
    %2191 = vmatpush1.msra.mxu0 0.0
    %2192 = vmatprep.subr.mxu0 0.0
    %2193 = vmatpush1.msra.mxu0 0.0
    %2194 = vmatprep.subr.mxu0 %v431
    %2195 = vmatpush1.msra.mxu0 %v430
    %2196 = vmatprep.subr.mxu0 %v428
    %2197 = vmatpush1.msra.mxu0 %v427
    %2198 = vmatprep.subr.mxu0 %v425
    %2199 = vmatpush1.msra.mxu0 %v424
    %2200 = vmatprep.subr.mxu0 %v422
    %2201 = vmatpush1.msra.mxu0 %v421
    %2202 = vmatprep.subr.mxu0 0.0
    %2203 = vmatpush2.msra.mxu0 0.0
    %2204 = vmatprep.subr.mxu0 0.0
    %2205 = vmatpush2.msra.mxu0 0.0
    %2206 = vmatprep.subr.mxu0 0.0
    %2207 = vmatpush2.msra.mxu0 0.0
    %2208 = vmatprep.subr.mxu0 0.0
    %2209 = vmatpush2.msra.mxu0 0.0
    %2210 = vmatprep.subr.mxu0 0.0
    %2211 = vmatpush2.msra.mxu0 0.0
    %2212 = vmatprep.subr.mxu0 0.0
    %2213 = vmatpush2.msra.mxu0 0.0
    %2214 = vmatprep.subr.mxu0 0.0
    %2215 = vmatpush2.msra.mxu0 0.0
    %2216 = vmatprep.subr.mxu0 0.0
    %2217 = vmatpush2.msra.mxu0 0.0
    %2218 = vmatprep.subr.mxu0 0.0
    %2219 = vmatpush2.msra.mxu0 0.0
    %2220 = vmatprep.subr.mxu0 0.0
    %2221 = vmatpush2.msra.mxu0 0.0
    %2222 = vmatprep.subr.mxu0 0.0
    %2223 = vmatpush2.msra.mxu0 0.0
    %2224 = vmatprep.subr.mxu0 0.0
    %2225 = vmatpush2.msra.mxu0 0.0
    %2226 = vmatprep.subr.mxu0 0.0
    %2227 = vmatpush2.msra.mxu0 0.0
    %2228 = vmatprep.subr.mxu0 0.0
    %2229 = vmatpush2.msra.mxu0 0.0
    %2230 = vmatprep.subr.mxu0 0.0
    %2231 = vmatpush2.msra.mxu0 0.0
    %2232 = vmatprep.subr.mxu0 0.0
    %2233 = vmatpush2.msra.mxu0 0.0
    %2234 = vmatprep.mubr.f32.mxu0 0.0
    %2235 = vmatmul.mubr.f32.gmra.mxu0 %v2168
    %v2236 = vpop.f32.mrf.mxu0
    %v2237 = vadd.f32 %v610, %v2236
    %v2238 = vpop.f32.mrf.mxu0
    %v2239 = vadd.f32 %v614, %v2238
    %2240 = vdwg.mxu0
    %2241 = vmatprep.subr.mxu0 0.0
    %2242 = vmatpush1.msra.mxu0 0.0
    %2243 = vmatprep.subr.mxu0 0.0
    %2244 = vmatpush1.msra.mxu0 0.0
    %2245 = vmatprep.subr.mxu0 0.0
    %2246 = vmatpush1.msra.mxu0 0.0
    %2247 = vmatprep.subr.mxu0 0.0
    %2248 = vmatpush1.msra.mxu0 0.0
    %2249 = vmatprep.subr.mxu0 0.0
    %2250 = vmatpush1.msra.mxu0 0.0
    %2251 = vmatprep.subr.mxu0 0.0
    %2252 = vmatpush1.msra.mxu0 0.0
    %2253 = vmatprep.subr.mxu0 0.0
    %2254 = vmatpush1.msra.mxu0 0.0
    %2255 = vmatprep.subr.mxu0 0.0
    %2256 = vmatpush1.msra.mxu0 0.0
    %2257 = vmatprep.subr.mxu0 0.0
    %2258 = vmatpush1.msra.mxu0 0.0
    %2259 = vmatprep.subr.mxu0 0.0
    %2260 = vmatpush1.msra.mxu0 0.0
    %2261 = vmatprep.subr.mxu0 0.0
    %2262 = vmatpush1.msra.mxu0 0.0
    %2263 = vmatprep.subr.mxu0 0.0
    %2264 = vmatpush1.msra.mxu0 0.0
    %2265 = vmatprep.subr.mxu0 0.0
    %2266 = vmatpush1.msra.mxu0 %v432
    %2267 = vmatprep.subr.mxu0 0.0
    %2268 = vmatpush1.msra.mxu0 %v429
    %2269 = vmatprep.subr.mxu0 0.0
    %2270 = vmatpush1.msra.mxu0 %v426
    %2271 = vmatprep.subr.mxu0 0.0
    %2272 = vmatpush1.msra.mxu0 %v423
    %2273 = vmatprep.subr.mxu0 0.0
    %2274 = vmatpush2.msra.mxu0 0.0
    %2275 = vmatprep.subr.mxu0 0.0
    %2276 = vmatpush2.msra.mxu0 0.0
    %2277 = vmatprep.subr.mxu0 0.0
    %2278 = vmatpush2.msra.mxu0 0.0
    %2279 = vmatprep.subr.mxu0 0.0
    %2280 = vmatpush2.msra.mxu0 0.0
    %2281 = vmatprep.subr.mxu0 0.0
    %2282 = vmatpush2.msra.mxu0 0.0
    %2283 = vmatprep.subr.mxu0 0.0
    %2284 = vmatpush2.msra.mxu0 0.0
    %2285 = vmatprep.subr.mxu0 0.0
    %2286 = vmatpush2.msra.mxu0 0.0
    %2287 = vmatprep.subr.mxu0 0.0
    %2288 = vmatpush2.msra.mxu0 0.0
    %2289 = vmatprep.subr.mxu0 0.0
    %2290 = vmatpush2.msra.mxu0 0.0
    %2291 = vmatprep.subr.mxu0 0.0
    %2292 = vmatpush2.msra.mxu0 0.0
    %2293 = vmatprep.subr.mxu0 0.0
    %2294 = vmatpush2.msra.mxu0 0.0
    %2295 = vmatprep.subr.mxu0 0.0
    %2296 = vmatpush2.msra.mxu0 0.0
    %2297 = vmatprep.subr.mxu0 0.0
    %2298 = vmatpush2.msra.mxu0 0.0
    %2299 = vmatprep.subr.mxu0 0.0
    %2300 = vmatpush2.msra.mxu0 0.0
    %2301 = vmatprep.subr.mxu0 0.0
    %2302 = vmatpush2.msra.mxu0 0.0
    %2303 = vmatprep.subr.mxu0 0.0
    %2304 = vmatpush2.msra.mxu0 0.0
    %2305 = vmatprep.mubr.f32.mxu0 0.0
    %2306 = vmatmul.mubr.f32.gmra.mxu0 %v2168
    %v2307 = vpop.f32.mrf.mxu0
    %v2308 = vadd.f32 %v618, %v2307
    %v2309 = vpop.f32.mrf.mxu0
    %2310 = vdwg.mxu0
    %2311 = vst [vmem:[#allocation2 + $0x78] sm:$0xff] %v2237
    %2312 = vst [vmem:[#allocation2 + $0x80] sm:$0xff] %v2239
    %2313 = vst [vmem:[#allocation2 + $0x88] sm:$0xff] %v2308
    %v2314 = vld [vmem:[#allocation2 + $0x90] sm:$0xff]
    %v2315 = vld [vmem:[#allocation2 + $0x98] sm:$0xff]
    %v2316 = vld [vmem:[#allocation2 + $0xa0] sm:$0xff]
    %2317 = vmatprep.subr.mxu0 0.0
    %2318 = vmatpush1.msra.mxu0 0.0
    %2319 = vmatprep.subr.mxu0 0.0
    %2320 = vmatpush1.msra.mxu0 0.0
    %2321 = vmatprep.subr.mxu0 0.0
    %2322 = vmatpush1.msra.mxu0 0.0
    %2323 = vmatprep.subr.mxu0 0.0
    %2324 = vmatpush1.msra.mxu0 0.0
    %2325 = vmatprep.subr.mxu0 0.0
    %2326 = vmatpush1.msra.mxu0 0.0
    %2327 = vmatprep.subr.mxu0 0.0
    %2328 = vmatpush1.msra.mxu0 0.0
    %2329 = vmatprep.subr.mxu0 0.0
    %2330 = vmatpush1.msra.mxu0 0.0
    %2331 = vmatprep.subr.mxu0 0.0
    %2332 = vmatpush1.msra.mxu0 0.0
    %2333 = vmatprep.subr.mxu0 0.0
    %2334 = vmatpush1.msra.mxu0 0.0
    %2335 = vmatprep.subr.mxu0 0.0
    %2336 = vmatpush1.msra.mxu0 0.0
    %2337 = vmatprep.subr.mxu0 0.0
    %2338 = vmatpush1.msra.mxu0 0.0
    %2339 = vmatprep.subr.mxu0 0.0
    %2340 = vmatpush1.msra.mxu0 0.0
    %2341 = vmatprep.subr.mxu0 %v417
    %2342 = vmatpush1.msra.mxu0 %v416
    %2343 = vmatprep.subr.mxu0 %v414
    %2344 = vmatpush1.msra.mxu0 %v413
    %2345 = vmatprep.subr.mxu0 %v411
    %2346 = vmatpush1.msra.mxu0 %v410
    %2347 = vmatprep.subr.mxu0 %v408
    %2348 = vmatpush1.msra.mxu0 %v407
    %2349 = vmatprep.subr.mxu0 0.0
    %2350 = vmatpush2.msra.mxu0 0.0
    %2351 = vmatprep.subr.mxu0 0.0
    %2352 = vmatpush2.msra.mxu0 0.0
    %2353 = vmatprep.subr.mxu0 0.0
    %2354 = vmatpush2.msra.mxu0 0.0
    %2355 = vmatprep.subr.mxu0 0.0
    %2356 = vmatpush2.msra.mxu0 0.0
    %2357 = vmatprep.subr.mxu0 0.0
    %2358 = vmatpush2.msra.mxu0 0.0
    %2359 = vmatprep.subr.mxu0 0.0
    %2360 = vmatpush2.msra.mxu0 0.0
    %2361 = vmatprep.subr.mxu0 0.0
    %2362 = vmatpush2.msra.mxu0 0.0
    %2363 = vmatprep.subr.mxu0 0.0
    %2364 = vmatpush2.msra.mxu0 0.0
    %2365 = vmatprep.subr.mxu0 0.0
    %2366 = vmatpush2.msra.mxu0 0.0
    %2367 = vmatprep.subr.mxu0 0.0
    %2368 = vmatpush2.msra.mxu0 0.0
    %2369 = vmatprep.subr.mxu0 0.0
    %2370 = vmatpush2.msra.mxu0 0.0
    %2371 = vmatprep.subr.mxu0 0.0
    %2372 = vmatpush2.msra.mxu0 0.0
    %2373 = vmatprep.subr.mxu0 0.0
    %2374 = vmatpush2.msra.mxu0 0.0
    %2375 = vmatprep.subr.mxu0 0.0
    %2376 = vmatpush2.msra.mxu0 0.0
    %2377 = vmatprep.subr.mxu0 0.0
    %2378 = vmatpush2.msra.mxu0 0.0
    %2379 = vmatprep.subr.mxu0 0.0
    %2380 = vmatpush2.msra.mxu0 0.0
    %2381 = vmatprep.mubr.f32.mxu0 0.0
    %2382 = vmatmul.mubr.f32.gmra.mxu0 %v2168
    %v2383 = vpop.f32.mrf.mxu0
    %v2384 = vadd.f32 0.0, %v2383
    %v2385 = vpop.f32.mrf.mxu0
    %v2386 = vadd.f32 0.0, %v2385
    %2387 = vdwg.mxu0
    %2388 = vmatprep.subr.mxu0 0.0
    %2389 = vmatpush1.msra.mxu0 0.0
    %2390 = vmatprep.subr.mxu0 0.0
    %2391 = vmatpush1.msra.mxu0 0.0
    %2392 = vmatprep.subr.mxu0 0.0
    %2393 = vmatpush1.msra.mxu0 0.0
    %2394 = vmatprep.subr.mxu0 0.0
    %2395 = vmatpush1.msra.mxu0 0.0
    %2396 = vmatprep.subr.mxu0 0.0
    %2397 = vmatpush1.msra.mxu0 0.0
    %2398 = vmatprep.subr.mxu0 0.0
    %2399 = vmatpush1.msra.mxu0 0.0
    %2400 = vmatprep.subr.mxu0 0.0
    %2401 = vmatpush1.msra.mxu0 0.0
    %2402 = vmatprep.subr.mxu0 0.0
    %2403 = vmatpush1.msra.mxu0 0.0
    %2404 = vmatprep.subr.mxu0 0.0
    %2405 = vmatpush1.msra.mxu0 0.0
    %2406 = vmatprep.subr.mxu0 0.0
    %2407 = vmatpush1.msra.mxu0 0.0
    %2408 = vmatprep.subr.mxu0 0.0
    %2409 = vmatpush1.msra.mxu0 0.0
    %2410 = vmatprep.subr.mxu0 0.0
    %2411 = vmatpush1.msra.mxu0 0.0
    %2412 = vmatprep.subr.mxu0 0.0
    %2413 = vmatpush1.msra.mxu0 %v418
    %2414 = vmatprep.subr.mxu0 0.0
    %2415 = vmatpush1.msra.mxu0 %v415
    %2416 = vmatprep.subr.mxu0 0.0
    %2417 = vmatpush1.msra.mxu0 %v412
    %2418 = vmatprep.subr.mxu0 0.0
    %2419 = vmatpush1.msra.mxu0 %v409
    %2420 = vmatprep.subr.mxu0 0.0
    %2421 = vmatpush2.msra.mxu0 0.0
    %2422 = vmatprep.subr.mxu0 0.0
    %2423 = vmatpush2.msra.mxu0 0.0
    %2424 = vmatprep.subr.mxu0 0.0
    %2425 = vmatpush2.msra.mxu0 0.0
    %2426 = vmatprep.subr.mxu0 0.0
    %2427 = vmatpush2.msra.mxu0 0.0
    %2428 = vmatprep.subr.mxu0 0.0
    %2429 = vmatpush2.msra.mxu0 0.0
    %2430 = vmatprep.subr.mxu0 0.0
    %2431 = vmatpush2.msra.mxu0 0.0
    %2432 = vmatprep.subr.mxu0 0.0
    %2433 = vmatpush2.msra.mxu0 0.0
    %2434 = vmatprep.subr.mxu0 0.0
    %2435 = vmatpush2.msra.mxu0 0.0
    %2436 = vmatprep.subr.mxu0 0.0
    %2437 = vmatpush2.msra.mxu0 0.0
    %2438 = vmatprep.subr.mxu0 0.0
    %2439 = vmatpush2.msra.mxu0 0.0
    %2440 = vmatprep.subr.mxu0 0.0
    %2441 = vmatpush2.msra.mxu0 0.0
    %2442 = vmatprep.subr.mxu0 0.0
    %2443 = vmatpush2.msra.mxu0 0.0
    %2444 = vmatprep.subr.mxu0 0.0
    %2445 = vmatpush2.msra.mxu0 0.0
    %2446 = vmatprep.subr.mxu0 0.0
    %2447 = vmatpush2.msra.mxu0 0.0
    %2448 = vmatprep.subr.mxu0 0.0
    %2449 = vmatpush2.msra.mxu0 0.0
    %2450 = vmatprep.subr.mxu0 0.0
    %2451 = vmatpush2.msra.mxu0 0.0
    %2452 = vmatprep.mubr.f32.mxu0 0.0
    %2453 = vmatmul.mubr.f32.gmra.mxu0 %v2168
    %v2454 = vpop.f32.mrf.mxu0
    %v2455 = vadd.f32 0.0, %v2454
    %v2456 = vpop.f32.mrf.mxu0
    %2457 = vdwg.mxu0
    %v2458 = vadd.f32 %v2314, %v2384
    %v2459 = vadd.f32 %v2315, %v2386
    %v2460 = vmul.f32 %v2458, 0.5
    %v2461 = vtanh.pop %v2460
    %v2462 = vmul.f32 %v2461, 0.5
    %v2463 = vadd.f32 %v2462, 0.5
    %v2464 = vmul.f32 %v2459, 0.5
    %v2465 = vtanh.pop %v2464
    %v2466 = vmul.f32 %v2465, 0.5
    %v2467 = vadd.f32 %v2466, 0.5
    %v2468 = vadd.f32 %v2455, %v596
    %v2469 = vmul.f32 %v2463, %v2468
    %v2470 = vadd.f32 %v2316, %v2469
    %v2471 = vtanh.pop %v2470
    %v2472 = vsub.f32 1.0, %v2467
    %v2473 = vmul.f32 %v2472, %v2471
    %v2474 = vmul.f32 %v2467, %v2166
    %v2475 = vadd.f32 %v2473, %v2474
    %v2477 = vsel %vm437, %v2475, 0
    %2479 = vmatprep.subr.mxu0 0.0
    %2480 = vmatpush1.msra.mxu0 0.0
    %2481 = vmatprep.subr.mxu0 0.0
    %2482 = vmatpush1.msra.mxu0 0.0
    %2483 = vmatprep.subr.mxu0 0.0
    %2484 = vmatpush1.msra.mxu0 0.0
    %2485 = vmatprep.subr.mxu0 0.0
    %2486 = vmatpush1.msra.mxu0 0.0
    %2487 = vmatprep.subr.mxu0 0.0
    %2488 = vmatpush1.msra.mxu0 0.0
    %2489 = vmatprep.subr.mxu0 0.0
    %2490 = vmatpush1.msra.mxu0 0.0
    %2491 = vmatprep.subr.mxu0 0.0
    %2492 = vmatpush1.msra.mxu0 0.0
    %2493 = vmatprep.subr.mxu0 0.0
    %2494 = vmatpush1.msra.mxu0 0.0
    %2495 = vmatprep.subr.mxu0 0.0
    %2496 = vmatpush1.msra.mxu0 0.0
    %2497 = vmatprep.subr.mxu0 0.0
    %2498 = vmatpush1.msra.mxu0 0.0
    %2499 = vmatprep.subr.mxu0 0.0
    %2500 = vmatpush1.msra.mxu0 0.0
    %2501 = vmatprep.subr.mxu0 0.0
    %2502 = vmatpush1.msra.mxu0 0.0
    %2503 = vmatprep.subr.mxu0 %v431
    %2504 = vmatpush1.msra.mxu0 %v430
    %2505 = vmatprep.subr.mxu0 %v428
    %2506 = vmatpush1.msra.mxu0 %v427
    %2507 = vmatprep.subr.mxu0 %v425
    %2508 = vmatpush1.msra.mxu0 %v424
    %2509 = vmatprep.subr.mxu0 %v422
    %2510 = vmatpush1.msra.mxu0 %v421
    %2511 = vmatprep.subr.mxu0 0.0
    %2512 = vmatpush2.msra.mxu0 0.0
    %2513 = vmatprep.subr.mxu0 0.0
    %2514 = vmatpush2.msra.mxu0 0.0
    %2515 = vmatprep.subr.mxu0 0.0
    %2516 = vmatpush2.msra.mxu0 0.0
    %2517 = vmatprep.subr.mxu0 0.0
    %2518 = vmatpush2.msra.mxu0 0.0
    %2519 = vmatprep.subr.mxu0 0.0
    %2520 = vmatpush2.msra.mxu0 0.0
    %2521 = vmatprep.subr.mxu0 0.0
    %2522 = vmatpush2.msra.mxu0 0.0
    %2523 = vmatprep.subr.mxu0 0.0
    %2524 = vmatpush2.msra.mxu0 0.0
    %2525 = vmatprep.subr.mxu0 0.0
    %2526 = vmatpush2.msra.mxu0 0.0
    %2527 = vmatprep.subr.mxu0 0.0
    %2528 = vmatpush2.msra.mxu0 0.0
    %2529 = vmatprep.subr.mxu0 0.0
    %2530 = vmatpush2.msra.mxu0 0.0
    %2531 = vmatprep.subr.mxu0 0.0
    %2532 = vmatpush2.msra.mxu0 0.0
    %2533 = vmatprep.subr.mxu0 0.0
    %2534 = vmatpush2.msra.mxu0 0.0
    %2535 = vmatprep.subr.mxu0 0.0
    %2536 = vmatpush2.msra.mxu0 0.0
    %2537 = vmatprep.subr.mxu0 0.0
    %2538 = vmatpush2.msra.mxu0 0.0
    %2539 = vmatprep.subr.mxu0 0.0
    %2540 = vmatpush2.msra.mxu0 0.0
    %2541 = vmatprep.subr.mxu0 0.0
    %2542 = vmatpush2.msra.mxu0 0.0
    %2543 = vmatprep.mubr.f32.mxu0 0.0
    %2544 = vmatmul.mubr.f32.gmra.mxu0 %v2477
    %v2545 = vpop.f32.mrf.mxu0
    %v2546 = vadd.f32 %v610, %v2545
    %v2547 = vpop.f32.mrf.mxu0
    %v2548 = vadd.f32 %v614, %v2547
    %2549 = vdwg.mxu0
    %2550 = vmatprep.subr.mxu0 0.0
    %2551 = vmatpush1.msra.mxu0 0.0
    %2552 = vmatprep.subr.mxu0 0.0
    %2553 = vmatpush1.msra.mxu0 0.0
    %2554 = vmatprep.subr.mxu0 0.0
    %2555 = vmatpush1.msra.mxu0 0.0
    %2556 = vmatprep.subr.mxu0 0.0
    %2557 = vmatpush1.msra.mxu0 0.0
    %2558 = vmatprep.subr.mxu0 0.0
    %2559 = vmatpush1.msra.mxu0 0.0
    %2560 = vmatprep.subr.mxu0 0.0
    %2561 = vmatpush1.msra.mxu0 0.0
    %2562 = vmatprep.subr.mxu0 0.0
    %2563 = vmatpush1.msra.mxu0 0.0
    %2564 = vmatprep.subr.mxu0 0.0
    %2565 = vmatpush1.msra.mxu0 0.0
    %2566 = vmatprep.subr.mxu0 0.0
    %2567 = vmatpush1.msra.mxu0 0.0
    %2568 = vmatprep.subr.mxu0 0.0
    %2569 = vmatpush1.msra.mxu0 0.0
    %2570 = vmatprep.subr.mxu0 0.0
    %2571 = vmatpush1.msra.mxu0 0.0
    %2572 = vmatprep.subr.mxu0 0.0
    %2573 = vmatpush1.msra.mxu0 0.0
    %2574 = vmatprep.subr.mxu0 0.0
    %2575 = vmatpush1.msra.mxu0 %v432
    %2576 = vmatprep.subr.mxu0 0.0
    %2577 = vmatpush1.msra.mxu0 %v429
    %2578 = vmatprep.subr.mxu0 0.0
    %2579 = vmatpush1.msra.mxu0 %v426
    %2580 = vmatprep.subr.mxu0 0.0
    %2581 = vmatpush1.msra.mxu0 %v423
    %2582 = vmatprep.subr.mxu0 0.0
    %2583 = vmatpush2.msra.mxu0 0.0
    %2584 = vmatprep.subr.mxu0 0.0
    %2585 = vmatpush2.msra.mxu0 0.0
    %2586 = vmatprep.subr.mxu0 0.0
    %2587 = vmatpush2.msra.mxu0 0.0
    %2588 = vmatprep.subr.mxu0 0.0
    %2589 = vmatpush2.msra.mxu0 0.0
    %2590 = vmatprep.subr.mxu0 0.0
    %2591 = vmatpush2.msra.mxu0 0.0
    %2592 = vmatprep.subr.mxu0 0.0
    %2593 = vmatpush2.msra.mxu0 0.0
    %2594 = vmatprep.subr.mxu0 0.0
    %2595 = vmatpush2.msra.mxu0 0.0
    %2596 = vmatprep.subr.mxu0 0.0
    %2597 = vmatpush2.msra.mxu0 0.0
    %2598 = vmatprep.subr.mxu0 0.0
    %2599 = vmatpush2.msra.mxu0 0.0
    %2600 = vmatprep.subr.mxu0 0.0
    %2601 = vmatpush2.msra.mxu0 0.0
    %2602 = vmatprep.subr.mxu0 0.0
    %2603 = vmatpush2.msra.mxu0 0.0
    %2604 = vmatprep.subr.mxu0 0.0
    %2605 = vmatpush2.msra.mxu0 0.0
    %2606 = vmatprep.subr.mxu0 0.0
    %2607 = vmatpush2.msra.mxu0 0.0
    %2608 = vmatprep.subr.mxu0 0.0
    %2609 = vmatpush2.msra.mxu0 0.0
    %2610 = vmatprep.subr.mxu0 0.0
    %2611 = vmatpush2.msra.mxu0 0.0
    %2612 = vmatprep.subr.mxu0 0.0
    %2613 = vmatpush2.msra.mxu0 0.0
    %2614 = vmatprep.mubr.f32.mxu0 0.0
    %2615 = vmatmul.mubr.f32.gmra.mxu0 %v2477
    %v2616 = vpop.f32.mrf.mxu0
    %v2617 = vadd.f32 %v618, %v2616
    %v2618 = vpop.f32.mrf.mxu0
    %2619 = vdwg.mxu0
    %2620 = vst [vmem:[#allocation2 + $0x90] sm:$0xff] %v2546
    %2621 = vst [vmem:[#allocation2 + $0x98] sm:$0xff] %v2548
    %2622 = vst [vmem:[#allocation2 + $0xa0] sm:$0xff] %v2617
    %v2623 = vld [vmem:[#allocation2 + $0xa8] sm:$0xff]
    %v2624 = vld [vmem:[#allocation2 + $0xb0] sm:$0xff]
    %v2625 = vld [vmem:[#allocation2 + $0xb8] sm:$0xff]
    %2626 = vmatprep.subr.mxu0 0.0
    %2627 = vmatpush1.msra.mxu0 0.0
    %2628 = vmatprep.subr.mxu0 0.0
    %2629 = vmatpush1.msra.mxu0 0.0
    %2630 = vmatprep.subr.mxu0 0.0
    %2631 = vmatpush1.msra.mxu0 0.0
    %2632 = vmatprep.subr.mxu0 0.0
    %2633 = vmatpush1.msra.mxu0 0.0
    %2634 = vmatprep.subr.mxu0 0.0
    %2635 = vmatpush1.msra.mxu0 0.0
    %2636 = vmatprep.subr.mxu0 0.0
    %2637 = vmatpush1.msra.mxu0 0.0
    %2638 = vmatprep.subr.mxu0 0.0
    %2639 = vmatpush1.msra.mxu0 0.0
    %2640 = vmatprep.subr.mxu0 0.0
    %2641 = vmatpush1.msra.mxu0 0.0
    %2642 = vmatprep.subr.mxu0 0.0
    %2643 = vmatpush1.msra.mxu0 0.0
    %2644 = vmatprep.subr.mxu0 0.0
    %2645 = vmatpush1.msra.mxu0 0.0
    %2646 = vmatprep.subr.mxu0 0.0
    %2647 = vmatpush1.msra.mxu0 0.0
    %2648 = vmatprep.subr.mxu0 0.0
    %2649 = vmatpush1.msra.mxu0 0.0
    %2650 = vmatprep.subr.mxu0 %v417
    %2651 = vmatpush1.msra.mxu0 %v416
    %2652 = vmatprep.subr.mxu0 %v414
    %2653 = vmatpush1.msra.mxu0 %v413
    %2654 = vmatprep.subr.mxu0 %v411
    %2655 = vmatpush1.msra.mxu0 %v410
    %2656 = vmatprep.subr.mxu0 %v408
    %2657 = vmatpush1.msra.mxu0 %v407
    %2658 = vmatprep.subr.mxu0 0.0
    %2659 = vmatpush2.msra.mxu0 0.0
    %2660 = vmatprep.subr.mxu0 0.0
    %2661 = vmatpush2.msra.mxu0 0.0
    %2662 = vmatprep.subr.mxu0 0.0
    %2663 = vmatpush2.msra.mxu0 0.0
    %2664 = vmatprep.subr.mxu0 0.0
    %2665 = vmatpush2.msra.mxu0 0.0
    %2666 = vmatprep.subr.mxu0 0.0
    %2667 = vmatpush2.msra.mxu0 0.0
    %2668 = vmatprep.subr.mxu0 0.0
    %2669 = vmatpush2.msra.mxu0 0.0
    %2670 = vmatprep.subr.mxu0 0.0
    %2671 = vmatpush2.msra.mxu0 0.0
    %2672 = vmatprep.subr.mxu0 0.0
    %2673 = vmatpush2.msra.mxu0 0.0
    %2674 = vmatprep.subr.mxu0 0.0
    %2675 = vmatpush2.msra.mxu0 0.0
    %2676 = vmatprep.subr.mxu0 0.0
    %2677 = vmatpush2.msra.mxu0 0.0
    %2678 = vmatprep.subr.mxu0 0.0
    %2679 = vmatpush2.msra.mxu0 0.0
    %2680 = vmatprep.subr.mxu0 0.0
    %2681 = vmatpush2.msra.mxu0 0.0
    %2682 = vmatprep.subr.mxu0 0.0
    %2683 = vmatpush2.msra.mxu0 0.0
    %2684 = vmatprep.subr.mxu0 0.0
    %2685 = vmatpush2.msra.mxu0 0.0
    %2686 = vmatprep.subr.mxu0 0.0
    %2687 = vmatpush2.msra.mxu0 0.0
    %2688 = vmatprep.subr.mxu0 0.0
    %2689 = vmatpush2.msra.mxu0 0.0
    %2690 = vmatprep.mubr.f32.mxu0 0.0
    %2691 = vmatmul.mubr.f32.gmra.mxu0 %v2477
    %v2692 = vpop.f32.mrf.mxu0
    %v2693 = vadd.f32 0.0, %v2692
    %v2694 = vpop.f32.mrf.mxu0
    %v2695 = vadd.f32 0.0, %v2694
    %2696 = vdwg.mxu0
    %2697 = vmatprep.subr.mxu0 0.0
    %2698 = vmatpush1.msra.mxu0 0.0
    %2699 = vmatprep.subr.mxu0 0.0
    %2700 = vmatpush1.msra.mxu0 0.0
    %2701 = vmatprep.subr.mxu0 0.0
    %2702 = vmatpush1.msra.mxu0 0.0
    %2703 = vmatprep.subr.mxu0 0.0
    %2704 = vmatpush1.msra.mxu0 0.0
    %2705 = vmatprep.subr.mxu0 0.0
    %2706 = vmatpush1.msra.mxu0 0.0
    %2707 = vmatprep.subr.mxu0 0.0
    %2708 = vmatpush1.msra.mxu0 0.0
    %2709 = vmatprep.subr.mxu0 0.0
    %2710 = vmatpush1.msra.mxu0 0.0
    %2711 = vmatprep.subr.mxu0 0.0
    %2712 = vmatpush1.msra.mxu0 0.0
    %2713 = vmatprep.subr.mxu0 0.0
    %2714 = vmatpush1.msra.mxu0 0.0
    %2715 = vmatprep.subr.mxu0 0.0
    %2716 = vmatpush1.msra.mxu0 0.0
    %2717 = vmatprep.subr.mxu0 0.0
    %2718 = vmatpush1.msra.mxu0 0.0
    %2719 = vmatprep.subr.mxu0 0.0
    %2720 = vmatpush1.msra.mxu0 0.0
    %2721 = vmatprep.subr.mxu0 0.0
    %2722 = vmatpush1.msra.mxu0 %v418
    %2723 = vmatprep.subr.mxu0 0.0
    %2724 = vmatpush1.msra.mxu0 %v415
    %2725 = vmatprep.subr.mxu0 0.0
    %2726 = vmatpush1.msra.mxu0 %v412
    %2727 = vmatprep.subr.mxu0 0.0
    %2728 = vmatpush1.msra.mxu0 %v409
    %2729 = vmatprep.subr.mxu0 0.0
    %2730 = vmatpush2.msra.mxu0 0.0
    %2731 = vmatprep.subr.mxu0 0.0
    %2732 = vmatpush2.msra.mxu0 0.0
    %2733 = vmatprep.subr.mxu0 0.0
    %2734 = vmatpush2.msra.mxu0 0.0
    %2735 = vmatprep.subr.mxu0 0.0
    %2736 = vmatpush2.msra.mxu0 0.0
    %2737 = vmatprep.subr.mxu0 0.0
    %2738 = vmatpush2.msra.mxu0 0.0
    %2739 = vmatprep.subr.mxu0 0.0
    %2740 = vmatpush2.msra.mxu0 0.0
    %2741 = vmatprep.subr.mxu0 0.0
    %2742 = vmatpush2.msra.mxu0 0.0
    %2743 = vmatprep.subr.mxu0 0.0
    %2744 = vmatpush2.msra.mxu0 0.0
    %2745 = vmatprep.subr.mxu0 0.0
    %2746 = vmatpush2.msra.mxu0 0.0
    %2747 = vmatprep.subr.mxu0 0.0
    %2748 = vmatpush2.msra.mxu0 0.0
    %2749 = vmatprep.subr.mxu0 0.0
    %2750 = vmatpush2.msra.mxu0 0.0
    %2751 = vmatprep.subr.mxu0 0.0
    %2752 = vmatpush2.msra.mxu0 0.0
    %2753 = vmatprep.subr.mxu0 0.0
    %2754 = vmatpush2.msra.mxu0 0.0
    %2755 = vmatprep.subr.mxu0 0.0
    %2756 = vmatpush2.msra.mxu0 0.0
    %2757 = vmatprep.subr.mxu0 0.0
    %2758 = vmatpush2.msra.mxu0 0.0
    %2759 = vmatprep.subr.mxu0 0.0
    %2760 = vmatpush2.msra.mxu0 0.0
    %2761 = vmatprep.mubr.f32.mxu0 0.0
    %2762 = vmatmul.mubr.f32.gmra.mxu0 %v2477
    %v2763 = vpop.f32.mrf.mxu0
    %v2764 = vadd.f32 0.0, %v2763
    %v2765 = vpop.f32.mrf.mxu0
    %2766 = vdwg.mxu0
    %v2767 = vadd.f32 %v2623, %v2693
    %v2768 = vadd.f32 %v2624, %v2695
    %v2769 = vmul.f32 %v2767, 0.5
    %v2770 = vtanh.pop %v2769
    %v2771 = vmul.f32 %v2770, 0.5
    %v2772 = vadd.f32 %v2771, 0.5
    %v2773 = vmul.f32 %v2768, 0.5
    %v2774 = vtanh.pop %v2773
    %v2775 = vmul.f32 %v2774, 0.5
    %v2776 = vadd.f32 %v2775, 0.5
    %v2777 = vadd.f32 %v2764, %v596
    %v2778 = vmul.f32 %v2772, %v2777
    %v2779 = vadd.f32 %v2625, %v2778
    %v2780 = vtanh.pop %v2779
    %v2781 = vsub.f32 1.0, %v2776
    %v2782 = vmul.f32 %v2781, %v2780
    %v2783 = vmul.f32 %v2776, %v2475
    %v2784 = vadd.f32 %v2782, %v2783
    %v2786 = vsel %vm437, %v2784, 0
    %2788 = vmatprep.subr.mxu0 0.0
    %2789 = vmatpush1.msra.mxu0 0.0
    %2790 = vmatprep.subr.mxu0 0.0
    %2791 = vmatpush1.msra.mxu0 0.0
    %2792 = vmatprep.subr.mxu0 0.0
    %2793 = vmatpush1.msra.mxu0 0.0
    %2794 = vmatprep.subr.mxu0 0.0
    %2795 = vmatpush1.msra.mxu0 0.0
    %2796 = vmatprep.subr.mxu0 0.0
    %2797 = vmatpush1.msra.mxu0 0.0
    %2798 = vmatprep.subr.mxu0 0.0
    %2799 = vmatpush1.msra.mxu0 0.0
    %2800 = vmatprep.subr.mxu0 0.0
    %2801 = vmatpush1.msra.mxu0 0.0
    %2802 = vmatprep.subr.mxu0 0.0
    %2803 = vmatpush1.msra.mxu0 0.0
    %2804 = vmatprep.subr.mxu0 0.0
    %2805 = vmatpush1.msra.mxu0 0.0
    %2806 = vmatprep.subr.mxu0 0.0
    %2807 = vmatpush1.msra.mxu0 0.0
    %2808 = vmatprep.subr.mxu0 0.0
    %2809 = vmatpush1.msra.mxu0 0.0
    %2810 = vmatprep.subr.mxu0 0.0
    %2811 = vmatpush1.msra.mxu0 0.0
    %2812 = vmatprep.subr.mxu0 %v431
    %2813 = vmatpush1.msra.mxu0 %v430
    %2814 = vmatprep.subr.mxu0 %v428
    %2815 = vmatpush1.msra.mxu0 %v427
    %2816 = vmatprep.subr.mxu0 %v425
    %2817 = vmatpush1.msra.mxu0 %v424
    %2818 = vmatprep.subr.mxu0 %v422
    %2819 = vmatpush1.msra.mxu0 %v421
    %2820 = vmatprep.subr.mxu0 0.0
    %2821 = vmatpush2.msra.mxu0 0.0
    %2822 = vmatprep.subr.mxu0 0.0
    %2823 = vmatpush2.msra.mxu0 0.0
    %2824 = vmatprep.subr.mxu0 0.0
    %2825 = vmatpush2.msra.mxu0 0.0
    %2826 = vmatprep.subr.mxu0 0.0
    %2827 = vmatpush2.msra.mxu0 0.0
    %2828 = vmatprep.subr.mxu0 0.0
    %2829 = vmatpush2.msra.mxu0 0.0
    %2830 = vmatprep.subr.mxu0 0.0
    %2831 = vmatpush2.msra.mxu0 0.0
    %2832 = vmatprep.subr.mxu0 0.0
    %2833 = vmatpush2.msra.mxu0 0.0
    %2834 = vmatprep.subr.mxu0 0.0
    %2835 = vmatpush2.msra.mxu0 0.0
    %2836 = vmatprep.subr.mxu0 0.0
    %2837 = vmatpush2.msra.mxu0 0.0
    %2838 = vmatprep.subr.mxu0 0.0
    %2839 = vmatpush2.msra.mxu0 0.0
    %2840 = vmatprep.subr.mxu0 0.0
    %2841 = vmatpush2.msra.mxu0 0.0
    %2842 = vmatprep.subr.mxu0 0.0
    %2843 = vmatpush2.msra.mxu0 0.0
    %2844 = vmatprep.subr.mxu0 0.0
    %2845 = vmatpush2.msra.mxu0 0.0
    %2846 = vmatprep.subr.mxu0 0.0
    %2847 = vmatpush2.msra.mxu0 0.0
    %2848 = vmatprep.subr.mxu0 0.0
    %2849 = vmatpush2.msra.mxu0 0.0
    %2850 = vmatprep.subr.mxu0 0.0
    %2851 = vmatpush2.msra.mxu0 0.0
    %2852 = vmatprep.mubr.f32.mxu0 0.0
    %2853 = vmatmul.mubr.f32.gmra.mxu0 %v2786
    %v2854 = vpop.f32.mrf.mxu0
    %v2855 = vadd.f32 %v610, %v2854
    %v2856 = vpop.f32.mrf.mxu0
    %v2857 = vadd.f32 %v614, %v2856
    %2858 = vdwg.mxu0
    %2859 = vmatprep.subr.mxu0 0.0
    %2860 = vmatpush1.msra.mxu0 0.0
    %2861 = vmatprep.subr.mxu0 0.0
    %2862 = vmatpush1.msra.mxu0 0.0
    %2863 = vmatprep.subr.mxu0 0.0
    %2864 = vmatpush1.msra.mxu0 0.0
    %2865 = vmatprep.subr.mxu0 0.0
    %2866 = vmatpush1.msra.mxu0 0.0
    %2867 = vmatprep.subr.mxu0 0.0
    %2868 = vmatpush1.msra.mxu0 0.0
    %2869 = vmatprep.subr.mxu0 0.0
    %2870 = vmatpush1.msra.mxu0 0.0
    %2871 = vmatprep.subr.mxu0 0.0
    %2872 = vmatpush1.msra.mxu0 0.0
    %2873 = vmatprep.subr.mxu0 0.0
    %2874 = vmatpush1.msra.mxu0 0.0
    %2875 = vmatprep.subr.mxu0 0.0
    %2876 = vmatpush1.msra.mxu0 0.0
    %2877 = vmatprep.subr.mxu0 0.0
    %2878 = vmatpush1.msra.mxu0 0.0
    %2879 = vmatprep.subr.mxu0 0.0
    %2880 = vmatpush1.msra.mxu0 0.0
    %2881 = vmatprep.subr.mxu0 0.0
    %2882 = vmatpush1.msra.mxu0 0.0
    %2883 = vmatprep.subr.mxu0 0.0
    %2884 = vmatpush1.msra.mxu0 %v432
    %2885 = vmatprep.subr.mxu0 0.0
    %2886 = vmatpush1.msra.mxu0 %v429
    %2887 = vmatprep.subr.mxu0 0.0
    %2888 = vmatpush1.msra.mxu0 %v426
    %2889 = vmatprep.subr.mxu0 0.0
    %2890 = vmatpush1.msra.mxu0 %v423
    %2891 = vmatprep.subr.mxu0 0.0
    %2892 = vmatpush2.msra.mxu0 0.0
    %2893 = vmatprep.subr.mxu0 0.0
    %2894 = vmatpush2.msra.mxu0 0.0
    %2895 = vmatprep.subr.mxu0 0.0
    %2896 = vmatpush2.msra.mxu0 0.0
    %2897 = vmatprep.subr.mxu0 0.0
    %2898 = vmatpush2.msra.mxu0 0.0
    %2899 = vmatprep.subr.mxu0 0.0
    %2900 = vmatpush2.msra.mxu0 0.0
    %2901 = vmatprep.subr.mxu0 0.0
    %2902 = vmatpush2.msra.mxu0 0.0
    %2903 = vmatprep.subr.mxu0 0.0
    %2904 = vmatpush2.msra.mxu0 0.0
    %2905 = vmatprep.subr.mxu0 0.0
    %2906 = vmatpush2.msra.mxu0 0.0
    %2907 = vmatprep.subr.mxu0 0.0
    %2908 = vmatpush2.msra.mxu0 0.0
    %2909 = vmatprep.subr.mxu0 0.0
    %2910 = vmatpush2.msra.mxu0 0.0
    %2911 = vmatprep.subr.mxu0 0.0
    %2912 = vmatpush2.msra.mxu0 0.0
    %2913 = vmatprep.subr.mxu0 0.0
    %2914 = vmatpush2.msra.mxu0 0.0
    %2915 = vmatprep.subr.mxu0 0.0
    %2916 = vmatpush2.msra.mxu0 0.0
    %2917 = vmatprep.subr.mxu0 0.0
    %2918 = vmatpush2.msra.mxu0 0.0
    %2919 = vmatprep.subr.mxu0 0.0
    %2920 = vmatpush2.msra.mxu0 0.0
    %2921 = vmatprep.subr.mxu0 0.0
    %2922 = vmatpush2.msra.mxu0 0.0
    %2923 = vmatprep.mubr.f32.mxu0 0.0
    %2924 = vmatmul.mubr.f32.gmra.mxu0 %v2786
    %v2925 = vpop.f32.mrf.mxu0
    %v2926 = vadd.f32 %v618, %v2925
    %v2927 = vpop.f32.mrf.mxu0
    %2928 = vdwg.mxu0
    %2929 = vst [vmem:[#allocation2 + $0xa8] sm:$0xff] %v2855
    %2930 = vst [vmem:[#allocation2 + $0xb0] sm:$0xff] %v2857
    %2931 = vst [vmem:[#allocation2 + $0xb8] sm:$0xff] %v2926
    %v2932 = vld [vmem:[#allocation5 + $0x60] sm:$0xff]
    %v2933 = vld [vmem:[#allocation5 + $0x68] sm:$0xff]
    %v2934 = vld [vmem:[#allocation5 + $0x70] sm:$0xff]
    %v2935 = vld [vmem:[#allocation5 + $0x78] sm:$0xff]
    %v2936 = vld [vmem:[#allocation5 + $0x80] sm:$0xff]
    %v2937 = vld [vmem:[#allocation5 + $0x88] sm:$0xff]
    %v2938 = vld [vmem:[#allocation5 + $0x90] sm:$0xff]
    %v2939 = vld [vmem:[#allocation5 + $0x98] sm:$0xff]
    %v2940 = vld [vmem:[#allocation5 + $0xa0] sm:$0xff]
    %v2941 = vld [vmem:[#allocation5 + $0xa8] sm:$0xff]
    %v2942 = vld [vmem:[#allocation5 + $0xb0] sm:$0xff]
    %v2943 = vld [vmem:[#allocation5 + $0xb8] sm:$0xff]
    %s2944 = scalar_lea.vmem %s4, 48
    %v2945 = vld [vmem:[%s2944] ss:$8 sm:$0x7]
    %v2946 = vld [vmem:[#allocation2] sm:$0xff]
    %v2947 = vld [vmem:[#allocation2 + $0x8] sm:$0xff]
    %v2948 = vld [vmem:[#allocation2 + $0x10] sm:$0xff]
    %2949 = vmatprep.subr.mxu0 0.0
    %2950 = vmatpush1.msra.mxu0 0.0
    %2951 = vmatprep.subr.mxu0 0.0
    %2952 = vmatpush1.msra.mxu0 0.0
    %2953 = vmatprep.subr.mxu0 0.0
    %2954 = vmatpush1.msra.mxu0 0.0
    %2955 = vmatprep.subr.mxu0 0.0
    %2956 = vmatpush1.msra.mxu0 0.0
    %2957 = vmatprep.subr.mxu0 0.0
    %2958 = vmatpush1.msra.mxu0 0.0
    %2959 = vmatprep.subr.mxu0 0.0
    %2960 = vmatpush1.msra.mxu0 0.0
    %2961 = vmatprep.subr.mxu0 0.0
    %2962 = vmatpush1.msra.mxu0 0.0
    %2963 = vmatprep.subr.mxu0 0.0
    %2964 = vmatpush1.msra.mxu0 0.0
    %2965 = vmatprep.subr.mxu0 0.0
    %2966 = vmatpush1.msra.mxu0 0.0
    %2967 = vmatprep.subr.mxu0 0.0
    %2968 = vmatpush1.msra.mxu0 0.0
    %2969 = vmatprep.subr.mxu0 0.0
    %2970 = vmatpush1.msra.mxu0 0.0
    %2971 = vmatprep.subr.mxu0 0.0
    %2972 = vmatpush1.msra.mxu0 0.0
    %2973 = vmatprep.subr.mxu0 %v2942
    %2974 = vmatpush1.msra.mxu0 %v2941
    %2975 = vmatprep.subr.mxu0 %v2939
    %2976 = vmatpush1.msra.mxu0 %v2938
    %2977 = vmatprep.subr.mxu0 %v2936
    %2978 = vmatpush1.msra.mxu0 %v2935
    %2979 = vmatprep.subr.mxu0 %v2933
    %2980 = vmatpush1.msra.mxu0 %v2932
    %2981 = vmatprep.subr.mxu0 0.0
    %2982 = vmatpush2.msra.mxu0 0.0
    %2983 = vmatprep.subr.mxu0 0.0
    %2984 = vmatpush2.msra.mxu0 0.0
    %2985 = vmatprep.subr.mxu0 0.0
    %2986 = vmatpush2.msra.mxu0 0.0
    %2987 = vmatprep.subr.mxu0 0.0
    %2988 = vmatpush2.msra.mxu0 0.0
    %2989 = vmatprep.subr.mxu0 0.0
    %2990 = vmatpush2.msra.mxu0 0.0
    %2991 = vmatprep.subr.mxu0 0.0
    %2992 = vmatpush2.msra.mxu0 0.0
    %2993 = vmatprep.subr.mxu0 0.0
    %2994 = vmatpush2.msra.mxu0 0.0
    %2995 = vmatprep.subr.mxu0 0.0
    %2996 = vmatpush2.msra.mxu0 0.0
    %2997 = vmatprep.subr.mxu0 0.0
    %2998 = vmatpush2.msra.mxu0 0.0
    %2999 = vmatprep.subr.mxu0 0.0
    %3000 = vmatpush2.msra.mxu0 0.0
    %3001 = vmatprep.subr.mxu0 0.0
    %3002 = vmatpush2.msra.mxu0 0.0
    %3003 = vmatprep.subr.mxu0 0.0
    %3004 = vmatpush2.msra.mxu0 0.0
    %3005 = vmatprep.subr.mxu0 0.0
    %3006 = vmatpush2.msra.mxu0 0.0
    %3007 = vmatprep.subr.mxu0 0.0
    %3008 = vmatpush2.msra.mxu0 0.0
    %3009 = vmatprep.subr.mxu0 0.0
    %3010 = vmatpush2.msra.mxu0 0.0
    %3011 = vmatprep.subr.mxu0 0.0
    %3012 = vmatpush2.msra.mxu0 0.0
    %3013 = vmatprep.mubr.f32.mxu0 0.0
    %3014 = vmatmul.mubr.f32.gmra.mxu0 %v439
    %v3015 = vpop.f32.mrf.mxu0
    %v3016 = vadd.f32 0.0, %v3015
    %v3017 = vpop.f32.mrf.mxu0
    %v3018 = vadd.f32 0.0, %v3017
    %3019 = vdwg.mxu0
    %3020 = vmatprep.subr.mxu0 0.0
    %3021 = vmatpush1.msra.mxu0 0.0
    %3022 = vmatprep.subr.mxu0 0.0
    %3023 = vmatpush1.msra.mxu0 0.0
    %3024 = vmatprep.subr.mxu0 0.0
    %3025 = vmatpush1.msra.mxu0 0.0
    %3026 = vmatprep.subr.mxu0 0.0
    %3027 = vmatpush1.msra.mxu0 0.0
    %3028 = vmatprep.subr.mxu0 0.0
    %3029 = vmatpush1.msra.mxu0 0.0
    %3030 = vmatprep.subr.mxu0 0.0
    %3031 = vmatpush1.msra.mxu0 0.0
    %3032 = vmatprep.subr.mxu0 0.0
    %3033 = vmatpush1.msra.mxu0 0.0
    %3034 = vmatprep.subr.mxu0 0.0
    %3035 = vmatpush1.msra.mxu0 0.0
    %3036 = vmatprep.subr.mxu0 0.0
    %3037 = vmatpush1.msra.mxu0 0.0
    %3038 = vmatprep.subr.mxu0 0.0
    %3039 = vmatpush1.msra.mxu0 0.0
    %3040 = vmatprep.subr.mxu0 0.0
    %3041 = vmatpush1.msra.mxu0 0.0
    %3042 = vmatprep.subr.mxu0 0.0
    %3043 = vmatpush1.msra.mxu0 0.0
    %3044 = vmatprep.subr.mxu0 0.0
    %3045 = vmatpush1.msra.mxu0 %v2943
    %3046 = vmatprep.subr.mxu0 0.0
    %3047 = vmatpush1.msra.mxu0 %v2940
    %3048 = vmatprep.subr.mxu0 0.0
    %3049 = vmatpush1.msra.mxu0 %v2937
    %3050 = vmatprep.subr.mxu0 0.0
    %3051 = vmatpush1.msra.mxu0 %v2934
    %3052 = vmatprep.subr.mxu0 0.0
    %3053 = vmatpush2.msra.mxu0 0.0
    %3054 = vmatprep.subr.mxu0 0.0
    %3055 = vmatpush2.msra.mxu0 0.0
    %3056 = vmatprep.subr.mxu0 0.0
    %3057 = vmatpush2.msra.mxu0 0.0
    %3058 = vmatprep.subr.mxu0 0.0
    %3059 = vmatpush2.msra.mxu0 0.0
    %3060 = vmatprep.subr.mxu0 0.0
    %3061 = vmatpush2.msra.mxu0 0.0
    %3062 = vmatprep.subr.mxu0 0.0
    %3063 = vmatpush2.msra.mxu0 0.0
    %3064 = vmatprep.subr.mxu0 0.0
    %3065 = vmatpush2.msra.mxu0 0.0
    %3066 = vmatprep.subr.mxu0 0.0
    %3067 = vmatpush2.msra.mxu0 0.0
    %3068 = vmatprep.subr.mxu0 0.0
    %3069 = vmatpush2.msra.mxu0 0.0
    %3070 = vmatprep.subr.mxu0 0.0
    %3071 = vmatpush2.msra.mxu0 0.0
    %3072 = vmatprep.subr.mxu0 0.0
    %3073 = vmatpush2.msra.mxu0 0.0
    %3074 = vmatprep.subr.mxu0 0.0
    %3075 = vmatpush2.msra.mxu0 0.0
    %3076 = vmatprep.subr.mxu0 0.0
    %3077 = vmatpush2.msra.mxu0 0.0
    %3078 = vmatprep.subr.mxu0 0.0
    %3079 = vmatpush2.msra.mxu0 0.0
    %3080 = vmatprep.subr.mxu0 0.0
    %3081 = vmatpush2.msra.mxu0 0.0
    %3082 = vmatprep.subr.mxu0 0.0
    %3083 = vmatpush2.msra.mxu0 0.0
    %3084 = vmatprep.mubr.f32.mxu0 0.0
    %3085 = vmatmul.mubr.f32.gmra.mxu0 %v439
    %v3086 = vpop.f32.mrf.mxu0
    %v3087 = vadd.f32 0.0, %v3086
    %v3088 = vpop.f32.mrf.mxu0
    %3089 = vdwg.mxu0
    %v3090 = vadd.f32 %v2946, %v3016
    %v3091 = vadd.f32 %v2947, %v3018
    %v3092 = vmul.f32 %v3090, 0.5
    %v3093 = vtanh.pop %v3092
    %v3094 = vmul.f32 %v3093, 0.5
    %v3095 = vadd.f32 %v3094, 0.5
    %v3096 = vmul.f32 %v3091, 0.5
    %v3097 = vtanh.pop %v3096
    %v3098 = vmul.f32 %v3097, 0.5
    %v3099 = vadd.f32 %v3098, 0.5
    %v3101 = vlaneseq
    %v3102 = vshrl.u32 %v3101, 7
    %v3103 = vsub.s32 0, %v3102
    %v3104 = vrot.slane %v2945, %v3103
    %v3106 = vadd.f32 %v3087, %v3104
    %v3107 = vmul.f32 %v3095, %v3106
    %v3108 = vadd.f32 %v2948, %v3107
    %v3109 = vtanh.pop %v3108
    %v3110 = vsub.f32 1.0, %v3099
    %v3111 = vmul.f32 %v3110, %v3109
    %v3112 = vmul.f32 %v3099, 0.0
    %v3113 = vadd.f32 %v3111, %v3112
    %v3114 = vld [vmem:[#allocation2 + $0x18] sm:$0xff]
    %v3115 = vld [vmem:[#allocation2 + $0x20] sm:$0xff]
    %v3116 = vld [vmem:[#allocation2 + $0x28] sm:$0xff]
    %v3118 = vsel %vm437, %v3113, 0
    %3120 = vmatprep.subr.mxu0 0.0
    %3121 = vmatpush1.msra.mxu0 0.0
    %3122 = vmatprep.subr.mxu0 0.0
    %3123 = vmatpush1.msra.mxu0 0.0
    %3124 = vmatprep.subr.mxu0 0.0
    %3125 = vmatpush1.msra.mxu0 0.0
    %3126 = vmatprep.subr.mxu0 0.0
    %3127 = vmatpush1.msra.mxu0 0.0
    %3128 = vmatprep.subr.mxu0 0.0
    %3129 = vmatpush1.msra.mxu0 0.0
    %3130 = vmatprep.subr.mxu0 0.0
    %3131 = vmatpush1.msra.mxu0 0.0
    %3132 = vmatprep.subr.mxu0 0.0
    %3133 = vmatpush1.msra.mxu0 0.0
    %3134 = vmatprep.subr.mxu0 0.0
    %3135 = vmatpush1.msra.mxu0 0.0
    %3136 = vmatprep.subr.mxu0 0.0
    %3137 = vmatpush1.msra.mxu0 0.0
    %3138 = vmatprep.subr.mxu0 0.0
    %3139 = vmatpush1.msra.mxu0 0.0
    %3140 = vmatprep.subr.mxu0 0.0
    %3141 = vmatpush1.msra.mxu0 0.0
    %3142 = vmatprep.subr.mxu0 0.0
    %3143 = vmatpush1.msra.mxu0 0.0
    %3144 = vmatprep.subr.mxu0 %v2942
    %3145 = vmatpush1.msra.mxu0 %v2941
    %3146 = vmatprep.subr.mxu0 %v2939
    %3147 = vmatpush1.msra.mxu0 %v2938
    %3148 = vmatprep.subr.mxu0 %v2936
    %3149 = vmatpush1.msra.mxu0 %v2935
    %3150 = vmatprep.subr.mxu0 %v2933
    %3151 = vmatpush1.msra.mxu0 %v2932
    %3152 = vmatprep.subr.mxu0 0.0
    %3153 = vmatpush2.msra.mxu0 0.0
    %3154 = vmatprep.subr.mxu0 0.0
    %3155 = vmatpush2.msra.mxu0 0.0
    %3156 = vmatprep.subr.mxu0 0.0
    %3157 = vmatpush2.msra.mxu0 0.0
    %3158 = vmatprep.subr.mxu0 0.0
    %3159 = vmatpush2.msra.mxu0 0.0
    %3160 = vmatprep.subr.mxu0 0.0
    %3161 = vmatpush2.msra.mxu0 0.0
    %3162 = vmatprep.subr.mxu0 0.0
    %3163 = vmatpush2.msra.mxu0 0.0
    %3164 = vmatprep.subr.mxu0 0.0
    %3165 = vmatpush2.msra.mxu0 0.0
    %3166 = vmatprep.subr.mxu0 0.0
    %3167 = vmatpush2.msra.mxu0 0.0
    %3168 = vmatprep.subr.mxu0 0.0
    %3169 = vmatpush2.msra.mxu0 0.0
    %3170 = vmatprep.subr.mxu0 0.0
    %3171 = vmatpush2.msra.mxu0 0.0
    %3172 = vmatprep.subr.mxu0 0.0
    %3173 = vmatpush2.msra.mxu0 0.0
    %3174 = vmatprep.subr.mxu0 0.0
    %3175 = vmatpush2.msra.mxu0 0.0
    %3176 = vmatprep.subr.mxu0 0.0
    %3177 = vmatpush2.msra.mxu0 0.0
    %3178 = vmatprep.subr.mxu0 0.0
    %3179 = vmatpush2.msra.mxu0 0.0
    %3180 = vmatprep.subr.mxu0 0.0
    %3181 = vmatpush2.msra.mxu0 0.0
    %3182 = vmatprep.subr.mxu0 0.0
    %3183 = vmatpush2.msra.mxu0 0.0
    %3184 = vmatprep.mubr.f32.mxu0 0.0
    %3185 = vmatmul.mubr.f32.gmra.mxu0 %v3118
    %v3186 = vpop.f32.mrf.mxu0
    %v3187 = vadd.f32 0.0, %v3186
    %v3188 = vpop.f32.mrf.mxu0
    %v3189 = vadd.f32 0.0, %v3188
    %3190 = vdwg.mxu0
    %3191 = vmatprep.subr.mxu0 0.0
    %3192 = vmatpush1.msra.mxu0 0.0
    %3193 = vmatprep.subr.mxu0 0.0
    %3194 = vmatpush1.msra.mxu0 0.0
    %3195 = vmatprep.subr.mxu0 0.0
    %3196 = vmatpush1.msra.mxu0 0.0
    %3197 = vmatprep.subr.mxu0 0.0
    %3198 = vmatpush1.msra.mxu0 0.0
    %3199 = vmatprep.subr.mxu0 0.0
    %3200 = vmatpush1.msra.mxu0 0.0
    %3201 = vmatprep.subr.mxu0 0.0
    %3202 = vmatpush1.msra.mxu0 0.0
    %3203 = vmatprep.subr.mxu0 0.0
    %3204 = vmatpush1.msra.mxu0 0.0
    %3205 = vmatprep.subr.mxu0 0.0
    %3206 = vmatpush1.msra.mxu0 0.0
    %3207 = vmatprep.subr.mxu0 0.0
    %3208 = vmatpush1.msra.mxu0 0.0
    %3209 = vmatprep.subr.mxu0 0.0
    %3210 = vmatpush1.msra.mxu0 0.0
    %3211 = vmatprep.subr.mxu0 0.0
    %3212 = vmatpush1.msra.mxu0 0.0
    %3213 = vmatprep.subr.mxu0 0.0
    %3214 = vmatpush1.msra.mxu0 0.0
    %3215 = vmatprep.subr.mxu0 0.0
    %3216 = vmatpush1.msra.mxu0 %v2943
    %3217 = vmatprep.subr.mxu0 0.0
    %3218 = vmatpush1.msra.mxu0 %v2940
    %3219 = vmatprep.subr.mxu0 0.0
    %3220 = vmatpush1.msra.mxu0 %v2937
    %3221 = vmatprep.subr.mxu0 0.0
    %3222 = vmatpush1.msra.mxu0 %v2934
    %3223 = vmatprep.subr.mxu0 0.0
    %3224 = vmatpush2.msra.mxu0 0.0
    %3225 = vmatprep.subr.mxu0 0.0
    %3226 = vmatpush2.msra.mxu0 0.0
    %3227 = vmatprep.subr.mxu0 0.0
    %3228 = vmatpush2.msra.mxu0 0.0
    %3229 = vmatprep.subr.mxu0 0.0
    %3230 = vmatpush2.msra.mxu0 0.0
    %3231 = vmatprep.subr.mxu0 0.0
    %3232 = vmatpush2.msra.mxu0 0.0
    %3233 = vmatprep.subr.mxu0 0.0
    %3234 = vmatpush2.msra.mxu0 0.0
    %3235 = vmatprep.subr.mxu0 0.0
    %3236 = vmatpush2.msra.mxu0 0.0
    %3237 = vmatprep.subr.mxu0 0.0
    %3238 = vmatpush2.msra.mxu0 0.0
    %3239 = vmatprep.subr.mxu0 0.0
    %3240 = vmatpush2.msra.mxu0 0.0
    %3241 = vmatprep.subr.mxu0 0.0
    %3242 = vmatpush2.msra.mxu0 0.0
    %3243 = vmatprep.subr.mxu0 0.0
    %3244 = vmatpush2.msra.mxu0 0.0
    %3245 = vmatprep.subr.mxu0 0.0
    %3246 = vmatpush2.msra.mxu0 0.0
    %3247 = vmatprep.subr.mxu0 0.0
    %3248 = vmatpush2.msra.mxu0 0.0
    %3249 = vmatprep.subr.mxu0 0.0
    %3250 = vmatpush2.msra.mxu0 0.0
    %3251 = vmatprep.subr.mxu0 0.0
    %3252 = vmatpush2.msra.mxu0 0.0
    %3253 = vmatprep.subr.mxu0 0.0
    %3254 = vmatpush2.msra.mxu0 0.0
    %3255 = vmatprep.mubr.f32.mxu0 0.0
    %3256 = vmatmul.mubr.f32.gmra.mxu0 %v3118
    %v3257 = vpop.f32.mrf.mxu0
    %v3258 = vadd.f32 0.0, %v3257
    %v3259 = vpop.f32.mrf.mxu0
    %3260 = vdwg.mxu0
    %v3261 = vadd.f32 %v3114, %v3187
    %v3262 = vadd.f32 %v3115, %v3189
    %v3263 = vmul.f32 %v3261, 0.5
    %v3264 = vtanh.pop %v3263
    %v3265 = vmul.f32 %v3264, 0.5
    %v3266 = vadd.f32 %v3265, 0.5
    %v3267 = vmul.f32 %v3262, 0.5
    %v3268 = vtanh.pop %v3267
    %v3269 = vmul.f32 %v3268, 0.5
    %v3270 = vadd.f32 %v3269, 0.5
    %v3271 = vadd.f32 %v3258, %v3104
    %v3272 = vmul.f32 %v3266, %v3271
    %v3273 = vadd.f32 %v3116, %v3272
    %v3274 = vtanh.pop %v3273
    %v3275 = vsub.f32 1.0, %v3270
    %v3276 = vmul.f32 %v3275, %v3274
    %v3277 = vmul.f32 %v3270, %v3113
    %v3278 = vadd.f32 %v3276, %v3277
    %v3279 = vld [vmem:[#allocation2 + $0x30] sm:$0xff]
    %v3280 = vld [vmem:[#allocation2 + $0x38] sm:$0xff]
    %v3281 = vld [vmem:[#allocation2 + $0x40] sm:$0xff]
    %v3283 = vsel %vm437, %v3278, 0
    %3285 = vmatprep.subr.mxu0 0.0
    %3286 = vmatpush1.msra.mxu0 0.0
    %3287 = vmatprep.subr.mxu0 0.0
    %3288 = vmatpush1.msra.mxu0 0.0
    %3289 = vmatprep.subr.mxu0 0.0
    %3290 = vmatpush1.msra.mxu0 0.0
    %3291 = vmatprep.subr.mxu0 0.0
    %3292 = vmatpush1.msra.mxu0 0.0
    %3293 = vmatprep.subr.mxu0 0.0
    %3294 = vmatpush1.msra.mxu0 0.0
    %3295 = vmatprep.subr.mxu0 0.0
    %3296 = vmatpush1.msra.mxu0 0.0
    %3297 = vmatprep.subr.mxu0 0.0
    %3298 = vmatpush1.msra.mxu0 0.0
    %3299 = vmatprep.subr.mxu0 0.0
    %3300 = vmatpush1.msra.mxu0 0.0
    %3301 = vmatprep.subr.mxu0 0.0
    %3302 = vmatpush1.msra.mxu0 0.0
    %3303 = vmatprep.subr.mxu0 0.0
    %3304 = vmatpush1.msra.mxu0 0.0
    %3305 = vmatprep.subr.mxu0 0.0
    %3306 = vmatpush1.msra.mxu0 0.0
    %3307 = vmatprep.subr.mxu0 0.0
    %3308 = vmatpush1.msra.mxu0 0.0
    %3309 = vmatprep.subr.mxu0 %v2942
    %3310 = vmatpush1.msra.mxu0 %v2941
    %3311 = vmatprep.subr.mxu0 %v2939
    %3312 = vmatpush1.msra.mxu0 %v2938
    %3313 = vmatprep.subr.mxu0 %v2936
    %3314 = vmatpush1.msra.mxu0 %v2935
    %3315 = vmatprep.subr.mxu0 %v2933
    %3316 = vmatpush1.msra.mxu0 %v2932
    %3317 = vmatprep.subr.mxu0 0.0
    %3318 = vmatpush2.msra.mxu0 0.0
    %3319 = vmatprep.subr.mxu0 0.0
    %3320 = vmatpush2.msra.mxu0 0.0
    %3321 = vmatprep.subr.mxu0 0.0
    %3322 = vmatpush2.msra.mxu0 0.0
    %3323 = vmatprep.subr.mxu0 0.0
    %3324 = vmatpush2.msra.mxu0 0.0
    %3325 = vmatprep.subr.mxu0 0.0
    %3326 = vmatpush2.msra.mxu0 0.0
    %3327 = vmatprep.subr.mxu0 0.0
    %3328 = vmatpush2.msra.mxu0 0.0
    %3329 = vmatprep.subr.mxu0 0.0
    %3330 = vmatpush2.msra.mxu0 0.0
    %3331 = vmatprep.subr.mxu0 0.0
    %3332 = vmatpush2.msra.mxu0 0.0
    %3333 = vmatprep.subr.mxu0 0.0
    %3334 = vmatpush2.msra.mxu0 0.0
    %3335 = vmatprep.subr.mxu0 0.0
    %3336 = vmatpush2.msra.mxu0 0.0
    %3337 = vmatprep.subr.mxu0 0.0
    %3338 = vmatpush2.msra.mxu0 0.0
    %3339 = vmatprep.subr.mxu0 0.0
    %3340 = vmatpush2.msra.mxu0 0.0
    %3341 = vmatprep.subr.mxu0 0.0
    %3342 = vmatpush2.msra.mxu0 0.0
    %3343 = vmatprep.subr.mxu0 0.0
    %3344 = vmatpush2.msra.mxu0 0.0
    %3345 = vmatprep.subr.mxu0 0.0
    %3346 = vmatpush2.msra.mxu0 0.0
    %3347 = vmatprep.subr.mxu0 0.0
    %3348 = vmatpush2.msra.mxu0 0.0
    %3349 = vmatprep.mubr.f32.mxu0 0.0
    %3350 = vmatmul.mubr.f32.gmra.mxu0 %v3283
    %v3351 = vpop.f32.mrf.mxu0
    %v3352 = vadd.f32 0.0, %v3351
    %v3353 = vpop.f32.mrf.mxu0
    %v3354 = vadd.f32 0.0, %v3353
    %3355 = vdwg.mxu0
    %3356 = vmatprep.subr.mxu0 0.0
    %3357 = vmatpush1.msra.mxu0 0.0
    %3358 = vmatprep.subr.mxu0 0.0
    %3359 = vmatpush1.msra.mxu0 0.0
    %3360 = vmatprep.subr.mxu0 0.0
    %3361 = vmatpush1.msra.mxu0 0.0
    %3362 = vmatprep.subr.mxu0 0.0
    %3363 = vmatpush1.msra.mxu0 0.0
    %3364 = vmatprep.subr.mxu0 0.0
    %3365 = vmatpush1.msra.mxu0 0.0
    %3366 = vmatprep.subr.mxu0 0.0
    %3367 = vmatpush1.msra.mxu0 0.0
    %3368 = vmatprep.subr.mxu0 0.0
    %3369 = vmatpush1.msra.mxu0 0.0
    %3370 = vmatprep.subr.mxu0 0.0
    %3371 = vmatpush1.msra.mxu0 0.0
    %3372 = vmatprep.subr.mxu0 0.0
    %3373 = vmatpush1.msra.mxu0 0.0
    %3374 = vmatprep.subr.mxu0 0.0
    %3375 = vmatpush1.msra.mxu0 0.0
    %3376 = vmatprep.subr.mxu0 0.0
    %3377 = vmatpush1.msra.mxu0 0.0
    %3378 = vmatprep.subr.mxu0 0.0
    %3379 = vmatpush1.msra.mxu0 0.0
    %3380 = vmatprep.subr.mxu0 0.0
    %3381 = vmatpush1.msra.mxu0 %v2943
    %3382 = vmatprep.subr.mxu0 0.0
    %3383 = vmatpush1.msra.mxu0 %v2940
    %3384 = vmatprep.subr.mxu0 0.0
    %3385 = vmatpush1.msra.mxu0 %v2937
    %3386 = vmatprep.subr.mxu0 0.0
    %3387 = vmatpush1.msra.mxu0 %v2934
    %3388 = vmatprep.subr.mxu0 0.0
    %3389 = vmatpush2.msra.mxu0 0.0
    %3390 = vmatprep.subr.mxu0 0.0
    %3391 = vmatpush2.msra.mxu0 0.0
    %3392 = vmatprep.subr.mxu0 0.0
    %3393 = vmatpush2.msra.mxu0 0.0
    %3394 = vmatprep.subr.mxu0 0.0
    %3395 = vmatpush2.msra.mxu0 0.0
    %3396 = vmatprep.subr.mxu0 0.0
    %3397 = vmatpush2.msra.mxu0 0.0
    %3398 = vmatprep.subr.mxu0 0.0
    %3399 = vmatpush2.msra.mxu0 0.0
    %3400 = vmatprep.subr.mxu0 0.0
    %3401 = vmatpush2.msra.mxu0 0.0
    %3402 = vmatprep.subr.mxu0 0.0
    %3403 = vmatpush2.msra.mxu0 0.0
    %3404 = vmatprep.subr.mxu0 0.0
    %3405 = vmatpush2.msra.mxu0 0.0
    %3406 = vmatprep.subr.mxu0 0.0
    %3407 = vmatpush2.msra.mxu0 0.0
    %3408 = vmatprep.subr.mxu0 0.0
    %3409 = vmatpush2.msra.mxu0 0.0
    %3410 = vmatprep.subr.mxu0 0.0
    %3411 = vmatpush2.msra.mxu0 0.0
    %3412 = vmatprep.subr.mxu0 0.0
    %3413 = vmatpush2.msra.mxu0 0.0
    %3414 = vmatprep.subr.mxu0 0.0
    %3415 = vmatpush2.msra.mxu0 0.0
    %3416 = vmatprep.subr.mxu0 0.0
    %3417 = vmatpush2.msra.mxu0 0.0
    %3418 = vmatprep.subr.mxu0 0.0
    %3419 = vmatpush2.msra.mxu0 0.0
    %3420 = vmatprep.mubr.f32.mxu0 0.0
    %3421 = vmatmul.mubr.f32.gmra.mxu0 %v3283
    %v3422 = vpop.f32.mrf.mxu0
    %v3423 = vadd.f32 0.0, %v3422
    %v3424 = vpop.f32.mrf.mxu0
    %3425 = vdwg.mxu0
    %v3426 = vadd.f32 %v3279, %v3352
    %v3427 = vadd.f32 %v3280, %v3354
    %v3428 = vmul.f32 %v3426, 0.5
    %v3429 = vtanh.pop %v3428
    %v3430 = vmul.f32 %v3429, 0.5
    %v3431 = vadd.f32 %v3430, 0.5
    %v3432 = vmul.f32 %v3427, 0.5
    %v3433 = vtanh.pop %v3432
    %v3434 = vmul.f32 %v3433, 0.5
    %v3435 = vadd.f32 %v3434, 0.5
    %v3436 = vadd.f32 %v3423, %v3104
    %v3437 = vmul.f32 %v3431, %v3436
    %v3438 = vadd.f32 %v3281, %v3437
    %v3439 = vtanh.pop %v3438
    %v3440 = vsub.f32 1.0, %v3435
    %v3441 = vmul.f32 %v3440, %v3439
    %v3442 = vmul.f32 %v3435, %v3278
    %v3443 = vadd.f32 %v3441, %v3442
    %v3444 = vld [vmem:[#allocation2 + $0x48] sm:$0xff]
    %v3445 = vld [vmem:[#allocation2 + $0x50] sm:$0xff]
    %v3446 = vld [vmem:[#allocation2 + $0x58] sm:$0xff]
    %v3448 = vsel %vm437, %v3443, 0
    %3450 = vmatprep.subr.mxu0 0.0
    %3451 = vmatpush1.msra.mxu0 0.0
    %3452 = vmatprep.subr.mxu0 0.0
    %3453 = vmatpush1.msra.mxu0 0.0
    %3454 = vmatprep.subr.mxu0 0.0
    %3455 = vmatpush1.msra.mxu0 0.0
    %3456 = vmatprep.subr.mxu0 0.0
    %3457 = vmatpush1.msra.mxu0 0.0
    %3458 = vmatprep.subr.mxu0 0.0
    %3459 = vmatpush1.msra.mxu0 0.0
    %3460 = vmatprep.subr.mxu0 0.0
    %3461 = vmatpush1.msra.mxu0 0.0
    %3462 = vmatprep.subr.mxu0 0.0
    %3463 = vmatpush1.msra.mxu0 0.0
    %3464 = vmatprep.subr.mxu0 0.0
    %3465 = vmatpush1.msra.mxu0 0.0
    %3466 = vmatprep.subr.mxu0 0.0
    %3467 = vmatpush1.msra.mxu0 0.0
    %3468 = vmatprep.subr.mxu0 0.0
    %3469 = vmatpush1.msra.mxu0 0.0
    %3470 = vmatprep.subr.mxu0 0.0
    %3471 = vmatpush1.msra.mxu0 0.0
    %3472 = vmatprep.subr.mxu0 0.0
    %3473 = vmatpush1.msra.mxu0 0.0
    %3474 = vmatprep.subr.mxu0 %v2942
    %3475 = vmatpush1.msra.mxu0 %v2941
    %3476 = vmatprep.subr.mxu0 %v2939
    %3477 = vmatpush1.msra.mxu0 %v2938
    %3478 = vmatprep.subr.mxu0 %v2936
    %3479 = vmatpush1.msra.mxu0 %v2935
    %3480 = vmatprep.subr.mxu0 %v2933
    %3481 = vmatpush1.msra.mxu0 %v2932
    %3482 = vmatprep.subr.mxu0 0.0
    %3483 = vmatpush2.msra.mxu0 0.0
    %3484 = vmatprep.subr.mxu0 0.0
    %3485 = vmatpush2.msra.mxu0 0.0
    %3486 = vmatprep.subr.mxu0 0.0
    %3487 = vmatpush2.msra.mxu0 0.0
    %3488 = vmatprep.subr.mxu0 0.0
    %3489 = vmatpush2.msra.mxu0 0.0
    %3490 = vmatprep.subr.mxu0 0.0
    %3491 = vmatpush2.msra.mxu0 0.0
    %3492 = vmatprep.subr.mxu0 0.0
    %3493 = vmatpush2.msra.mxu0 0.0
    %3494 = vmatprep.subr.mxu0 0.0
    %3495 = vmatpush2.msra.mxu0 0.0
    %3496 = vmatprep.subr.mxu0 0.0
    %3497 = vmatpush2.msra.mxu0 0.0
    %3498 = vmatprep.subr.mxu0 0.0
    %3499 = vmatpush2.msra.mxu0 0.0
    %3500 = vmatprep.subr.mxu0 0.0
    %3501 = vmatpush2.msra.mxu0 0.0
    %3502 = vmatprep.subr.mxu0 0.0
    %3503 = vmatpush2.msra.mxu0 0.0
    %3504 = vmatprep.subr.mxu0 0.0
    %3505 = vmatpush2.msra.mxu0 0.0
    %3506 = vmatprep.subr.mxu0 0.0
    %3507 = vmatpush2.msra.mxu0 0.0
    %3508 = vmatprep.subr.mxu0 0.0
    %3509 = vmatpush2.msra.mxu0 0.0
    %3510 = vmatprep.subr.mxu0 0.0
    %3511 = vmatpush2.msra.mxu0 0.0
    %3512 = vmatprep.subr.mxu0 0.0
    %3513 = vmatpush2.msra.mxu0 0.0
    %3514 = vmatprep.mubr.f32.mxu0 0.0
    %3515 = vmatmul.mubr.f32.gmra.mxu0 %v3448
    %v3516 = vpop.f32.mrf.mxu0
    %v3517 = vadd.f32 0.0, %v3516
    %v3518 = vpop.f32.mrf.mxu0
    %v3519 = vadd.f32 0.0, %v3518
    %3520 = vdwg.mxu0
    %3521 = vmatprep.subr.mxu0 0.0
    %3522 = vmatpush1.msra.mxu0 0.0
    %3523 = vmatprep.subr.mxu0 0.0
    %3524 = vmatpush1.msra.mxu0 0.0
    %3525 = vmatprep.subr.mxu0 0.0
    %3526 = vmatpush1.msra.mxu0 0.0
    %3527 = vmatprep.subr.mxu0 0.0
    %3528 = vmatpush1.msra.mxu0 0.0
    %3529 = vmatprep.subr.mxu0 0.0
    %3530 = vmatpush1.msra.mxu0 0.0
    %3531 = vmatprep.subr.mxu0 0.0
    %3532 = vmatpush1.msra.mxu0 0.0
    %3533 = vmatprep.subr.mxu0 0.0
    %3534 = vmatpush1.msra.mxu0 0.0
    %3535 = vmatprep.subr.mxu0 0.0
    %3536 = vmatpush1.msra.mxu0 0.0
    %3537 = vmatprep.subr.mxu0 0.0
    %3538 = vmatpush1.msra.mxu0 0.0
    %3539 = vmatprep.subr.mxu0 0.0
    %3540 = vmatpush1.msra.mxu0 0.0
    %3541 = vmatprep.subr.mxu0 0.0
    %3542 = vmatpush1.msra.mxu0 0.0
    %3543 = vmatprep.subr.mxu0 0.0
    %3544 = vmatpush1.msra.mxu0 0.0
    %3545 = vmatprep.subr.mxu0 0.0
    %3546 = vmatpush1.msra.mxu0 %v2943
    %3547 = vmatprep.subr.mxu0 0.0
    %3548 = vmatpush1.msra.mxu0 %v2940
    %3549 = vmatprep.subr.mxu0 0.0
    %3550 = vmatpush1.msra.mxu0 %v2937
    %3551 = vmatprep.subr.mxu0 0.0
    %3552 = vmatpush1.msra.mxu0 %v2934
    %3553 = vmatprep.subr.mxu0 0.0
    %3554 = vmatpush2.msra.mxu0 0.0
    %3555 = vmatprep.subr.mxu0 0.0
    %3556 = vmatpush2.msra.mxu0 0.0
    %3557 = vmatprep.subr.mxu0 0.0
    %3558 = vmatpush2.msra.mxu0 0.0
    %3559 = vmatprep.subr.mxu0 0.0
    %3560 = vmatpush2.msra.mxu0 0.0
    %3561 = vmatprep.subr.mxu0 0.0
    %3562 = vmatpush2.msra.mxu0 0.0
    %3563 = vmatprep.subr.mxu0 0.0
    %3564 = vmatpush2.msra.mxu0 0.0
    %3565 = vmatprep.subr.mxu0 0.0
    %3566 = vmatpush2.msra.mxu0 0.0
    %3567 = vmatprep.subr.mxu0 0.0
    %3568 = vmatpush2.msra.mxu0 0.0
    %3569 = vmatprep.subr.mxu0 0.0
    %3570 = vmatpush2.msra.mxu0 0.0
    %3571 = vmatprep.subr.mxu0 0.0
    %3572 = vmatpush2.msra.mxu0 0.0
    %3573 = vmatprep.subr.mxu0 0.0
    %3574 = vmatpush2.msra.mxu0 0.0
    %3575 = vmatprep.subr.mxu0 0.0
    %3576 = vmatpush2.msra.mxu0 0.0
    %3577 = vmatprep.subr.mxu0 0.0
    %3578 = vmatpush2.msra.mxu0 0.0
    %3579 = vmatprep.subr.mxu0 0.0
    %3580 = vmatpush2.msra.mxu0 0.0
    %3581 = vmatprep.subr.mxu0 0.0
    %3582 = vmatpush2.msra.mxu0 0.0
    %3583 = vmatprep.subr.mxu0 0.0
    %3584 = vmatpush2.msra.mxu0 0.0
    %3585 = vmatprep.mubr.f32.mxu0 0.0
    %3586 = vmatmul.mubr.f32.gmra.mxu0 %v3448
    %v3587 = vpop.f32.mrf.mxu0
    %v3588 = vadd.f32 0.0, %v3587
    %v3589 = vpop.f32.mrf.mxu0
    %3590 = vdwg.mxu0
    %v3591 = vadd.f32 %v3444, %v3517
    %v3592 = vadd.f32 %v3445, %v3519
    %v3593 = vmul.f32 %v3591, 0.5
    %v3594 = vtanh.pop %v3593
    %v3595 = vmul.f32 %v3594, 0.5
    %v3596 = vadd.f32 %v3595, 0.5
    %v3597 = vmul.f32 %v3592, 0.5
    %v3598 = vtanh.pop %v3597
    %v3599 = vmul.f32 %v3598, 0.5
    %v3600 = vadd.f32 %v3599, 0.5
    %v3601 = vadd.f32 %v3588, %v3104
    %v3602 = vmul.f32 %v3596, %v3601
    %v3603 = vadd.f32 %v3446, %v3602
    %v3604 = vtanh.pop %v3603
    %v3605 = vsub.f32 1.0, %v3600
    %v3606 = vmul.f32 %v3605, %v3604
    %v3607 = vmul.f32 %v3600, %v3443
    %v3608 = vadd.f32 %v3606, %v3607
    %v3609 = vld [vmem:[#allocation2 + $0x60] sm:$0xff]
    %v3610 = vld [vmem:[#allocation2 + $0x68] sm:$0xff]
    %v3611 = vld [vmem:[#allocation2 + $0x70] sm:$0xff]
    %v3613 = vsel %vm437, %v3608, 0
    %3615 = vmatprep.subr.mxu0 0.0
    %3616 = vmatpush1.msra.mxu0 0.0
    %3617 = vmatprep.subr.mxu0 0.0
    %3618 = vmatpush1.msra.mxu0 0.0
    %3619 = vmatprep.subr.mxu0 0.0
    %3620 = vmatpush1.msra.mxu0 0.0
    %3621 = vmatprep.subr.mxu0 0.0
    %3622 = vmatpush1.msra.mxu0 0.0
    %3623 = vmatprep.subr.mxu0 0.0
    %3624 = vmatpush1.msra.mxu0 0.0
    %3625 = vmatprep.subr.mxu0 0.0
    %3626 = vmatpush1.msra.mxu0 0.0
    %3627 = vmatprep.subr.mxu0 0.0
    %3628 = vmatpush1.msra.mxu0 0.0
    %3629 = vmatprep.subr.mxu0 0.0
    %3630 = vmatpush1.msra.mxu0 0.0
    %3631 = vmatprep.subr.mxu0 0.0
    %3632 = vmatpush1.msra.mxu0 0.0
    %3633 = vmatprep.subr.mxu0 0.0
    %3634 = vmatpush1.msra.mxu0 0.0
    %3635 = vmatprep.subr.mxu0 0.0
    %3636 = vmatpush1.msra.mxu0 0.0
    %3637 = vmatprep.subr.mxu0 0.0
    %3638 = vmatpush1.msra.mxu0 0.0
    %3639 = vmatprep.subr.mxu0 %v2942
    %3640 = vmatpush1.msra.mxu0 %v2941
    %3641 = vmatprep.subr.mxu0 %v2939
    %3642 = vmatpush1.msra.mxu0 %v2938
    %3643 = vmatprep.subr.mxu0 %v2936
    %3644 = vmatpush1.msra.mxu0 %v2935
    %3645 = vmatprep.subr.mxu0 %v2933
    %3646 = vmatpush1.msra.mxu0 %v2932
    %3647 = vmatprep.subr.mxu0 0.0
    %3648 = vmatpush2.msra.mxu0 0.0
    %3649 = vmatprep.subr.mxu0 0.0
    %3650 = vmatpush2.msra.mxu0 0.0
    %3651 = vmatprep.subr.mxu0 0.0
    %3652 = vmatpush2.msra.mxu0 0.0
    %3653 = vmatprep.subr.mxu0 0.0
    %3654 = vmatpush2.msra.mxu0 0.0
    %3655 = vmatprep.subr.mxu0 0.0
    %3656 = vmatpush2.msra.mxu0 0.0
    %3657 = vmatprep.subr.mxu0 0.0
    %3658 = vmatpush2.msra.mxu0 0.0
    %3659 = vmatprep.subr.mxu0 0.0
    %3660 = vmatpush2.msra.mxu0 0.0
    %3661 = vmatprep.subr.mxu0 0.0
    %3662 = vmatpush2.msra.mxu0 0.0
    %3663 = vmatprep.subr.mxu0 0.0
    %3664 = vmatpush2.msra.mxu0 0.0
    %3665 = vmatprep.subr.mxu0 0.0
    %3666 = vmatpush2.msra.mxu0 0.0
    %3667 = vmatprep.subr.mxu0 0.0
    %3668 = vmatpush2.msra.mxu0 0.0
    %3669 = vmatprep.subr.mxu0 0.0
    %3670 = vmatpush2.msra.mxu0 0.0
    %3671 = vmatprep.subr.mxu0 0.0
    %3672 = vmatpush2.msra.mxu0 0.0
    %3673 = vmatprep.subr.mxu0 0.0
    %3674 = vmatpush2.msra.mxu0 0.0
    %3675 = vmatprep.subr.mxu0 0.0
    %3676 = vmatpush2.msra.mxu0 0.0
    %3677 = vmatprep.subr.mxu0 0.0
    %3678 = vmatpush2.msra.mxu0 0.0
    %3679 = vmatprep.mubr.f32.mxu0 0.0
    %3680 = vmatmul.mubr.f32.gmra.mxu0 %v3613
    %v3681 = vpop.f32.mrf.mxu0
    %v3682 = vadd.f32 0.0, %v3681
    %v3683 = vpop.f32.mrf.mxu0
    %v3684 = vadd.f32 0.0, %v3683
    %3685 = vdwg.mxu0
    %3686 = vmatprep.subr.mxu0 0.0
    %3687 = vmatpush1.msra.mxu0 0.0
    %3688 = vmatprep.subr.mxu0 0.0
    %3689 = vmatpush1.msra.mxu0 0.0
    %3690 = vmatprep.subr.mxu0 0.0
    %3691 = vmatpush1.msra.mxu0 0.0
    %3692 = vmatprep.subr.mxu0 0.0
    %3693 = vmatpush1.msra.mxu0 0.0
    %3694 = vmatprep.subr.mxu0 0.0
    %3695 = vmatpush1.msra.mxu0 0.0
    %3696 = vmatprep.subr.mxu0 0.0
    %3697 = vmatpush1.msra.mxu0 0.0
    %3698 = vmatprep.subr.mxu0 0.0
    %3699 = vmatpush1.msra.mxu0 0.0
    %3700 = vmatprep.subr.mxu0 0.0
    %3701 = vmatpush1.msra.mxu0 0.0
    %3702 = vmatprep.subr.mxu0 0.0
    %3703 = vmatpush1.msra.mxu0 0.0
    %3704 = vmatprep.subr.mxu0 0.0
    %3705 = vmatpush1.msra.mxu0 0.0
    %3706 = vmatprep.subr.mxu0 0.0
    %3707 = vmatpush1.msra.mxu0 0.0
    %3708 = vmatprep.subr.mxu0 0.0
    %3709 = vmatpush1.msra.mxu0 0.0
    %3710 = vmatprep.subr.mxu0 0.0
    %3711 = vmatpush1.msra.mxu0 %v2943
    %3712 = vmatprep.subr.mxu0 0.0
    %3713 = vmatpush1.msra.mxu0 %v2940
    %3714 = vmatprep.subr.mxu0 0.0
    %3715 = vmatpush1.msra.mxu0 %v2937
    %3716 = vmatprep.subr.mxu0 0.0
    %3717 = vmatpush1.msra.mxu0 %v2934
    %3718 = vmatprep.subr.mxu0 0.0
    %3719 = vmatpush2.msra.mxu0 0.0
    %3720 = vmatprep.subr.mxu0 0.0
    %3721 = vmatpush2.msra.mxu0 0.0
    %3722 = vmatprep.subr.mxu0 0.0
    %3723 = vmatpush2.msra.mxu0 0.0
    %3724 = vmatprep.subr.mxu0 0.0
    %3725 = vmatpush2.msra.mxu0 0.0
    %3726 = vmatprep.subr.mxu0 0.0
    %3727 = vmatpush2.msra.mxu0 0.0
    %3728 = vmatprep.subr.mxu0 0.0
    %3729 = vmatpush2.msra.mxu0 0.0
    %3730 = vmatprep.subr.mxu0 0.0
    %3731 = vmatpush2.msra.mxu0 0.0
    %3732 = vmatprep.subr.mxu0 0.0
    %3733 = vmatpush2.msra.mxu0 0.0
    %3734 = vmatprep.subr.mxu0 0.0
    %3735 = vmatpush2.msra.mxu0 0.0
    %3736 = vmatprep.subr.mxu0 0.0
    %3737 = vmatpush2.msra.mxu0 0.0
    %3738 = vmatprep.subr.mxu0 0.0
    %3739 = vmatpush2.msra.mxu0 0.0
    %3740 = vmatprep.subr.mxu0 0.0
    %3741 = vmatpush2.msra.mxu0 0.0
    %3742 = vmatprep.subr.mxu0 0.0
    %3743 = vmatpush2.msra.mxu0 0.0
    %3744 = vmatprep.subr.mxu0 0.0
    %3745 = vmatpush2.msra.mxu0 0.0
    %3746 = vmatprep.subr.mxu0 0.0
    %3747 = vmatpush2.msra.mxu0 0.0
    %3748 = vmatprep.subr.mxu0 0.0
    %3749 = vmatpush2.msra.mxu0 0.0
    %3750 = vmatprep.mubr.f32.mxu0 0.0
    %3751 = vmatmul.mubr.f32.gmra.mxu0 %v3613
    %v3752 = vpop.f32.mrf.mxu0
    %v3753 = vadd.f32 0.0, %v3752
    %v3754 = vpop.f32.mrf.mxu0
    %3755 = vdwg.mxu0
    %v3756 = vadd.f32 %v3609, %v3682
    %v3757 = vadd.f32 %v3610, %v3684
    %v3758 = vmul.f32 %v3756, 0.5
    %v3759 = vtanh.pop %v3758
    %v3760 = vmul.f32 %v3759, 0.5
    %v3761 = vadd.f32 %v3760, 0.5
    %v3762 = vmul.f32 %v3757, 0.5
    %v3763 = vtanh.pop %v3762
    %v3764 = vmul.f32 %v3763, 0.5
    %v3765 = vadd.f32 %v3764, 0.5
    %v3766 = vadd.f32 %v3753, %v3104
    %v3767 = vmul.f32 %v3761, %v3766
    %v3768 = vadd.f32 %v3611, %v3767
    %v3769 = vtanh.pop %v3768
    %v3770 = vsub.f32 1.0, %v3765
    %v3771 = vmul.f32 %v3770, %v3769
    %v3772 = vmul.f32 %v3765, %v3608
    %v3773 = vadd.f32 %v3771, %v3772
    %v3774 = vld [vmem:[#allocation2 + $0x78] sm:$0xff]
    %v3775 = vld [vmem:[#allocation2 + $0x80] sm:$0xff]
    %v3776 = vld [vmem:[#allocation2 + $0x88] sm:$0xff]
    %v3778 = vsel %vm437, %v3773, 0
    %3780 = vmatprep.subr.mxu0 0.0
    %3781 = vmatpush1.msra.mxu0 0.0
    %3782 = vmatprep.subr.mxu0 0.0
    %3783 = vmatpush1.msra.mxu0 0.0
    %3784 = vmatprep.subr.mxu0 0.0
    %3785 = vmatpush1.msra.mxu0 0.0
    %3786 = vmatprep.subr.mxu0 0.0
    %3787 = vmatpush1.msra.mxu0 0.0
    %3788 = vmatprep.subr.mxu0 0.0
    %3789 = vmatpush1.msra.mxu0 0.0
    %3790 = vmatprep.subr.mxu0 0.0
    %3791 = vmatpush1.msra.mxu0 0.0
    %3792 = vmatprep.subr.mxu0 0.0
    %3793 = vmatpush1.msra.mxu0 0.0
    %3794 = vmatprep.subr.mxu0 0.0
    %3795 = vmatpush1.msra.mxu0 0.0
    %3796 = vmatprep.subr.mxu0 0.0
    %3797 = vmatpush1.msra.mxu0 0.0
    %3798 = vmatprep.subr.mxu0 0.0
    %3799 = vmatpush1.msra.mxu0 0.0
    %3800 = vmatprep.subr.mxu0 0.0
    %3801 = vmatpush1.msra.mxu0 0.0
    %3802 = vmatprep.subr.mxu0 0.0
    %3803 = vmatpush1.msra.mxu0 0.0
    %3804 = vmatprep.subr.mxu0 %v2942
    %3805 = vmatpush1.msra.mxu0 %v2941
    %3806 = vmatprep.subr.mxu0 %v2939
    %3807 = vmatpush1.msra.mxu0 %v2938
    %3808 = vmatprep.subr.mxu0 %v2936
    %3809 = vmatpush1.msra.mxu0 %v2935
    %3810 = vmatprep.subr.mxu0 %v2933
    %3811 = vmatpush1.msra.mxu0 %v2932
    %3812 = vmatprep.subr.mxu0 0.0
    %3813 = vmatpush2.msra.mxu0 0.0
    %3814 = vmatprep.subr.mxu0 0.0
    %3815 = vmatpush2.msra.mxu0 0.0
    %3816 = vmatprep.subr.mxu0 0.0
    %3817 = vmatpush2.msra.mxu0 0.0
    %3818 = vmatprep.subr.mxu0 0.0
    %3819 = vmatpush2.msra.mxu0 0.0
    %3820 = vmatprep.subr.mxu0 0.0
    %3821 = vmatpush2.msra.mxu0 0.0
    %3822 = vmatprep.subr.mxu0 0.0
    %3823 = vmatpush2.msra.mxu0 0.0
    %3824 = vmatprep.subr.mxu0 0.0
    %3825 = vmatpush2.msra.mxu0 0.0
    %3826 = vmatprep.subr.mxu0 0.0
    %3827 = vmatpush2.msra.mxu0 0.0
    %3828 = vmatprep.subr.mxu0 0.0
    %3829 = vmatpush2.msra.mxu0 0.0
    %3830 = vmatprep.subr.mxu0 0.0
    %3831 = vmatpush2.msra.mxu0 0.0
    %3832 = vmatprep.subr.mxu0 0.0
    %3833 = vmatpush2.msra.mxu0 0.0
    %3834 = vmatprep.subr.mxu0 0.0
    %3835 = vmatpush2.msra.mxu0 0.0
    %3836 = vmatprep.subr.mxu0 0.0
    %3837 = vmatpush2.msra.mxu0 0.0
    %3838 = vmatprep.subr.mxu0 0.0
    %3839 = vmatpush2.msra.mxu0 0.0
    %3840 = vmatprep.subr.mxu0 0.0
    %3841 = vmatpush2.msra.mxu0 0.0
    %3842 = vmatprep.subr.mxu0 0.0
    %3843 = vmatpush2.msra.mxu0 0.0
    %3844 = vmatprep.mubr.f32.mxu0 0.0
    %3845 = vmatmul.mubr.f32.gmra.mxu0 %v3778
    %v3846 = vpop.f32.mrf.mxu0
    %v3847 = vadd.f32 0.0, %v3846
    %v3848 = vpop.f32.mrf.mxu0
    %v3849 = vadd.f32 0.0, %v3848
    %3850 = vdwg.mxu0
    %3851 = vmatprep.subr.mxu0 0.0
    %3852 = vmatpush1.msra.mxu0 0.0
    %3853 = vmatprep.subr.mxu0 0.0
    %3854 = vmatpush1.msra.mxu0 0.0
    %3855 = vmatprep.subr.mxu0 0.0
    %3856 = vmatpush1.msra.mxu0 0.0
    %3857 = vmatprep.subr.mxu0 0.0
    %3858 = vmatpush1.msra.mxu0 0.0
    %3859 = vmatprep.subr.mxu0 0.0
    %3860 = vmatpush1.msra.mxu0 0.0
    %3861 = vmatprep.subr.mxu0 0.0
    %3862 = vmatpush1.msra.mxu0 0.0
    %3863 = vmatprep.subr.mxu0 0.0
    %3864 = vmatpush1.msra.mxu0 0.0
    %3865 = vmatprep.subr.mxu0 0.0
    %3866 = vmatpush1.msra.mxu0 0.0
    %3867 = vmatprep.subr.mxu0 0.0
    %3868 = vmatpush1.msra.mxu0 0.0
    %3869 = vmatprep.subr.mxu0 0.0
    %3870 = vmatpush1.msra.mxu0 0.0
    %3871 = vmatprep.subr.mxu0 0.0
    %3872 = vmatpush1.msra.mxu0 0.0
    %3873 = vmatprep.subr.mxu0 0.0
    %3874 = vmatpush1.msra.mxu0 0.0
    %3875 = vmatprep.subr.mxu0 0.0
    %3876 = vmatpush1.msra.mxu0 %v2943
    %3877 = vmatprep.subr.mxu0 0.0
    %3878 = vmatpush1.msra.mxu0 %v2940
    %3879 = vmatprep.subr.mxu0 0.0
    %3880 = vmatpush1.msra.mxu0 %v2937
    %3881 = vmatprep.subr.mxu0 0.0
    %3882 = vmatpush1.msra.mxu0 %v2934
    %3883 = vmatprep.subr.mxu0 0.0
    %3884 = vmatpush2.msra.mxu0 0.0
    %3885 = vmatprep.subr.mxu0 0.0
    %3886 = vmatpush2.msra.mxu0 0.0
    %3887 = vmatprep.subr.mxu0 0.0
    %3888 = vmatpush2.msra.mxu0 0.0
    %3889 = vmatprep.subr.mxu0 0.0
    %3890 = vmatpush2.msra.mxu0 0.0
    %3891 = vmatprep.subr.mxu0 0.0
    %3892 = vmatpush2.msra.mxu0 0.0
    %3893 = vmatprep.subr.mxu0 0.0
    %3894 = vmatpush2.msra.mxu0 0.0
    %3895 = vmatprep.subr.mxu0 0.0
    %3896 = vmatpush2.msra.mxu0 0.0
    %3897 = vmatprep.subr.mxu0 0.0
    %3898 = vmatpush2.msra.mxu0 0.0
    %3899 = vmatprep.subr.mxu0 0.0
    %3900 = vmatpush2.msra.mxu0 0.0
    %3901 = vmatprep.subr.mxu0 0.0
    %3902 = vmatpush2.msra.mxu0 0.0
    %3903 = vmatprep.subr.mxu0 0.0
    %3904 = vmatpush2.msra.mxu0 0.0
    %3905 = vmatprep.subr.mxu0 0.0
    %3906 = vmatpush2.msra.mxu0 0.0
    %3907 = vmatprep.subr.mxu0 0.0
    %3908 = vmatpush2.msra.mxu0 0.0
    %3909 = vmatprep.subr.mxu0 0.0
    %3910 = vmatpush2.msra.mxu0 0.0
    %3911 = vmatprep.subr.mxu0 0.0
    %3912 = vmatpush2.msra.mxu0 0.0
    %3913 = vmatprep.subr.mxu0 0.0
    %3914 = vmatpush2.msra.mxu0 0.0
    %3915 = vmatprep.mubr.f32.mxu0 0.0
    %3916 = vmatmul.mubr.f32.gmra.mxu0 %v3778
    %v3917 = vpop.f32.mrf.mxu0
    %v3918 = vadd.f32 0.0, %v3917
    %v3919 = vpop.f32.mrf.mxu0
    %3920 = vdwg.mxu0
    %v3921 = vadd.f32 %v3774, %v3847
    %v3922 = vadd.f32 %v3775, %v3849
    %v3923 = vmul.f32 %v3921, 0.5
    %v3924 = vtanh.pop %v3923
    %v3925 = vmul.f32 %v3924, 0.5
    %v3926 = vadd.f32 %v3925, 0.5
    %v3927 = vmul.f32 %v3922, 0.5
    %v3928 = vtanh.pop %v3927
    %v3929 = vmul.f32 %v3928, 0.5
    %v3930 = vadd.f32 %v3929, 0.5
    %v3931 = vadd.f32 %v3918, %v3104
    %v3932 = vmul.f32 %v3926, %v3931
    %v3933 = vadd.f32 %v3776, %v3932
    %v3934 = vtanh.pop %v3933
    %v3935 = vsub.f32 1.0, %v3930
    %v3936 = vmul.f32 %v3935, %v3934
    %v3937 = vmul.f32 %v3930, %v3773
    %v3938 = vadd.f32 %v3936, %v3937
    %v3939 = vld [vmem:[#allocation2 + $0x90] sm:$0xff]
    %v3940 = vld [vmem:[#allocation2 + $0x98] sm:$0xff]
    %v3941 = vld [vmem:[#allocation2 + $0xa0] sm:$0xff]
    %v3943 = vsel %vm437, %v3938, 0
    %3945 = vmatprep.subr.mxu0 0.0
    %3946 = vmatpush1.msra.mxu0 0.0
    %3947 = vmatprep.subr.mxu0 0.0
    %3948 = vmatpush1.msra.mxu0 0.0
    %3949 = vmatprep.subr.mxu0 0.0
    %3950 = vmatpush1.msra.mxu0 0.0
    %3951 = vmatprep.subr.mxu0 0.0
    %3952 = vmatpush1.msra.mxu0 0.0
    %3953 = vmatprep.subr.mxu0 0.0
    %3954 = vmatpush1.msra.mxu0 0.0
    %3955 = vmatprep.subr.mxu0 0.0
    %3956 = vmatpush1.msra.mxu0 0.0
    %3957 = vmatprep.subr.mxu0 0.0
    %3958 = vmatpush1.msra.mxu0 0.0
    %3959 = vmatprep.subr.mxu0 0.0
    %3960 = vmatpush1.msra.mxu0 0.0
    %3961 = vmatprep.subr.mxu0 0.0
    %3962 = vmatpush1.msra.mxu0 0.0
    %3963 = vmatprep.subr.mxu0 0.0
    %3964 = vmatpush1.msra.mxu0 0.0
    %3965 = vmatprep.subr.mxu0 0.0
    %3966 = vmatpush1.msra.mxu0 0.0
    %3967 = vmatprep.subr.mxu0 0.0
    %3968 = vmatpush1.msra.mxu0 0.0
    %3969 = vmatprep.subr.mxu0 %v2942
    %3970 = vmatpush1.msra.mxu0 %v2941
    %3971 = vmatprep.subr.mxu0 %v2939
    %3972 = vmatpush1.msra.mxu0 %v2938
    %3973 = vmatprep.subr.mxu0 %v2936
    %3974 = vmatpush1.msra.mxu0 %v2935
    %3975 = vmatprep.subr.mxu0 %v2933
    %3976 = vmatpush1.msra.mxu0 %v2932
    %3977 = vmatprep.subr.mxu0 0.0
    %3978 = vmatpush2.msra.mxu0 0.0
    %3979 = vmatprep.subr.mxu0 0.0
    %3980 = vmatpush2.msra.mxu0 0.0
    %3981 = vmatprep.subr.mxu0 0.0
    %3982 = vmatpush2.msra.mxu0 0.0
    %3983 = vmatprep.subr.mxu0 0.0
    %3984 = vmatpush2.msra.mxu0 0.0
    %3985 = vmatprep.subr.mxu0 0.0
    %3986 = vmatpush2.msra.mxu0 0.0
    %3987 = vmatprep.subr.mxu0 0.0
    %3988 = vmatpush2.msra.mxu0 0.0
    %3989 = vmatprep.subr.mxu0 0.0
    %3990 = vmatpush2.msra.mxu0 0.0
    %3991 = vmatprep.subr.mxu0 0.0
    %3992 = vmatpush2.msra.mxu0 0.0
    %3993 = vmatprep.subr.mxu0 0.0
    %3994 = vmatpush2.msra.mxu0 0.0
    %3995 = vmatprep.subr.mxu0 0.0
    %3996 = vmatpush2.msra.mxu0 0.0
    %3997 = vmatprep.subr.mxu0 0.0
    %3998 = vmatpush2.msra.mxu0 0.0
    %3999 = vmatprep.subr.mxu0 0.0
    %4000 = vmatpush2.msra.mxu0 0.0
    %4001 = vmatprep.subr.mxu0 0.0
    %4002 = vmatpush2.msra.mxu0 0.0
    %4003 = vmatprep.subr.mxu0 0.0
    %4004 = vmatpush2.msra.mxu0 0.0
    %4005 = vmatprep.subr.mxu0 0.0
    %4006 = vmatpush2.msra.mxu0 0.0
    %4007 = vmatprep.subr.mxu0 0.0
    %4008 = vmatpush2.msra.mxu0 0.0
    %4009 = vmatprep.mubr.f32.mxu0 0.0
    %4010 = vmatmul.mubr.f32.gmra.mxu0 %v3943
    %v4011 = vpop.f32.mrf.mxu0
    %v4012 = vadd.f32 0.0, %v4011
    %v4013 = vpop.f32.mrf.mxu0
    %v4014 = vadd.f32 0.0, %v4013
    %4015 = vdwg.mxu0
    %4016 = vmatprep.subr.mxu0 0.0
    %4017 = vmatpush1.msra.mxu0 0.0
    %4018 = vmatprep.subr.mxu0 0.0
    %4019 = vmatpush1.msra.mxu0 0.0
    %4020 = vmatprep.subr.mxu0 0.0
    %4021 = vmatpush1.msra.mxu0 0.0
    %4022 = vmatprep.subr.mxu0 0.0
    %4023 = vmatpush1.msra.mxu0 0.0
    %4024 = vmatprep.subr.mxu0 0.0
    %4025 = vmatpush1.msra.mxu0 0.0
    %4026 = vmatprep.subr.mxu0 0.0
    %4027 = vmatpush1.msra.mxu0 0.0
    %4028 = vmatprep.subr.mxu0 0.0
    %4029 = vmatpush1.msra.mxu0 0.0
    %4030 = vmatprep.subr.mxu0 0.0
    %4031 = vmatpush1.msra.mxu0 0.0
    %4032 = vmatprep.subr.mxu0 0.0
    %4033 = vmatpush1.msra.mxu0 0.0
    %4034 = vmatprep.subr.mxu0 0.0
    %4035 = vmatpush1.msra.mxu0 0.0
    %4036 = vmatprep.subr.mxu0 0.0
    %4037 = vmatpush1.msra.mxu0 0.0
    %4038 = vmatprep.subr.mxu0 0.0
    %4039 = vmatpush1.msra.mxu0 0.0
    %4040 = vmatprep.subr.mxu0 0.0
    %4041 = vmatpush1.msra.mxu0 %v2943
    %4042 = vmatprep.subr.mxu0 0.0
    %4043 = vmatpush1.msra.mxu0 %v2940
    %4044 = vmatprep.subr.mxu0 0.0
    %4045 = vmatpush1.msra.mxu0 %v2937
    %4046 = vmatprep.subr.mxu0 0.0
    %4047 = vmatpush1.msra.mxu0 %v2934
    %4048 = vmatprep.subr.mxu0 0.0
    %4049 = vmatpush2.msra.mxu0 0.0
    %4050 = vmatprep.subr.mxu0 0.0
    %4051 = vmatpush2.msra.mxu0 0.0
    %4052 = vmatprep.subr.mxu0 0.0
    %4053 = vmatpush2.msra.mxu0 0.0
    %4054 = vmatprep.subr.mxu0 0.0
    %4055 = vmatpush2.msra.mxu0 0.0
    %4056 = vmatprep.subr.mxu0 0.0
    %4057 = vmatpush2.msra.mxu0 0.0
    %4058 = vmatprep.subr.mxu0 0.0
    %4059 = vmatpush2.msra.mxu0 0.0
    %4060 = vmatprep.subr.mxu0 0.0
    %4061 = vmatpush2.msra.mxu0 0.0
    %4062 = vmatprep.subr.mxu0 0.0
    %4063 = vmatpush2.msra.mxu0 0.0
    %4064 = vmatprep.subr.mxu0 0.0
    %4065 = vmatpush2.msra.mxu0 0.0
    %4066 = vmatprep.subr.mxu0 0.0
    %4067 = vmatpush2.msra.mxu0 0.0
    %4068 = vmatprep.subr.mxu0 0.0
    %4069 = vmatpush2.msra.mxu0 0.0
    %4070 = vmatprep.subr.mxu0 0.0
    %4071 = vmatpush2.msra.mxu0 0.0
    %4072 = vmatprep.subr.mxu0 0.0
    %4073 = vmatpush2.msra.mxu0 0.0
    %4074 = vmatprep.subr.mxu0 0.0
    %4075 = vmatpush2.msra.mxu0 0.0
    %4076 = vmatprep.subr.mxu0 0.0
    %4077 = vmatpush2.msra.mxu0 0.0
    %4078 = vmatprep.subr.mxu0 0.0
    %4079 = vmatpush2.msra.mxu0 0.0
    %4080 = vmatprep.mubr.f32.mxu0 0.0
    %4081 = vmatmul.mubr.f32.gmra.mxu0 %v3943
    %v4082 = vpop.f32.mrf.mxu0
    %v4083 = vadd.f32 0.0, %v4082
    %v4084 = vpop.f32.mrf.mxu0
    %4085 = vdwg.mxu0
    %v4086 = vadd.f32 %v3939, %v4012
    %v4087 = vadd.f32 %v3940, %v4014
    %v4088 = vmul.f32 %v4086, 0.5
    %v4089 = vtanh.pop %v4088
    %v4090 = vmul.f32 %v4089, 0.5
    %v4091 = vadd.f32 %v4090, 0.5
    %v4092 = vmul.f32 %v4087, 0.5
    %v4093 = vtanh.pop %v4092
    %v4094 = vmul.f32 %v4093, 0.5
    %v4095 = vadd.f32 %v4094, 0.5
    %v4096 = vadd.f32 %v4083, %v3104
    %v4097 = vmul.f32 %v4091, %v4096
    %v4098 = vadd.f32 %v3941, %v4097
    %v4099 = vtanh.pop %v4098
    %v4100 = vsub.f32 1.0, %v4095
    %v4101 = vmul.f32 %v4100, %v4099
    %v4102 = vmul.f32 %v4095, %v3938
    %v4103 = vadd.f32 %v4101, %v4102
    %v4104 = vld [vmem:[#allocation2 + $0xa8] sm:$0xff]
    %v4105 = vld [vmem:[#allocation2 + $0xb0] sm:$0xff]
    %v4106 = vld [vmem:[#allocation2 + $0xb8] sm:$0xff]
    %v4108 = vsel %vm437, %v4103, 0
    %4110 = vmatprep.subr.mxu0 0.0
    %4111 = vmatpush1.msra.mxu0 0.0
    %4112 = vmatprep.subr.mxu0 0.0
    %4113 = vmatpush1.msra.mxu0 0.0
    %4114 = vmatprep.subr.mxu0 0.0
    %4115 = vmatpush1.msra.mxu0 0.0
    %4116 = vmatprep.subr.mxu0 0.0
    %4117 = vmatpush1.msra.mxu0 0.0
    %4118 = vmatprep.subr.mxu0 0.0
    %4119 = vmatpush1.msra.mxu0 0.0
    %4120 = vmatprep.subr.mxu0 0.0
    %4121 = vmatpush1.msra.mxu0 0.0
    %4122 = vmatprep.subr.mxu0 0.0
    %4123 = vmatpush1.msra.mxu0 0.0
    %4124 = vmatprep.subr.mxu0 0.0
    %4125 = vmatpush1.msra.mxu0 0.0
    %4126 = vmatprep.subr.mxu0 0.0
    %4127 = vmatpush1.msra.mxu0 0.0
    %4128 = vmatprep.subr.mxu0 0.0
    %4129 = vmatpush1.msra.mxu0 0.0
    %4130 = vmatprep.subr.mxu0 0.0
    %4131 = vmatpush1.msra.mxu0 0.0
    %4132 = vmatprep.subr.mxu0 0.0
    %4133 = vmatpush1.msra.mxu0 0.0
    %4134 = vmatprep.subr.mxu0 %v2942
    %4135 = vmatpush1.msra.mxu0 %v2941
    %4136 = vmatprep.subr.mxu0 %v2939
    %4137 = vmatpush1.msra.mxu0 %v2938
    %4138 = vmatprep.subr.mxu0 %v2936
    %4139 = vmatpush1.msra.mxu0 %v2935
    %4140 = vmatprep.subr.mxu0 %v2933
    %4141 = vmatpush1.msra.mxu0 %v2932
    %4142 = vmatprep.subr.mxu0 0.0
    %4143 = vmatpush2.msra.mxu0 0.0
    %4144 = vmatprep.subr.mxu0 0.0
    %4145 = vmatpush2.msra.mxu0 0.0
    %4146 = vmatprep.subr.mxu0 0.0
    %4147 = vmatpush2.msra.mxu0 0.0
    %4148 = vmatprep.subr.mxu0 0.0
    %4149 = vmatpush2.msra.mxu0 0.0
    %4150 = vmatprep.subr.mxu0 0.0
    %4151 = vmatpush2.msra.mxu0 0.0
    %4152 = vmatprep.subr.mxu0 0.0
    %4153 = vmatpush2.msra.mxu0 0.0
    %4154 = vmatprep.subr.mxu0 0.0
    %4155 = vmatpush2.msra.mxu0 0.0
    %4156 = vmatprep.subr.mxu0 0.0
    %4157 = vmatpush2.msra.mxu0 0.0
    %4158 = vmatprep.subr.mxu0 0.0
    %4159 = vmatpush2.msra.mxu0 0.0
    %4160 = vmatprep.subr.mxu0 0.0
    %4161 = vmatpush2.msra.mxu0 0.0
    %4162 = vmatprep.subr.mxu0 0.0
    %4163 = vmatpush2.msra.mxu0 0.0
    %4164 = vmatprep.subr.mxu0 0.0
    %4165 = vmatpush2.msra.mxu0 0.0
    %4166 = vmatprep.subr.mxu0 0.0
    %4167 = vmatpush2.msra.mxu0 0.0
    %4168 = vmatprep.subr.mxu0 0.0
    %4169 = vmatpush2.msra.mxu0 0.0
    %4170 = vmatprep.subr.mxu0 0.0
    %4171 = vmatpush2.msra.mxu0 0.0
    %4172 = vmatprep.subr.mxu0 0.0
    %4173 = vmatpush2.msra.mxu0 0.0
    %4174 = vmatprep.mubr.f32.mxu0 0.0
    %4175 = vmatmul.mubr.f32.gmra.mxu0 %v4108
    %v4176 = vpop.f32.mrf.mxu0
    %v4177 = vadd.f32 0.0, %v4176
    %v4178 = vpop.f32.mrf.mxu0
    %v4179 = vadd.f32 0.0, %v4178
    %4180 = vdwg.mxu0
    %4181 = vmatprep.subr.mxu0 0.0
    %4182 = vmatpush1.msra.mxu0 0.0
    %4183 = vmatprep.subr.mxu0 0.0
    %4184 = vmatpush1.msra.mxu0 0.0
    %4185 = vmatprep.subr.mxu0 0.0
    %4186 = vmatpush1.msra.mxu0 0.0
    %4187 = vmatprep.subr.mxu0 0.0
    %4188 = vmatpush1.msra.mxu0 0.0
    %4189 = vmatprep.subr.mxu0 0.0
    %4190 = vmatpush1.msra.mxu0 0.0
    %4191 = vmatprep.subr.mxu0 0.0
    %4192 = vmatpush1.msra.mxu0 0.0
    %4193 = vmatprep.subr.mxu0 0.0
    %4194 = vmatpush1.msra.mxu0 0.0
    %4195 = vmatprep.subr.mxu0 0.0
    %4196 = vmatpush1.msra.mxu0 0.0
    %4197 = vmatprep.subr.mxu0 0.0
    %4198 = vmatpush1.msra.mxu0 0.0
    %4199 = vmatprep.subr.mxu0 0.0
    %4200 = vmatpush1.msra.mxu0 0.0
    %4201 = vmatprep.subr.mxu0 0.0
    %4202 = vmatpush1.msra.mxu0 0.0
    %4203 = vmatprep.subr.mxu0 0.0
    %4204 = vmatpush1.msra.mxu0 0.0
    %4205 = vmatprep.subr.mxu0 0.0
    %4206 = vmatpush1.msra.mxu0 %v2943
    %4207 = vmatprep.subr.mxu0 0.0
    %4208 = vmatpush1.msra.mxu0 %v2940
    %4209 = vmatprep.subr.mxu0 0.0
    %4210 = vmatpush1.msra.mxu0 %v2937
    %4211 = vmatprep.subr.mxu0 0.0
    %4212 = vmatpush1.msra.mxu0 %v2934
    %4213 = vmatprep.subr.mxu0 0.0
    %4214 = vmatpush2.msra.mxu0 0.0
    %4215 = vmatprep.subr.mxu0 0.0
    %4216 = vmatpush2.msra.mxu0 0.0
    %4217 = vmatprep.subr.mxu0 0.0
    %4218 = vmatpush2.msra.mxu0 0.0
    %4219 = vmatprep.subr.mxu0 0.0
    %4220 = vmatpush2.msra.mxu0 0.0
    %4221 = vmatprep.subr.mxu0 0.0
    %4222 = vmatpush2.msra.mxu0 0.0
    %4223 = vmatprep.subr.mxu0 0.0
    %4224 = vmatpush2.msra.mxu0 0.0
    %4225 = vmatprep.subr.mxu0 0.0
    %4226 = vmatpush2.msra.mxu0 0.0
    %4227 = vmatprep.subr.mxu0 0.0
    %4228 = vmatpush2.msra.mxu0 0.0
    %4229 = vmatprep.subr.mxu0 0.0
    %4230 = vmatpush2.msra.mxu0 0.0
    %4231 = vmatprep.subr.mxu0 0.0
    %4232 = vmatpush2.msra.mxu0 0.0
    %4233 = vmatprep.subr.mxu0 0.0
    %4234 = vmatpush2.msra.mxu0 0.0
    %4235 = vmatprep.subr.mxu0 0.0
    %4236 = vmatpush2.msra.mxu0 0.0
    %4237 = vmatprep.subr.mxu0 0.0
    %4238 = vmatpush2.msra.mxu0 0.0
    %4239 = vmatprep.subr.mxu0 0.0
    %4240 = vmatpush2.msra.mxu0 0.0
    %4241 = vmatprep.subr.mxu0 0.0
    %4242 = vmatpush2.msra.mxu0 0.0
    %4243 = vmatprep.subr.mxu0 0.0
    %4244 = vmatpush2.msra.mxu0 0.0
    %4245 = vmatprep.mubr.f32.mxu0 0.0
    %4246 = vmatmul.mubr.f32.gmra.mxu0 %v4108
    %v4247 = vpop.f32.mrf.mxu0
    %v4248 = vadd.f32 0.0, %v4247
    %v4249 = vpop.f32.mrf.mxu0
    %4250 = vdwg.mxu0
    %v4251 = vadd.f32 %v4104, %v4177
    %v4252 = vadd.f32 %v4105, %v4179
    %v4253 = vmul.f32 %v4251, 0.5
    %v4254 = vtanh.pop %v4253
    %v4255 = vmul.f32 %v4254, 0.5
    %v4256 = vadd.f32 %v4255, 0.5
    %v4257 = vmul.f32 %v4252, 0.5
    %v4258 = vtanh.pop %v4257
    %v4259 = vmul.f32 %v4258, 0.5
    %v4260 = vadd.f32 %v4259, 0.5
    %v4261 = vadd.f32 %v4248, %v3104
    %v4262 = vmul.f32 %v4256, %v4261
    %v4263 = vadd.f32 %v4106, %v4262
    %v4264 = vtanh.pop %v4263
    %v4265 = vsub.f32 1.0, %v4260
    %v4266 = vmul.f32 %v4265, %v4264
    %v4267 = vmul.f32 %v4260, %v4103
    %v4268 = vadd.f32 %v4266, %v4267
    %v4269 = vld [vmem:[%s5] sm:$0xff]
    %v4270 = vld [vmem:[%s5 + $0x8] sm:$0xff]
    %v4271 = vld [vmem:[%s5 + $0x10] sm:$0xff]
    %v4272 = vld [vmem:[%s5 + $0x18] sm:$0xff]
    %v4273 = vld [vmem:[%s5 + $0x20] sm:$0xff]
    %v4274 = vld [vmem:[%s5 + $0x28] sm:$0x1]
    %v4275 = vld [vmem:[%s1] sm:$0xff]
    %v4277 = vsel %vm437, %v4268, 0
    %4279 = vmatprep.subr.mxu0 0.0
    %4280 = vmatpush1.msra.mxu0 0.0
    %4281 = vmatprep.subr.mxu0 0.0
    %4282 = vmatpush1.msra.mxu0 0.0
    %4283 = vmatprep.subr.mxu0 0.0
    %4284 = vmatpush1.msra.mxu0 0.0
    %4285 = vmatprep.subr.mxu0 0.0
    %4286 = vmatpush1.msra.mxu0 0.0
    %4287 = vmatprep.subr.mxu0 0.0
    %4288 = vmatpush1.msra.mxu0 0.0
    %4289 = vmatprep.subr.mxu0 0.0
    %4290 = vmatpush1.msra.mxu0 0.0
    %4291 = vmatprep.subr.mxu0 0.0
    %4292 = vmatpush1.msra.mxu0 0.0
    %4293 = vmatprep.subr.mxu0 0.0
    %4294 = vmatpush1.msra.mxu0 0.0
    %4295 = vmatprep.subr.mxu0 0.0
    %4296 = vmatpush1.msra.mxu0 0.0
    %4297 = vmatprep.subr.mxu0 0.0
    %4298 = vmatpush1.msra.mxu0 0.0
    %4299 = vmatprep.subr.mxu0 0.0
    %4300 = vmatpush1.msra.mxu0 0.0
    %4301 = vmatprep.subr.mxu0 0.0
    %4302 = vmatpush1.msra.mxu0 0.0
    %4303 = vmatprep.subr.mxu0 0.0
    %4304 = vmatpush1.msra.mxu0 %v4273
    %4305 = vmatprep.subr.mxu0 0.0
    %4306 = vmatpush1.msra.mxu0 %v4272
    %4307 = vmatprep.subr.mxu0 0.0
    %4308 = vmatpush1.msra.mxu0 %v4271
    %4309 = vmatprep.subr.mxu0 0.0
    %4310 = vmatpush1.msra.mxu0 %v4270
    %4311 = vmatprep.subr.mxu0 0.0
    %4312 = vmatpush2.msra.mxu0 0.0
    %4313 = vmatprep.subr.mxu0 0.0
    %4314 = vmatpush2.msra.mxu0 0.0
    %4315 = vmatprep.subr.mxu0 0.0
    %4316 = vmatpush2.msra.mxu0 0.0
    %4317 = vmatprep.subr.mxu0 0.0
    %4318 = vmatpush2.msra.mxu0 0.0
    %4319 = vmatprep.subr.mxu0 0.0
    %4320 = vmatpush2.msra.mxu0 0.0
    %4321 = vmatprep.subr.mxu0 0.0
    %4322 = vmatpush2.msra.mxu0 0.0
    %4323 = vmatprep.subr.mxu0 0.0
    %4324 = vmatpush2.msra.mxu0 0.0
    %4325 = vmatprep.subr.mxu0 0.0
    %4326 = vmatpush2.msra.mxu0 0.0
    %4327 = vmatprep.subr.mxu0 0.0
    %4328 = vmatpush2.msra.mxu0 0.0
    %4329 = vmatprep.subr.mxu0 0.0
    %4330 = vmatpush2.msra.mxu0 0.0
    %4331 = vmatprep.subr.mxu0 0.0
    %4332 = vmatpush2.msra.mxu0 0.0
    %4333 = vmatprep.subr.mxu0 0.0
    %4334 = vmatpush2.msra.mxu0 0.0
    %4335 = vmatprep.subr.mxu0 0.0
    %4336 = vmatpush2.msra.mxu0 0.0
    %4337 = vmatprep.subr.mxu0 0.0
    %4338 = vmatpush2.msra.mxu0 0.0
    %4339 = vmatprep.subr.mxu0 0.0
    %4340 = vmatpush2.msra.mxu0 0.0
    %4341 = vmatprep.subr.mxu0 0.0
    %4342 = vmatpush2.msra.mxu0 0.0
    %4343 = vmatprep.mubr.f32.mxu0 0.0
    %4344 = vmatmul.mubr.f32.gmra.mxu0 %v4277
    %v4345 = vpop.f32.mrf.mxu0
    %v4346 = vadd.f32 0.0, %v4345
    %v4347 = vpop.f32.mrf.mxu0
    %4348 = vdwg.mxu0
    %vm4349 = vcmask 64512
    %v4351 = vsel %vm4349, %v4275, 0
    %4353 = vmatprep.subr.mxu0 0.0
    %4354 = vmatpush1.msra.mxu0 0.0
    %4355 = vmatprep.subr.mxu0 0.0
    %4356 = vmatpush1.msra.mxu0 0.0
    %4357 = vmatprep.subr.mxu0 0.0
    %4358 = vmatpush1.msra.mxu0 0.0
    %4359 = vmatprep.subr.mxu0 0.0
    %4360 = vmatpush1.msra.mxu0 0.0
    %4361 = vmatprep.subr.mxu0 0.0
    %4362 = vmatpush1.msra.mxu0 0.0
    %4363 = vmatprep.subr.mxu0 0.0
    %4364 = vmatpush1.msra.mxu0 0.0
    %4365 = vmatprep.subr.mxu0 0.0
    %4366 = vmatpush1.msra.mxu0 0.0
    %4367 = vmatprep.subr.mxu0 0.0
    %4368 = vmatpush1.msra.mxu0 0.0
    %4369 = vmatprep.subr.mxu0 0.0
    %4370 = vmatpush1.msra.mxu0 0.0
    %4371 = vmatprep.subr.mxu0 0.0
    %4372 = vmatpush1.msra.mxu0 0.0
    %4373 = vmatprep.subr.mxu0 0.0
    %4374 = vmatpush1.msra.mxu0 0.0
    %4375 = vmatprep.subr.mxu0 0.0
    %4376 = vmatpush1.msra.mxu0 0.0
    %4377 = vmatprep.subr.mxu0 0.0
    %4378 = vmatpush1.msra.mxu0 0.0
    %4379 = vmatprep.subr.mxu0 0.0
    %4380 = vmatpush1.msra.mxu0 0.0
    %4381 = vmatprep.subr.mxu0 0.0
    %4382 = vmatpush1.msra.mxu0 0.0
    %4383 = vmatprep.subr.mxu0 0.0
    %4384 = vmatpush1.msra.mxu0 %v4269
    %4385 = vmatprep.subr.mxu0 0.0
    %4386 = vmatpush2.msra.mxu0 0.0
    %4387 = vmatprep.subr.mxu0 0.0
    %4388 = vmatpush2.msra.mxu0 0.0
    %4389 = vmatprep.subr.mxu0 0.0
    %4390 = vmatpush2.msra.mxu0 0.0
    %4391 = vmatprep.subr.mxu0 0.0
    %4392 = vmatpush2.msra.mxu0 0.0
    %4393 = vmatprep.subr.mxu0 0.0
    %4394 = vmatpush2.msra.mxu0 0.0
    %4395 = vmatprep.subr.mxu0 0.0
    %4396 = vmatpush2.msra.mxu0 0.0
    %4397 = vmatprep.subr.mxu0 0.0
    %4398 = vmatpush2.msra.mxu0 0.0
    %4399 = vmatprep.subr.mxu0 0.0
    %4400 = vmatpush2.msra.mxu0 0.0
    %4401 = vmatprep.subr.mxu0 0.0
    %4402 = vmatpush2.msra.mxu0 0.0
    %4403 = vmatprep.subr.mxu0 0.0
    %4404 = vmatpush2.msra.mxu0 0.0
    %4405 = vmatprep.subr.mxu0 0.0
    %4406 = vmatpush2.msra.mxu0 0.0
    %4407 = vmatprep.subr.mxu0 0.0
    %4408 = vmatpush2.msra.mxu0 0.0
    %4409 = vmatprep.subr.mxu0 0.0
    %4410 = vmatpush2.msra.mxu0 0.0
    %4411 = vmatprep.subr.mxu0 0.0
    %4412 = vmatpush2.msra.mxu0 0.0
    %4413 = vmatprep.subr.mxu0 0.0
    %4414 = vmatpush2.msra.mxu0 0.0
    %4415 = vmatprep.subr.mxu0 0.0
    %4416 = vmatpush2.msra.mxu0 0.0
    %4417 = vmatprep.mubr.f32.mxu0 0.0
    %4418 = vmatmul.mubr.f32.gmra.mxu0 %v4351
    %v4419 = vpop.f32.mrf.mxu0
    %v4420 = vadd.f32 %v4346, %v4419
    %v4421 = vpop.f32.mrf.mxu0
    %4422 = vdwg.mxu0
    %v4423 = vlaneseq
    %v4424 = vshrl.u32 %v4423, 7
    %v4425 = vsub.s32 0, %v4424
    %v4426 = vrot.slane %v4274, %v4425
    %v4427 = vadd.f32 %v4420, %v4426
    %v4428 = vxor.u32 %v4427, 2147483648
    %v4429 = vmul.f32 %v4428, 1.442695
    %v4430 = vpow.pop %v4429
    %v4431 = vadd.f32 %v4430, 1.0
    %v4432 = vrcp.pop %v4431
    %v4433 = vmul.f32 1.0, %v4432
    %vm4434 = vcmask 7168
    %4435 = vst.msk [vmem:[%s6] sm:$0xff] %vm4434, %v4433
    // Predicated region
    $region34: #{tpu_custom_call.1} parent=1 // pred_check
      _
    $region35: #{tpu_custom_call.1} parent=1 // pred_check_branch
      %4437 = sbr.rel (0) target = $region37
    $region36: #{tpu_custom_call.1} parent=1 // pred_region
      _
    $region37: #{tpu_custom_call.1} parent=1 // pred_fallthru
      _
    // Predicated region
    $region38: #{tpu_custom_call.1} parent=1 // pred_check
      _
    $region39: #{tpu_custom_call.1} parent=1 // pred_check_branch
      %4439 = sbr.rel (0) target = $region41
    $region40: #{tpu_custom_call.1} parent=1 // pred_region
      _
    $region41: #{tpu_custom_call.1} parent=1 // pred_fallthru
      _
    %4440 = vsyncpa [#allocation4], 1
    %4441 = vsyncpa [#allocation6], 1

</llo_original>
